<compile_context>
chip_gen: v6e
topology: v6e:2x2x1
jax: 0.10.0
libtpu: 0.0.40
codegen_flags: <defaults>
</compile_context>

<pallas_src>
import functools

import jax
import jax.numpy as jnp
from jax import lax
from jax.experimental import pallas as pl
from jax.experimental.pallas import tpu as pltpu

K = 4            # conv kernel size
STRIDE = 2
PAD = 1
LRELU_SLOPE = 0.2
BN_EPS = 1e-5
LANE = 128
_VMEM_LIMIT = 48 * 1024 * 1024   # > 32 MiB scoped default, < 64 MiB v7x physical


def _round_up(x, m):
    return ((x + m - 1) // m) * m


# ----------------------------------------------------------------------------
# Pallas kernels
# ----------------------------------------------------------------------------
def _conv_first_kernel(x_ref, w_ref, b_ref, y_ref, *, ho, wo):
    """First block: conv(4x4/s2/p1) + bias.  One image per grid step.

    x_ref : (1, hs, ws, 4*cin)  space-to-depth of the spatially padded image (f32)
    w_ref : (4, 4*cin, cop)     bf16 quadrant weights
    b_ref : (1, cop)            f32 bias (cop = C_out padded to a multiple of 128)
    y_ref : (1, ho*wo, cop)     f32 conv output, rows ordered (ho, wo)
    """
    x = x_ref[0]                                        # (hs, ws, 4*cin)
    cop = y_ref.shape[-1]
    acc = jnp.zeros((ho * wo, cop), jnp.float32)
    q = 0
    for sh in range(2):
        for sw in range(2):
            xs = x[sh:sh + ho, sw:sw + wo, :].reshape(ho * wo, -1)
            acc = acc + jnp.dot(xs.astype(jnp.bfloat16), w_ref[q],
                                preferred_element_type=jnp.float32)
            q += 1
    y_ref[0] = acc + b_ref[...]


def _conv_stats_kernel(x_ref, w_ref, y_ref, stats_ref, *, ho, wo):
    """BN blocks, pass A: LeakyReLU -> conv (no bias) + per-image channel stats.

    Conv bias is omitted: it is cancelled exactly by the BN mean subtraction.
    stats_ref : (1, 2, cop) = [per-channel sum; per-channel sum of squares].
    """
    x = x_ref[0]
    x = jnp.where(x >= 0, x, LRELU_SLOPE * x)           # LeakyReLU(0)=0: safe on padding
    cop = y_ref.shape[-1]
    acc = jnp.zeros((ho * wo, cop), jnp.float32)
    q = 0
    for sh in range(2):
        for sw in range(2):
            xs = x[sh:sh + ho, sw:sw + wo, :].reshape(ho * wo, -1)
            acc = acc + jnp.dot(xs.astype(jnp.bfloat16), w_ref[q],
                                preferred_element_type=jnp.float32)
            q += 1
    y_ref[0] = acc
    s = jnp.sum(acc, axis=0, keepdims=True)             # (1, cop)
    ss = jnp.sum(acc * acc, axis=0, keepdims=True)      # (1, cop)  E[y^2] path
    stats_ref[0] = jnp.concatenate([s, ss], axis=0)     # (2, cop)


def _affine_kernel(y_ref, ss_ref, o_ref):
    """BN blocks, pass B: y * scale + shift (scale/shift packed as one (2, C))."""
    scale = ss_ref[0:1, :]
    shift = ss_ref[1:2, :]
    o_ref[...] = y_ref[...] * scale + shift


# ----------------------------------------------------------------------------
# Host-side glue (pure layout plumbing; fused by XLA under jit)
# ----------------------------------------------------------------------------
def _space_to_depth(x):
    """NHWC -> spatially padded + 2x2 space-to-depth: (N, H/2+1, W/2+1, 4C).

    s2d[n, hs, ws, (dh*2+dw)*C + c] = pad(x)[n, 2*hs+dh, 2*ws+dw, c]
    """
    n, h, w, c = x.shape
    xp = jnp.pad(x, ((0, 0), (PAD, PAD), (PAD, PAD), (0, 0)))
    hs, ws = (h + 2 * PAD) // 2, (w + 2 * PAD) // 2
    xp = xp.reshape(n, hs, 2, ws, 2, c).transpose(0, 1, 3, 2, 4, 5)
    return xp.reshape(n, hs, ws, 4 * c)


def _pack_weights(w, cin_pad, cout_pad):
    """(C_out, C_in, 4, 4) f32 -> (4, 4*cin_pad, cout_pad) bf16 quadrant weights.

    Quadrant q = 2*sh + sw has rows ordered ((dh*2+dw)*cin_pad + c) so it
    contracts directly against the space-to-depth channel layout
    (kh = 2*sh + dh, kw = 2*sw + dw).
    """
    c_out, c_in = w.shape[0], w.shape[1]
    wp = jnp.pad(w, ((0, 0), (0, cin_pad - c_in), (0, 0), (0, 0)))
    wp = wp.reshape(c_out, cin_pad, 2, 2, 2, 2)         # (co, c, sh, dh, sw, dw)
    wp = wp.transpose(2, 4, 3, 5, 1, 0)                 # (sh, sw, dh, dw, c, co)
    wp = wp.reshape(4, 4 * cin_pad, c_out)
    wp = jnp.pad(wp, ((0, 0), (0, 0), (0, cout_pad - c_out)))
    return wp.astype(jnp.bfloat16)


def _first_block(x, w, b):
    """Conv2d(cin, cout, 4, 2, 1) + bias.  x: (N,H,W,cin) -> (N,Ho,Wo,cout_pad)."""
    n, h, wd, c_in = x.shape
    c_out = w.shape[0]
    cout_pad = _round_up(c_out, LANE)
    ho, wo = h // 2, wd // 2
    xs = _space_to_depth(x)
    _, hs, ws, cs = xs.shape
    w4 = _pack_weights(w, c_in, cout_pad)
    b_row = jnp.pad(b, (0, cout_pad - c_out)).reshape(1, cout_pad)

    y = pl.pallas_call(
        functools.partial(_conv_first_kernel, ho=ho, wo=wo),
        grid=(n,),
        in_specs=[
            pl.BlockSpec((1, hs, ws, cs), lambda i: (i, 0, 0, 0)),
            pl.BlockSpec((4, cs, cout_pad), lambda i: (0, 0, 0)),
            pl.BlockSpec((1, cout_pad), lambda i: (0, 0)),
        ],
        out_specs=pl.BlockSpec((1, ho * wo, cout_pad), lambda i: (i, 0, 0)),
        out_shape=jax.ShapeDtypeStruct((n, ho * wo, cout_pad), jnp.float32),
        compiler_params=pltpu.CompilerParams(
            dimension_semantics=("parallel",),
            vmem_limit_bytes=_VMEM_LIMIT),
    )(xs, w4, b_row)
    return y.reshape(n, ho, wo, cout_pad)


def _bn_block(x, w, gamma, beta):
    """BatchNorm2d(Conv2d(LeakyReLU(x), 4, 2, 1)) with batch statistics.

    x: (N, H, W, cin_pad) carried (possibly channel-padded) NHWC activation.
    """
    n, h, wd, cin_pad = x.shape
    c_out = w.shape[0]
    cout_pad = _round_up(c_out, LANE)
    ho, wo = h // 2, wd // 2
    xs = _space_to_depth(x)
    _, hs, ws, cs = xs.shape
    w4 = _pack_weights(w, cin_pad, cout_pad)

    # Pass A: conv (+LeakyReLU fused) and per-image channel stats.
    y, stats = pl.pallas_call(
        functools.partial(_conv_stats_kernel, ho=ho, wo=wo),
        grid=(n,),
        in_specs=[
            pl.BlockSpec((1, hs, ws, cs), lambda i: (i, 0, 0, 0)),
            pl.BlockSpec((4, cs, cout_pad), lambda i: (0, 0, 0)),
        ],
        out_specs=[
            pl.BlockSpec((1, ho * wo, cout_pad), lambda i: (i, 0, 0)),
            pl.BlockSpec((1, 2, cout_pad), lambda i: (i, 0, 0)),
        ],
        out_shape=[
            jax.ShapeDtypeStruct((n, ho * wo, cout_pad), jnp.float32),
            jax.ShapeDtypeStruct((n, 2, cout_pad), jnp.float32),
        ],
        compiler_params=pltpu.CompilerParams(
            dimension_semantics=("parallel",),
            vmem_limit_bytes=_VMEM_LIMIT),
    )(xs, w4)

    # Fold batch statistics into per-channel scale/shift (tiny per-channel math).
    count = float(n * ho * wo)
    totals = jnp.sum(stats, axis=0)                     # (2, cout_pad)
    mean = totals[0] / count
    var = totals[1] / count - mean * mean               # biased var (training BN)
    gamma_p = jnp.pad(gamma, (0, cout_pad - c_out))     # padded channels -> scale 0
    beta_p = jnp.pad(beta, (0, cout_pad - c_out))
    scale = gamma_p * lax.rsqrt(var + BN_EPS)
    shift = beta_p - mean * scale
    scale_shift = jnp.stack([scale, shift], axis=0)     # (2, cout_pad)

    # Pass B: single fused FMA normalize.
    out = pl.pallas_call(
        _affine_kernel,
        grid=(n,),
        in_specs=[
            pl.BlockSpec((1, ho * wo, cout_pad), lambda i: (i, 0, 0)),
            pl.BlockSpec((2, cout_pad), lambda i: (0, 0)),
        ],
        out_specs=pl.BlockSpec((1, ho * wo, cout_pad), lambda i: (i, 0, 0)),
        out_shape=jax.ShapeDtypeStruct((n, ho * wo, cout_pad), jnp.float32),
        compiler_params=pltpu.CompilerParams(
            dimension_semantics=("parallel",),
            vmem_limit_bytes=_VMEM_LIMIT),
    )(y, scale_shift)
    return out.reshape(n, ho, wo, cout_pad)


def _encoder_forward(x_nchw, params):
    """Mirrors Encoder.forward: ftrs = [out(block 0), ..., out(block n-2)] (NCHW)."""
    x = jnp.transpose(x_nchw, (0, 2, 3, 1))             # NCHW -> NHWC, once
    ftrs = []
    prev_c = None
    for i, (w, b, gamma, beta) in enumerate(params):
        if i == 0:
            x = _first_block(x, w, b)
        else:
            ftrs.append(jnp.transpose(x[..., :prev_c], (0, 3, 1, 2)))
            x = _bn_block(x, w, gamma, beta)
        prev_c = w.shape[0]
    # The last block's output is computed but never returned, as in the reference.
    return ftrs


encoder_forward = jax.jit(_encoder_forward)


def init_encoder_params(key, chs):
    """Deterministic synthetic parameters matching nn.Conv2d/BatchNorm2d shapes."""
    params = []
    for i in range(len(chs) - 1):
        key, kw, kb = jax.random.split(key, 3)
        c_in, c_out = chs[i], chs[i + 1]
        w = jax.random.normal(kw, (c_out, c_in, K, K), jnp.float32) * 0.05
        b = jax.random.normal(kb, (c_out,), jnp.float32) * 0.05
        gamma = jnp.ones((c_out,), jnp.float32)
        beta = jnp.zeros((c_out,), jnp.float32)
        params.append((w, b, gamma, beta))
    return params


def _reference_encoder(x, params):
    """Pure-JAX reference of the same block structure (NCHW, f32)."""
    ftrs = []
    for i, (w, b, gamma, beta) in enumerate(params):
        if i > 0:
            ftrs.append(x)
            x = jnp.where(x >= 0, x, LRELU_SLOPE * x)
        y = lax.conv_general_dilated(
            x, w, window_strides=(STRIDE, STRIDE),
            padding=((PAD, PAD), (PAD, PAD)),
            dimension_numbers=("NCHW", "OIHW", "NCHW"))
        y = y + b.reshape(1, -1, 1, 1)
        if i > 0:
            mean = jnp.mean(y, axis=(0, 2, 3), keepdims=True)
            var = jnp.mean(jnp.square(y - mean), axis=(0, 2, 3), keepdims=True)
            y = (y - mean) * lax.rsqrt(var + BN_EPS)
            y = y * gamma.reshape(1, -1, 1, 1) + beta.reshape(1, -1, 1, 1)
        x = y
    return ftrs


if __name__ == "__main__":
    # Small configuration consistent with the module: Encoder(chs) with 4 blocks,
    # grayscale 16x16 input, batch 2.  (Default chs would need >=256x256 input.)
    chs = (1, 8, 16, 32, 64)
    key = jax.random.PRNGKey(0)
    kx, kp = jax.random.split(key)

    x = jax.random.normal(kx, (2, chs[0], 16, 16), jnp.float32)
    params = init_encoder_params(kp, chs)

    ftrs = encoder_forward(x, params)
    ftrs = jax.block_until_ready(ftrs)

    expected = [(2, 8, 8, 8), (2, 16, 4, 4), (2, 32, 2, 2)]
    assert [tuple(f.shape) for f in ftrs] == expected, [f.shape for f in ftrs]

    ref = _reference_encoder(x, params)
    for f, r in zip(ftrs, ref):
        assert bool(jnp.all(jnp.isfinite(f)))
        max_err = float(jnp.max(jnp.abs(f - r)))
        assert max_err < 1e-1, max_err      # bf16 MXU inputs vs f32 reference

    print("KERNEL_OK")
</pallas_src>

<mosaic_0001>
module attributes {stable_mosaic.version = 11 : i64} {
  func.func @_conv_first_kernel(%arg0: i32, %arg1: memref<1x9x9x4xf32, #tpu.memory_space<vmem>>, %arg2: memref<4x4x128xbf16, #tpu.memory_space<vmem>>, %arg3: memref<1x128xf32, #tpu.memory_space<vmem>>, %arg4: memref<1x64x128xf32, #tpu.memory_space<vmem>>) attributes {dimension_semantics = [#tpu.dimension_semantics<parallel>], iteration_bounds = array<i64: 2>, scalar_prefetch = 0 : i64, scratch_operands = 0 : i64, tpu.core_type = #tpu.core_type<tc>, window_params = [{transform_indices = @transform_0, window_bounds = array<i64: 1, 9, 9, 4>}, {pipeline_mode = #tpu.pipeline_mode<synchronous>, transform_indices = @transform_1, window_bounds = array<i64: 4, 4, 128>}, {pipeline_mode = #tpu.pipeline_mode<synchronous>, transform_indices = @transform_2, window_bounds = array<i64: 1, 128>}, {transform_indices = @transform_3, window_bounds = array<i64: 1, 64, 128>}]} {
    %c0 = arith.constant 0 : index
    %c0_0 = arith.constant 0 : index
    %c0_1 = arith.constant 0 : index
    %c0_2 = arith.constant 0 : index
    %0 = vector.load %arg1[%c0, %c0_0, %c0_1, %c0_2] : memref<1x9x9x4xf32, #tpu.memory_space<vmem>>, vector<1x9x9x4xf32>
    %1 = vector.shape_cast %0 : vector<1x9x9x4xf32> to vector<9x9x4xf32>
    %cst = arith.constant 0.000000e+00 : f32
    %2 = vector.broadcast %cst : f32 to vector<64x128xf32>
    %3 = vector.extract_strided_slice %1 {offsets = [0, 0, 0], sizes = [8, 8, 4], strides = [1, 1, 1]} : vector<9x9x4xf32> to vector<8x8x4xf32>
    %4 = vector.shape_cast %3 : vector<8x8x4xf32> to vector<64x4xf32>
    %5 = arith.truncf %4 : vector<64x4xf32> to vector<64x4xbf16>
    %c0_3 = arith.constant 0 : index
    %c0_4 = arith.constant 0 : index
    %c0_5 = arith.constant 0 : index
    %6 = vector.load %arg2[%c0_3, %c0_4, %c0_5] : memref<4x4x128xbf16, #tpu.memory_space<vmem>>, vector<1x4x128xbf16>
    %7 = vector.shape_cast %6 : vector<1x4x128xbf16> to vector<4x128xbf16>
    %cst_6 = arith.constant dense<0.000000e+00> : vector<64x128xf32>
    %8 = tpu.matmul %5, %7, %cst_6 {dimension_numbers = #tpu.dot_dimension_numbers<[1], [0], [0], [1], [0, 0, 1, 1], [], []>} : vector<64x4xbf16>, vector<4x128xbf16>, vector<64x128xf32> -> vector<64x128xf32>
    %9 = arith.addf %2, %8 : vector<64x128xf32>
    %10 = vector.extract_strided_slice %1 {offsets = [0, 1, 0], sizes = [8, 8, 4], strides = [1, 1, 1]} : vector<9x9x4xf32> to vector<8x8x4xf32>
    %11 = vector.shape_cast %10 : vector<8x8x4xf32> to vector<64x4xf32>
    %12 = arith.truncf %11 : vector<64x4xf32> to vector<64x4xbf16>
    %c1 = arith.constant 1 : index
    %c0_7 = arith.constant 0 : index
    %c0_8 = arith.constant 0 : index
    %13 = vector.load %arg2[%c1, %c0_7, %c0_8] : memref<4x4x128xbf16, #tpu.memory_space<vmem>>, vector<1x4x128xbf16>
    %14 = vector.shape_cast %13 : vector<1x4x128xbf16> to vector<4x128xbf16>
    %cst_9 = arith.constant dense<0.000000e+00> : vector<64x128xf32>
    %15 = tpu.matmul %12, %14, %cst_9 {dimension_numbers = #tpu.dot_dimension_numbers<[1], [0], [0], [1], [0, 0, 1, 1], [], []>} : vector<64x4xbf16>, vector<4x128xbf16>, vector<64x128xf32> -> vector<64x128xf32>
    %16 = arith.addf %9, %15 : vector<64x128xf32>
    %17 = vector.extract_strided_slice %1 {offsets = [1, 0, 0], sizes = [8, 8, 4], strides = [1, 1, 1]} : vector<9x9x4xf32> to vector<8x8x4xf32>
    %18 = vector.shape_cast %17 : vector<8x8x4xf32> to vector<64x4xf32>
    %19 = arith.truncf %18 : vector<64x4xf32> to vector<64x4xbf16>
    %c2 = arith.constant 2 : index
    %c0_10 = arith.constant 0 : index
    %c0_11 = arith.constant 0 : index
    %20 = vector.load %arg2[%c2, %c0_10, %c0_11] : memref<4x4x128xbf16, #tpu.memory_space<vmem>>, vector<1x4x128xbf16>
    %21 = vector.shape_cast %20 : vector<1x4x128xbf16> to vector<4x128xbf16>
    %cst_12 = arith.constant dense<0.000000e+00> : vector<64x128xf32>
    %22 = tpu.matmul %19, %21, %cst_12 {dimension_numbers = #tpu.dot_dimension_numbers<[1], [0], [0], [1], [0, 0, 1, 1], [], []>} : vector<64x4xbf16>, vector<4x128xbf16>, vector<64x128xf32> -> vector<64x128xf32>
    %23 = arith.addf %16, %22 : vector<64x128xf32>
    %24 = vector.extract_strided_slice %1 {offsets = [1, 1, 0], sizes = [8, 8, 4], strides = [1, 1, 1]} : vector<9x9x4xf32> to vector<8x8x4xf32>
    %25 = vector.shape_cast %24 : vector<8x8x4xf32> to vector<64x4xf32>
    %26 = arith.truncf %25 : vector<64x4xf32> to vector<64x4xbf16>
    %c3 = arith.constant 3 : index
    %c0_13 = arith.constant 0 : index
    %c0_14 = arith.constant 0 : index
    %27 = vector.load %arg2[%c3, %c0_13, %c0_14] : memref<4x4x128xbf16, #tpu.memory_space<vmem>>, vector<1x4x128xbf16>
    %28 = vector.shape_cast %27 : vector<1x4x128xbf16> to vector<4x128xbf16>
    %cst_15 = arith.constant dense<0.000000e+00> : vector<64x128xf32>
    %29 = tpu.matmul %26, %28, %cst_15 {dimension_numbers = #tpu.dot_dimension_numbers<[1], [0], [0], [1], [0, 0, 1, 1], [], []>} : vector<64x4xbf16>, vector<4x128xbf16>, vector<64x128xf32> -> vector<64x128xf32>
    %30 = arith.addf %23, %29 : vector<64x128xf32>
    %c0_16 = arith.constant 0 : index
    %c0_17 = arith.constant 0 : index
    %31 = vector.load %arg3[%c0_16, %c0_17] : memref<1x128xf32, #tpu.memory_space<vmem>>, vector<1x128xf32>
    %32 = vector.broadcast %31 : vector<1x128xf32> to vector<64x128xf32>
    %33 = arith.addf %30, %32 : vector<64x128xf32>
    %c0_18 = arith.constant 0 : index
    %c0_19 = arith.constant 0 : index
    %c0_20 = arith.constant 0 : index
    %34 = vector.load %arg4[%c0_18, %c0_19, %c0_20] : memref<1x64x128xf32, #tpu.memory_space<vmem>>, vector<1x64x128xf32>
    %35 = vector.shape_cast %34 : vector<1x64x128xf32> to vector<64x128xf32>
    %36 = vector.shape_cast %33 : vector<64x128xf32> to vector<1x64x128xf32>
    tpu.vector_store %arg4[%c0_18, %c0_19, %c0_20], %36 {strides = array<i32>} : memref<1x64x128xf32, #tpu.memory_space<vmem>>, vector<1x64x128xf32>,
    return
  }
  func.func @transform_0(%arg0: i32) -> (i32, i32, i32, i32) {
    %c0_i32 = arith.constant 0 : i32
    %c0_i32_0 = arith.constant 0 : i32
    %c0_i32_1 = arith.constant 0 : i32
    %c0_i32_2 = arith.constant 0 : i32
    return %arg0, %c0_i32, %c0_i32_0, %c0_i32_1 : i32, i32, i32, i32
  }
  func.func @transform_1(%arg0: i32) -> (i32, i32, i32) {
    %c0_i32 = arith.constant 0 : i32
    %c0_i32_0 = arith.constant 0 : i32
    %c0_i32_1 = arith.constant 0 : i32
    %c0_i32_2 = arith.constant 0 : i32
    return %c0_i32, %c0_i32_0, %c0_i32_1 : i32, i32, i32
  }
  func.func @transform_2(%arg0: i32) -> (i32, i32) {
    %c0_i32 = arith.constant 0 : i32
    %c0_i32_0 = arith.constant 0 : i32
    %c0_i32_1 = arith.constant 0 : i32
    return %c0_i32, %c0_i32_0 : i32, i32
  }
  func.func @transform_3(%arg0: i32) -> (i32, i32, i32) {
    %c0_i32 = arith.constant 0 : i32
    %c0_i32_0 = arith.constant 0 : i32
    %c0_i32_1 = arith.constant 0 : i32
    return %arg0, %c0_i32, %c0_i32_0 : i32, i32, i32
  }
}

module attributes {stable_mosaic.version = 11 : i64} {
  func.func @_conv_stats_kernel(%arg0: i32, %arg1: memref<1x5x5x512xf32, #tpu.memory_space<vmem>>, %arg2: memref<4x512x128xbf16, #tpu.memory_space<vmem>>, %arg3: memref<1x16x128xf32, #tpu.memory_space<vmem>>, %arg4: memref<1x2x128xf32, #tpu.memory_space<vmem>>) attributes {dimension_semantics = [#tpu.dimension_semantics<parallel>], iteration_bounds = array<i64: 2>, scalar_prefetch = 0 : i64, scratch_operands = 0 : i64, tpu.core_type = #tpu.core_type<tc>, window_params = [{transform_indices = @transform_0, window_bounds = array<i64: 1, 5, 5, 512>}, {pipeline_mode = #tpu.pipeline_mode<synchronous>, transform_indices = @transform_1, window_bounds = array<i64: 4, 512, 128>}, {transform_indices = @transform_2, window_bounds = array<i64: 1, 16, 128>}, {transform_indices = @transform_3, window_bounds = array<i64: 1, 2, 128>}]} {
    %c0 = arith.constant 0 : index
    %c0_0 = arith.constant 0 : index
    %c0_1 = arith.constant 0 : index
    %c0_2 = arith.constant 0 : index
    %0 = vector.load %arg1[%c0, %c0_0, %c0_1, %c0_2] : memref<1x5x5x512xf32, #tpu.memory_space<vmem>>, vector<1x5x5x512xf32>
    %1 = vector.shape_cast %0 : vector<1x5x5x512xf32> to vector<5x5x512xf32>
    %cst = arith.constant 0.000000e+00 : f32
    %2 = vector.broadcast %cst : f32 to vector<5x5x512xf32>
    %3 = arith.cmpf oge, %1, %2 : vector<5x5x512xf32>
    %cst_3 = arith.constant 2.000000e-01 : f32
    %4 = vector.broadcast %cst_3 : f32 to vector<5x5x512xf32>
    %5 = arith.mulf %4, %1 : vector<5x5x512xf32>
    %6 = arith.select %3, %1, %5 : vector<5x5x512xi1>, vector<5x5x512xf32>
    %cst_4 = arith.constant 0.000000e+00 : f32
    %7 = vector.broadcast %cst_4 : f32 to vector<16x128xf32>
    %8 = vector.extract_strided_slice %6 {offsets = [0, 0, 0], sizes = [4, 4, 512], strides = [1, 1, 1]} : vector<5x5x512xf32> to vector<4x4x512xf32>
    %9 = vector.shape_cast %8 : vector<4x4x512xf32> to vector<16x512xf32>
    %10 = arith.truncf %9 : vector<16x512xf32> to vector<16x512xbf16>
    %c0_5 = arith.constant 0 : index
    %c0_6 = arith.constant 0 : index
    %c0_7 = arith.constant 0 : index
    %11 = vector.load %arg2[%c0_5, %c0_6, %c0_7] : memref<4x512x128xbf16, #tpu.memory_space<vmem>>, vector<1x512x128xbf16>
    %12 = vector.shape_cast %11 : vector<1x512x128xbf16> to vector<512x128xbf16>
    %cst_8 = arith.constant dense<0.000000e+00> : vector<16x128xf32>
    %13 = tpu.matmul %10, %12, %cst_8 {dimension_numbers = #tpu.dot_dimension_numbers<[1], [0], [0], [1], [0, 0, 1, 1], [], []>} : vector<16x512xbf16>, vector<512x128xbf16>, vector<16x128xf32> -> vector<16x128xf32>
    %14 = arith.addf %7, %13 : vector<16x128xf32>
    %15 = vector.extract_strided_slice %6 {offsets = [0, 1, 0], sizes = [4, 4, 512], strides = [1, 1, 1]} : vector<5x5x512xf32> to vector<4x4x512xf32>
    %16 = vector.shape_cast %15 : vector<4x4x512xf32> to vector<16x512xf32>
    %17 = arith.truncf %16 : vector<16x512xf32> to vector<16x512xbf16>
    %c1 = arith.constant 1 : index
    %c0_9 = arith.constant 0 : index
    %c0_10 = arith.constant 0 : index
    %18 = vector.load %arg2[%c1, %c0_9, %c0_10] : memref<4x512x128xbf16, #tpu.memory_space<vmem>>, vector<1x512x128xbf16>
    %19 = vector.shape_cast %18 : vector<1x512x128xbf16> to vector<512x128xbf16>
    %cst_11 = arith.constant dense<0.000000e+00> : vector<16x128xf32>
    %20 = tpu.matmul %17, %19, %cst_11 {dimension_numbers = #tpu.dot_dimension_numbers<[1], [0], [0], [1], [0, 0, 1, 1], [], []>} : vector<16x512xbf16>, vector<512x128xbf16>, vector<16x128xf32> -> vector<16x128xf32>
    %21 = arith.addf %14, %20 : vector<16x128xf32>
    %22 = vector.extract_strided_slice %6 {offsets = [1, 0, 0], sizes = [4, 4, 512], strides = [1, 1, 1]} : vector<5x5x512xf32> to vector<4x4x512xf32>
    %23 = vector.shape_cast %22 : vector<4x4x512xf32> to vector<16x512xf32>
    %24 = arith.truncf %23 : vector<16x512xf32> to vector<16x512xbf16>
    %c2 = arith.constant 2 : index
    %c0_12 = arith.constant 0 : index
    %c0_13 = arith.constant 0 : index
    %25 = vector.load %arg2[%c2, %c0_12, %c0_13] : memref<4x512x128xbf16, #tpu.memory_space<vmem>>, vector<1x512x128xbf16>
    %26 = vector.shape_cast %25 : vector<1x512x128xbf16> to vector<512x128xbf16>
    %cst_14 = arith.constant dense<0.000000e+00> : vector<16x128xf32>
    %27 = tpu.matmul %24, %26, %cst_14 {dimension_numbers = #tpu.dot_dimension_numbers<[1], [0], [0], [1], [0, 0, 1, 1], [], []>} : vector<16x512xbf16>, vector<512x128xbf16>, vector<16x128xf32> -> vector<16x128xf32>
    %28 = arith.addf %21, %27 : vector<16x128xf32>
    %29 = vector.extract_strided_slice %6 {offsets = [1, 1, 0], sizes = [4, 4, 512], strides = [1, 1, 1]} : vector<5x5x512xf32> to vector<4x4x512xf32>
    %30 = vector.shape_cast %29 : vector<4x4x512xf32> to vector<16x512xf32>
    %31 = arith.truncf %30 : vector<16x512xf32> to vector<16x512xbf16>
    %c3 = arith.constant 3 : index
    %c0_15 = arith.constant 0 : index
    %c0_16 = arith.constant 0 : index
    %32 = vector.load %arg2[%c3, %c0_15, %c0_16] : memref<4x512x128xbf16, #tpu.memory_space<vmem>>, vector<1x512x128xbf16>
    %33 = vector.shape_cast %32 : vector<1x512x128xbf16> to vector<512x128xbf16>
    %cst_17 = arith.constant dense<0.000000e+00> : vector<16x128xf32>
    %34 = tpu.matmul %31, %33, %cst_17 {dimension_numbers = #tpu.dot_dimension_numbers<[1], [0], [0], [1], [0, 0, 1, 1], [], []>} : vector<16x512xbf16>, vector<512x128xbf16>, vector<16x128xf32> -> vector<16x128xf32>
    %35 = arith.addf %28, %34 : vector<16x128xf32>
    %c0_18 = arith.constant 0 : index
    %c0_19 = arith.constant 0 : index
    %c0_20 = arith.constant 0 : index
    %36 = vector.load %arg3[%c0_18, %c0_19, %c0_20] : memref<1x16x128xf32, #tpu.memory_space<vmem>>, vector<1x16x128xf32>
    %37 = vector.shape_cast %36 : vector<1x16x128xf32> to vector<16x128xf32>
    %38 = vector.shape_cast %35 : vector<16x128xf32> to vector<1x16x128xf32>
    tpu.vector_store %arg3[%c0_18, %c0_19, %c0_20], %38 {strides = array<i32>} : memref<1x16x128xf32, #tpu.memory_space<vmem>>, vector<1x16x128xf32>,
    %cst_21 = arith.constant dense<0.000000e+00> : vector<128xf32>
    %39 = vector.multi_reduction <add>, %35, %cst_21 [0] : vector<16x128xf32> to vector<128xf32>
    %40 = vector.shape_cast %39 : vector<128xf32> to vector<1x128xf32>
    %41 = arith.mulf %35, %35 : vector<16x128xf32>
    %cst_22 = arith.constant dense<0.000000e+00> : vector<128xf32>
    %42 = vector.multi_reduction <add>, %41, %cst_22 [0] : vector<16x128xf32> to vector<128xf32>
    %43 = vector.shape_cast %42 : vector<128xf32> to vector<1x128xf32>
    %44 = tpu.concatenate %40, %43 in 0 : vector<1x128xf32>, vector<1x128xf32> -> vector<2x128xf32>
    %c0_23 = arith.constant 0 : index
    %c0_24 = arith.constant 0 : index
    %c0_25 = arith.constant 0 : index
    %45 = vector.load %arg4[%c0_23, %c0_24, %c0_25] : memref<1x2x128xf32, #tpu.memory_space<vmem>>, vector<1x2x128xf32>
    %46 = vector.shape_cast %45 : vector<1x2x128xf32> to vector<2x128xf32>
    %47 = vector.shape_cast %44 : vector<2x128xf32> to vector<1x2x128xf32>
    tpu.vector_store %arg4[%c0_23, %c0_24, %c0_25], %47 {strides = array<i32>} : memref<1x2x128xf32, #tpu.memory_space<vmem>>, vector<1x2x128xf32>,
    return
  }
  func.func @transform_0(%arg0: i32) -> (i32, i32, i32, i32) {
    %c0_i32 = arith.constant 0 : i32
    %c0_i32_0 = arith.constant 0 : i32
    %c0_i32_1 = arith.constant 0 : i32
    %c0_i32_2 = arith.constant 0 : i32
    return %arg0, %c0_i32, %c0_i32_0, %c0_i32_1 : i32, i32, i32, i32
  }
  func.func @transform_1(%arg0: i32) -> (i32, i32, i32) {
    %c0_i32 = arith.constant 0 : i32
    %c0_i32_0 = arith.constant 0 : i32
    %c0_i32_1 = arith.constant 0 : i32
    %c0_i32_2 = arith.constant 0 : i32
    return %c0_i32, %c0_i32_0, %c0_i32_1 : i32, i32, i32
  }
  func.func @transform_2(%arg0: i32) -> (i32, i32, i32) {
    %c0_i32 = arith.constant 0 : i32
    %c0_i32_0 = arith.constant 0 : i32
    %c0_i32_1 = arith.constant 0 : i32
    return %arg0, %c0_i32, %c0_i32_0 : i32, i32, i32
  }
  func.func @transform_3(%arg0: i32) -> (i32, i32, i32) {
    %c0_i32 = arith.constant 0 : i32
    %c0_i32_0 = arith.constant 0 : i32
    %c0_i32_1 = arith.constant 0 : i32
    return %arg0, %c0_i32, %c0_i32_0 : i32, i32, i32
  }
}

module attributes {stable_mosaic.version = 11 : i64} {
  func.func @_affine_kernel(%arg0: i32, %arg1: memref<1x16x128xf32, #tpu.memory_space<vmem>>, %arg2: memref<2x128xf32, #tpu.memory_space<vmem>>, %arg3: memref<1x16x128xf32, #tpu.memory_space<vmem>>) attributes {dimension_semantics = [#tpu.dimension_semantics<parallel>], iteration_bounds = array<i64: 2>, scalar_prefetch = 0 : i64, scratch_operands = 0 : i64, tpu.core_type = #tpu.core_type<tc>, window_params = [{transform_indices = @transform_0, window_bounds = array<i64: 1, 16, 128>}, {pipeline_mode = #tpu.pipeline_mode<synchronous>, transform_indices = @transform_1, window_bounds = array<i64: 2, 128>}, {transform_indices = @transform_2, window_bounds = array<i64: 1, 16, 128>}]} {
    %c0 = arith.constant 0 : index
    %c0_0 = arith.constant 0 : index
    %0 = vector.load %arg2[%c0, %c0_0] : memref<2x128xf32, #tpu.memory_space<vmem>>, vector<1x128xf32>
    %c1 = arith.constant 1 : index
    %c0_1 = arith.constant 0 : index
    %1 = vector.load %arg2[%c1, %c0_1] : memref<2x128xf32, #tpu.memory_space<vmem>>, vector<1x128xf32>
    %c0_2 = arith.constant 0 : index
    %c0_3 = arith.constant 0 : index
    %c0_4 = arith.constant 0 : index
    %2 = vector.load %arg1[%c0_2, %c0_3, %c0_4] : memref<1x16x128xf32, #tpu.memory_space<vmem>>, vector<1x16x128xf32>
    %3 = vector.shape_cast %0 : vector<1x128xf32> to vector<1x1x128xf32>
    %4 = vector.broadcast %3 : vector<1x1x128xf32> to vector<1x16x128xf32>
    %5 = arith.mulf %2, %4 : vector<1x16x128xf32>
    %6 = vector.shape_cast %1 : vector<1x128xf32> to vector<1x1x128xf32>
    %7 = vector.broadcast %6 : vector<1x1x128xf32> to vector<1x16x128xf32>
    %8 = arith.addf %5, %7 : vector<1x16x128xf32>
    %c0_5 = arith.constant 0 : index
    %c0_6 = arith.constant 0 : index
    %c0_7 = arith.constant 0 : index
    %9 = vector.load %arg3[%c0_5, %c0_6, %c0_7] : memref<1x16x128xf32, #tpu.memory_space<vmem>>, vector<1x16x128xf32>
    tpu.vector_store %arg3[%c0_5, %c0_6, %c0_7], %8 {strides = array<i32>} : memref<1x16x128xf32, #tpu.memory_space<vmem>>, vector<1x16x128xf32>,
    return
  }
  func.func @transform_0(%arg0: i32) -> (i32, i32, i32) {
    %c0_i32 = arith.constant 0 : i32
    %c0_i32_0 = arith.constant 0 : i32
    %c0_i32_1 = arith.constant 0 : i32
    return %arg0, %c0_i32, %c0_i32_0 : i32, i32, i32
  }
  func.func @transform_1(%arg0: i32) -> (i32, i32) {
    %c0_i32 = arith.constant 0 : i32
    %c0_i32_0 = arith.constant 0 : i32
    %c0_i32_1 = arith.constant 0 : i32
    return %c0_i32, %c0_i32_0 : i32, i32
  }
  func.func @transform_2(%arg0: i32) -> (i32, i32, i32) {
    %c0_i32 = arith.constant 0 : i32
    %c0_i32_0 = arith.constant 0 : i32
    %c0_i32_1 = arith.constant 0 : i32
    return %arg0, %c0_i32, %c0_i32_0 : i32, i32, i32
  }
}

module attributes {stable_mosaic.version = 11 : i64} {
  func.func @_conv_stats_kernel(%arg0: i32, %arg1: memref<1x3x3x512xf32, #tpu.memory_space<vmem>>, %arg2: memref<4x512x128xbf16, #tpu.memory_space<vmem>>, %arg3: memref<1x4x128xf32, #tpu.memory_space<vmem>>, %arg4: memref<1x2x128xf32, #tpu.memory_space<vmem>>) attributes {dimension_semantics = [#tpu.dimension_semantics<parallel>], iteration_bounds = array<i64: 2>, scalar_prefetch = 0 : i64, scratch_operands = 0 : i64, tpu.core_type = #tpu.core_type<tc>, window_params = [{transform_indices = @transform_0, window_bounds = array<i64: 1, 3, 3, 512>}, {pipeline_mode = #tpu.pipeline_mode<synchronous>, transform_indices = @transform_1, window_bounds = array<i64: 4, 512, 128>}, {transform_indices = @transform_2, window_bounds = array<i64: 1, 4, 128>}, {transform_indices = @transform_3, window_bounds = array<i64: 1, 2, 128>}]} {
    %c0 = arith.constant 0 : index
    %c0_0 = arith.constant 0 : index
    %c0_1 = arith.constant 0 : index
    %c0_2 = arith.constant 0 : index
    %0 = vector.load %arg1[%c0, %c0_0, %c0_1, %c0_2] : memref<1x3x3x512xf32, #tpu.memory_space<vmem>>, vector<1x3x3x512xf32>
    %1 = vector.shape_cast %0 : vector<1x3x3x512xf32> to vector<3x3x512xf32>
    %cst = arith.constant 0.000000e+00 : f32
    %2 = vector.broadcast %cst : f32 to vector<3x3x512xf32>
    %3 = arith.cmpf oge, %1, %2 : vector<3x3x512xf32>
    %cst_3 = arith.constant 2.000000e-01 : f32
    %4 = vector.broadcast %cst_3 : f32 to vector<3x3x512xf32>
    %5 = arith.mulf %4, %1 : vector<3x3x512xf32>
    %6 = arith.select %3, %1, %5 : vector<3x3x512xi1>, vector<3x3x512xf32>
    %cst_4 = arith.constant 0.000000e+00 : f32
    %7 = vector.broadcast %cst_4 : f32 to vector<4x128xf32>
    %8 = vector.extract_strided_slice %6 {offsets = [0, 0, 0], sizes = [2, 2, 512], strides = [1, 1, 1]} : vector<3x3x512xf32> to vector<2x2x512xf32>
    %9 = vector.shape_cast %8 : vector<2x2x512xf32> to vector<4x512xf32>
    %10 = arith.truncf %9 : vector<4x512xf32> to vector<4x512xbf16>
    %c0_5 = arith.constant 0 : index
    %c0_6 = arith.constant 0 : index
    %c0_7 = arith.constant 0 : index
    %11 = vector.load %arg2[%c0_5, %c0_6, %c0_7] : memref<4x512x128xbf16, #tpu.memory_space<vmem>>, vector<1x512x128xbf16>
    %12 = vector.shape_cast %11 : vector<1x512x128xbf16> to vector<512x128xbf16>
    %cst_8 = arith.constant dense<0.000000e+00> : vector<4x128xf32>
    %13 = tpu.matmul %10, %12, %cst_8 {dimension_numbers = #tpu.dot_dimension_numbers<[1], [0], [0], [1], [0, 0, 1, 1], [], []>} : vector<4x512xbf16>, vector<512x128xbf16>, vector<4x128xf32> -> vector<4x128xf32>
    %14 = arith.addf %7, %13 : vector<4x128xf32>
    %15 = vector.extract_strided_slice %6 {offsets = [0, 1, 0], sizes = [2, 2, 512], strides = [1, 1, 1]} : vector<3x3x512xf32> to vector<2x2x512xf32>
    %16 = vector.shape_cast %15 : vector<2x2x512xf32> to vector<4x512xf32>
    %17 = arith.truncf %16 : vector<4x512xf32> to vector<4x512xbf16>
    %c1 = arith.constant 1 : index
    %c0_9 = arith.constant 0 : index
    %c0_10 = arith.constant 0 : index
    %18 = vector.load %arg2[%c1, %c0_9, %c0_10] : memref<4x512x128xbf16, #tpu.memory_space<vmem>>, vector<1x512x128xbf16>
    %19 = vector.shape_cast %18 : vector<1x512x128xbf16> to vector<512x128xbf16>
    %cst_11 = arith.constant dense<0.000000e+00> : vector<4x128xf32>
    %20 = tpu.matmul %17, %19, %cst_11 {dimension_numbers = #tpu.dot_dimension_numbers<[1], [0], [0], [1], [0, 0, 1, 1], [], []>} : vector<4x512xbf16>, vector<512x128xbf16>, vector<4x128xf32> -> vector<4x128xf32>
    %21 = arith.addf %14, %20 : vector<4x128xf32>
    %22 = vector.extract_strided_slice %6 {offsets = [1, 0, 0], sizes = [2, 2, 512], strides = [1, 1, 1]} : vector<3x3x512xf32> to vector<2x2x512xf32>
    %23 = vector.shape_cast %22 : vector<2x2x512xf32> to vector<4x512xf32>
    %24 = arith.truncf %23 : vector<4x512xf32> to vector<4x512xbf16>
    %c2 = arith.constant 2 : index
    %c0_12 = arith.constant 0 : index
    %c0_13 = arith.constant 0 : index
    %25 = vector.load %arg2[%c2, %c0_12, %c0_13] : memref<4x512x128xbf16, #tpu.memory_space<vmem>>, vector<1x512x128xbf16>
    %26 = vector.shape_cast %25 : vector<1x512x128xbf16> to vector<512x128xbf16>
    %cst_14 = arith.constant dense<0.000000e+00> : vector<4x128xf32>
    %27 = tpu.matmul %24, %26, %cst_14 {dimension_numbers = #tpu.dot_dimension_numbers<[1], [0], [0], [1], [0, 0, 1, 1], [], []>} : vector<4x512xbf16>, vector<512x128xbf16>, vector<4x128xf32> -> vector<4x128xf32>
    %28 = arith.addf %21, %27 : vector<4x128xf32>
    %29 = vector.extract_strided_slice %6 {offsets = [1, 1, 0], sizes = [2, 2, 512], strides = [1, 1, 1]} : vector<3x3x512xf32> to vector<2x2x512xf32>
    %30 = vector.shape_cast %29 : vector<2x2x512xf32> to vector<4x512xf32>
    %31 = arith.truncf %30 : vector<4x512xf32> to vector<4x512xbf16>
    %c3 = arith.constant 3 : index
    %c0_15 = arith.constant 0 : index
    %c0_16 = arith.constant 0 : index
    %32 = vector.load %arg2[%c3, %c0_15, %c0_16] : memref<4x512x128xbf16, #tpu.memory_space<vmem>>, vector<1x512x128xbf16>
    %33 = vector.shape_cast %32 : vector<1x512x128xbf16> to vector<512x128xbf16>
    %cst_17 = arith.constant dense<0.000000e+00> : vector<4x128xf32>
    %34 = tpu.matmul %31, %33, %cst_17 {dimension_numbers = #tpu.dot_dimension_numbers<[1], [0], [0], [1], [0, 0, 1, 1], [], []>} : vector<4x512xbf16>, vector<512x128xbf16>, vector<4x128xf32> -> vector<4x128xf32>
    %35 = arith.addf %28, %34 : vector<4x128xf32>
    %c0_18 = arith.constant 0 : index
    %c0_19 = arith.constant 0 : index
    %c0_20 = arith.constant 0 : index
    %36 = vector.load %arg3[%c0_18, %c0_19, %c0_20] : memref<1x4x128xf32, #tpu.memory_space<vmem>>, vector<1x4x128xf32>
    %37 = vector.shape_cast %36 : vector<1x4x128xf32> to vector<4x128xf32>
    %38 = vector.shape_cast %35 : vector<4x128xf32> to vector<1x4x128xf32>
    tpu.vector_store %arg3[%c0_18, %c0_19, %c0_20], %38 {strides = array<i32>} : memref<1x4x128xf32, #tpu.memory_space<vmem>>, vector<1x4x128xf32>,
    %cst_21 = arith.constant dense<0.000000e+00> : vector<128xf32>
    %39 = vector.multi_reduction <add>, %35, %cst_21 [0] : vector<4x128xf32> to vector<128xf32>
    %40 = vector.shape_cast %39 : vector<128xf32> to vector<1x128xf32>
    %41 = arith.mulf %35, %35 : vector<4x128xf32>
    %cst_22 = arith.constant dense<0.000000e+00> : vector<128xf32>
    %42 = vector.multi_reduction <add>, %41, %cst_22 [0] : vector<4x128xf32> to vector<128xf32>
    %43 = vector.shape_cast %42 : vector<128xf32> to vector<1x128xf32>
    %44 = tpu.concatenate %40, %43 in 0 : vector<1x128xf32>, vector<1x128xf32> -> vector<2x128xf32>
    %c0_23 = arith.constant 0 : index
    %c0_24 = arith.constant 0 : index
    %c0_25 = arith.constant 0 : index
    %45 = vector.load %arg4[%c0_23, %c0_24, %c0_25] : memref<1x2x128xf32, #tpu.memory_space<vmem>>, vector<1x2x128xf32>
    %46 = vector.shape_cast %45 : vector<1x2x128xf32> to vector<2x128xf32>
    %47 = vector.shape_cast %44 : vector<2x128xf32> to vector<1x2x128xf32>
    tpu.vector_store %arg4[%c0_23, %c0_24, %c0_25], %47 {strides = array<i32>} : memref<1x2x128xf32, #tpu.memory_space<vmem>>, vector<1x2x128xf32>,
    return
  }
  func.func @transform_0(%arg0: i32) -> (i32, i32, i32, i32) {
    %c0_i32 = arith.constant 0 : i32
    %c0_i32_0 = arith.constant 0 : i32
    %c0_i32_1 = arith.constant 0 : i32
    %c0_i32_2 = arith.constant 0 : i32
    return %arg0, %c0_i32, %c0_i32_0, %c0_i32_1 : i32, i32, i32, i32
  }
  func.func @transform_1(%arg0: i32) -> (i32, i32, i32) {
    %c0_i32 = arith.constant 0 : i32
    %c0_i32_0 = arith.constant 0 : i32
    %c0_i32_1 = arith.constant 0 : i32
    %c0_i32_2 = arith.constant 0 : i32
    return %c0_i32, %c0_i32_0, %c0_i32_1 : i32, i32, i32
  }
  func.func @transform_2(%arg0: i32) -> (i32, i32, i32) {
    %c0_i32 = arith.constant 0 : i32
    %c0_i32_0 = arith.constant 0 : i32
    %c0_i32_1 = arith.constant 0 : i32
    return %arg0, %c0_i32, %c0_i32_0 : i32, i32, i32
  }
  func.func @transform_3(%arg0: i32) -> (i32, i32, i32) {
    %c0_i32 = arith.constant 0 : i32
    %c0_i32_0 = arith.constant 0 : i32
    %c0_i32_1 = arith.constant 0 : i32
    return %arg0, %c0_i32, %c0_i32_0 : i32, i32, i32
  }
}

module attributes {stable_mosaic.version = 11 : i64} {
  func.func @_affine_kernel(%arg0: i32, %arg1: memref<1x4x128xf32, #tpu.memory_space<vmem>>, %arg2: memref<2x128xf32, #tpu.memory_space<vmem>>, %arg3: memref<1x4x128xf32, #tpu.memory_space<vmem>>) attributes {dimension_semantics = [#tpu.dimension_semantics<parallel>], iteration_bounds = array<i64: 2>, scalar_prefetch = 0 : i64, scratch_operands = 0 : i64, tpu.core_type = #tpu.core_type<tc>, window_params = [{transform_indices = @transform_0, window_bounds = array<i64: 1, 4, 128>}, {pipeline_mode = #tpu.pipeline_mode<synchronous>, transform_indices = @transform_1, window_bounds = array<i64: 2, 128>}, {transform_indices = @transform_2, window_bounds = array<i64: 1, 4, 128>}]} {
    %c0 = arith.constant 0 : index
    %c0_0 = arith.constant 0 : index
    %0 = vector.load %arg2[%c0, %c0_0] : memref<2x128xf32, #tpu.memory_space<vmem>>, vector<1x128xf32>
    %c1 = arith.constant 1 : index
    %c0_1 = arith.constant 0 : index
    %1 = vector.load %arg2[%c1, %c0_1] : memref<2x128xf32, #tpu.memory_space<vmem>>, vector<1x128xf32>
    %c0_2 = arith.constant 0 : index
    %c0_3 = arith.constant 0 : index
    %c0_4 = arith.constant 0 : index
    %2 = vector.load %arg1[%c0_2, %c0_3, %c0_4] : memref<1x4x128xf32, #tpu.memory_space<vmem>>, vector<1x4x128xf32>
    %3 = vector.shape_cast %0 : vector<1x128xf32> to vector<1x1x128xf32>
    %4 = vector.broadcast %3 : vector<1x1x128xf32> to vector<1x4x128xf32>
    %5 = arith.mulf %2, %4 : vector<1x4x128xf32>
    %6 = vector.shape_cast %1 : vector<1x128xf32> to vector<1x1x128xf32>
    %7 = vector.broadcast %6 : vector<1x1x128xf32> to vector<1x4x128xf32>
    %8 = arith.addf %5, %7 : vector<1x4x128xf32>
    %c0_5 = arith.constant 0 : index
    %c0_6 = arith.constant 0 : index
    %c0_7 = arith.constant 0 : index
    %9 = vector.load %arg3[%c0_5, %c0_6, %c0_7] : memref<1x4x128xf32, #tpu.memory_space<vmem>>, vector<1x4x128xf32>
    tpu.vector_store %arg3[%c0_5, %c0_6, %c0_7], %8 {strides = array<i32>} : memref<1x4x128xf32, #tpu.memory_space<vmem>>, vector<1x4x128xf32>,
    return
  }
  func.func @transform_0(%arg0: i32) -> (i32, i32, i32) {
    %c0_i32 = arith.constant 0 : i32
    %c0_i32_0 = arith.constant 0 : i32
    %c0_i32_1 = arith.constant 0 : i32
    return %arg0, %c0_i32, %c0_i32_0 : i32, i32, i32
  }
  func.func @transform_1(%arg0: i32) -> (i32, i32) {
    %c0_i32 = arith.constant 0 : i32
    %c0_i32_0 = arith.constant 0 : i32
    %c0_i32_1 = arith.constant 0 : i32
    return %c0_i32, %c0_i32_0 : i32, i32
  }
  func.func @transform_2(%arg0: i32) -> (i32, i32, i32) {
    %c0_i32 = arith.constant 0 : i32
    %c0_i32_0 = arith.constant 0 : i32
    %c0_i32_1 = arith.constant 0 : i32
    return %arg0, %c0_i32, %c0_i32_0 : i32, i32, i32
  }
}

</mosaic_0001>

<llo_original>
// kernel: _encoder_forward.5
$region0: #{_encoder_forward.5}
  #allocation0 [shape = 'u32[]', space=smem, size = 0x4, offset = 0x4, fixed_abs, tag = 'smem constant byte address 0x4 - core index']
  #allocation1 [shape = 'u32[144,128]{1,0:T(1,128)}', space=vmem, size = 0x12000, scoped, tag = 'internal scratch']
  %s0 = inlined_call_operand.vmem [shape: f32[2,9,9,4], index: 0, kind: input, shape index: {}]
  %s1 = inlined_call_operand.vmem [shape: bf16[4,4,128], index: 1, kind: input, shape index: {}]
  %s2 = inlined_call_operand.vmem [shape: f32[1,128], index: 2, kind: input, shape index: {}]
  %s3 = inlined_call_operand.vmem [shape: f32[2,64,128], index: 3, kind: output, shape index: {}]
  %s4 = sld [smem:[#allocation0]]
  $region45: #{_encoder_forward.5} parent=0
    _
  %s6 = ssub.s32 1, %s4
  %s7 = scalar_select 0, %s6, %s4
  loop: start=0, step=1, limit=4
  $region2: #{_encoder_forward.5} parent=0 // loop_pre_header
    _
  $region3: #{_encoder_forward.5} parent=0 // loop_header
    %s9 = sphi 0, %s13
    %p10 = scmp.ge.s32.totalorder %s9, 4
    %s19 = sphi 0, %s21
    %s22 = sphi 0, %s19
    %s23 = sphi 0, %s22
    %s39 = sphi 0, %s23
    %s43 = sphi 0, %s43
    %s45 = sphi 0, %s43
    %s46 = sphi 0, %s45
    %s60 = sphi 0, %s46
    %s64 = sphi 0, %s64
    %s66 = sphi 0, %s64
    %s67 = sphi 0, %s66
    %s81 = sphi 0, %s67
    %s87 = sphi 0, %s89
    %s90 = sphi 0, %s87
    %s91 = sphi 0, %s90
    %s107 = sphi 0, %s91
  $region4: #{_encoder_forward.5} parent=0 // loop_header_branch
    %12 = sbr.rel (%p10) target = $region8
  $region5: #{_encoder_forward.5} parent=0 // loop_body
    %s14 = ssub.s32 %s9, 1
    %s15 = ssub.s32 %s9, 2
    %s16 = sadd.s32 %s9, 1
    %s17 = ssub.s32 %s9, %s16
    %p18 = scmp.eq.s32.totalorder %s17, 0
    %s20 = sadd.s32 %s19, 1
    %s21 = scalar_select %p18, %s19, %s20
    %p24 = pneg %p18
    %p25 = scmp.eq.s32.totalorder %s9, 1
    %p26 = por %p24, %p25
    %p27 = scmp.ne.s32.totalorder %s19, %s22
    %p28 = scmp.eq.s32.totalorder %s9, 0
    %p29 = por %p27, %p28
    %p30 = scmp.ne.s32.totalorder %s19, %s22
    %p31 = scmp.eq.s32.totalorder %s14, 1
    %p32 = por %p30, %p31
    %p33 = scmp.ne.s32.totalorder %s22, %s23
    %p34 = scmp.eq.s32.totalorder %s14, 0
    %p35 = por %p33, %p34
    %p36 = scmp.ne.s32.totalorder %s22, %s23
    %p37 = scmp.eq.s32.totalorder %s15, 1
    %p38 = por %p36, %p37
    %p40 = scmp.ne.s32.totalorder %s23, %s39
    %p41 = scmp.eq.s32.totalorder %s15, 0
    %p42 = por %p40, %p41
    %s44 = sadd.s32 %s43, 1
    %p47 = scmp.eq.s32.totalorder %s9, 1
    %p48 = scmp.ne.s32.totalorder %s43, %s45
    %p49 = scmp.eq.s32.totalorder %s9, 0
    %p50 = por %p48, %p49
    %p51 = scmp.ne.s32.totalorder %s43, %s45
    %p52 = scmp.eq.s32.totalorder %s14, 1
    %p53 = por %p51, %p52
    %p54 = scmp.ne.s32.totalorder %s45, %s46
    %p55 = scmp.eq.s32.totalorder %s14, 0
    %p56 = por %p54, %p55
    %p57 = scmp.ne.s32.totalorder %s45, %s46
    %p58 = scmp.eq.s32.totalorder %s15, 1
    %p59 = por %p57, %p58
    %p61 = scmp.ne.s32.totalorder %s46, %s60
    %p62 = scmp.eq.s32.totalorder %s15, 0
    %p63 = por %p61, %p62
    %s65 = sadd.s32 %s64, 1
    %p68 = scmp.eq.s32.totalorder %s9, 1
    %p69 = scmp.ne.s32.totalorder %s64, %s66
    %p70 = scmp.eq.s32.totalorder %s9, 0
    %p71 = por %p69, %p70
    %p72 = scmp.ne.s32.totalorder %s64, %s66
    %p73 = scmp.eq.s32.totalorder %s14, 1
    %p74 = por %p72, %p73
    %p75 = scmp.ne.s32.totalorder %s66, %s67
    %p76 = scmp.eq.s32.totalorder %s14, 0
    %p77 = por %p75, %p76
    %p78 = scmp.ne.s32.totalorder %s66, %s67
    %p79 = scmp.eq.s32.totalorder %s15, 1
    %p80 = por %p78, %p79
    %p82 = scmp.ne.s32.totalorder %s67, %s81
    %p83 = scmp.eq.s32.totalorder %s15, 0
    %p84 = por %p82, %p83
    %s85 = ssub.s32 %s9, %s16
    %p86 = scmp.eq.s32.totalorder %s85, 0
    %s88 = sadd.s32 %s87, 1
    %s89 = scalar_select %p86, %s87, %s88
    %p92 = pneg %p86
    %p93 = scmp.eq.s32.totalorder %s9, 1
    %p94 = por %p92, %p93
    %p95 = scmp.ne.s32.totalorder %s87, %s90
    %p96 = scmp.eq.s32.totalorder %s9, 0
    %p97 = por %p95, %p96
    %p98 = scmp.ne.s32.totalorder %s87, %s90
    %p99 = scmp.eq.s32.totalorder %s14, 1
    %p100 = por %p98, %p99
    %p101 = scmp.ne.s32.totalorder %s90, %s91
    %p102 = scmp.eq.s32.totalorder %s14, 0
    %p103 = por %p101, %p102
    %p104 = scmp.ne.s32.totalorder %s90, %s91
    %p105 = scmp.eq.s32.totalorder %s15, 1
    %p106 = por %p104, %p105
    %p108 = scmp.ne.s32.totalorder %s91, %s107
    %p109 = scmp.eq.s32.totalorder %s15, 0
    %p110 = por %p108, %p109
    %p111 = scmp.le.s32.totalorder 1, %s9
    %p112 = scmp.lt.s32.totalorder %s9, 3
    %p113 = pnand %p111, %p112
    %p114 = pneg %p113
    // Predicated region
    $region9: #{_encoder_forward.5} parent=5 // pred_check
      _
    $region10: #{_encoder_forward.5} parent=5 // pred_check_branch
      %116 = sbr.rel (%p113) target = $region12
    $region11: #{_encoder_forward.5} parent=5 // pred_region
      %s117 = ssub.s32 %s9, 1
      // Predicated region
      $region13: #{_encoder_forward.5} parent=11 // pred_check
        %p118 = pneg %p56
      $region14: #{_encoder_forward.5} parent=11 // pred_check_branch
        %120 = sbr.rel (%p118) target = $region16
      $region15: #{_encoder_forward.5} parent=11 // pred_region
        _
      $region16: #{_encoder_forward.5} parent=11 // pred_fallthru
        _
      // Predicated region
      $region17: #{_encoder_forward.5} parent=11 // pred_check
        %p121 = pneg %p77
      $region18: #{_encoder_forward.5} parent=11 // pred_check_branch
        %123 = sbr.rel (%p121) target = $region20
      $region19: #{_encoder_forward.5} parent=11 // pred_region
        _
      $region20: #{_encoder_forward.5} parent=11 // pred_fallthru
        _
    $region12: #{_encoder_forward.5} parent=5 // pred_fallthru
      _
    %p124 = scmp.lt.s32.totalorder %s9, 2
    // Predicated region
    $region21: #{_encoder_forward.5} parent=5 // pred_check
      %p125 = pneg %p124
    $region22: #{_encoder_forward.5} parent=5 // pred_check_branch
      %127 = sbr.rel (%p125) target = $region24
    $region23: #{_encoder_forward.5} parent=5 // pred_region
      // Predicated region
      $region25: #{_encoder_forward.5} parent=23 // pred_check
        %p128 = pneg %p29
      $region26: #{_encoder_forward.5} parent=23 // pred_check_branch
        %130 = sbr.rel (%p128) target = $region28
      $region27: #{_encoder_forward.5} parent=23 // pred_region
        %p131 = scmp.lt.s32.totalorder %s9, 1
        %s132 = scalar_select %p131, %s9, 1
        %s133 = smul.addr %s132, 18
        %s134 = smul.addr %s133, 8
        %s135 = scalar_lea.vmem %s0, %s134
      $region28: #{_encoder_forward.5} parent=23 // pred_fallthru
        _
    $region24: #{_encoder_forward.5} parent=5 // pred_fallthru
      _
    %p136 = scmp.le.s32.totalorder 1, %s9
    %p137 = scmp.lt.s32.totalorder %s9, 3
    %p138 = pnand %p136, %p137
    %p139 = pneg %p138
    // Predicated region
    $region29: #{_encoder_forward.5} parent=5 // pred_check
      _
    $region30: #{_encoder_forward.5} parent=5 // pred_check_branch
      %141 = sbr.rel (%p138) target = $region32
    $region31: #{_encoder_forward.5} parent=5 // pred_region
      %s142 = ssub.s32 %s9, 1
      %p143 = scmp.lt.s32.totalorder %s14, 1
      %s144 = scalar_select %p143, %s14, 1
      %s145 = smul.addr %s144, 18
      %s146 = smul.addr %s145, 8
      %s147 = scalar_lea.vmem %s0, %s146
      %p148 = pneg %p35
      %p149 = pneg %p32
      %p150 = pneg %p56
      %p151 = pneg %p53
      %p152 = pneg %p77
      %p153 = pneg %p74
      %p154 = pneg %p103
      %p155 = pneg %p100
      %p156 = scmp.lt.s32.totalorder %s14, 1
      %s157 = scalar_select %p156, %s14, 1
      %s158 = smul.addr %s157, 8
      %s159 = smul.addr %s158, 8
      %s160 = scalar_lea.vmem %s3, %s159
      %p161 = scmp.lt.s32.totalorder %s14, 1
      %s162 = scalar_select %p161, %s14, 1
      %s163 = smul.addr %s162, 18
      %s164 = smul.addr %s163, 8
      %s165 = scalar_lea.vmem %s0, %s164
      %p166 = scmp.lt.s32.totalorder %s14, 1
      %s167 = scalar_select %p166, %s14, 1
      %s168 = smul.addr %s167, 8
      %s169 = smul.addr %s168, 8
      %s170 = scalar_lea.vmem %s3, %s169
      %v172 = vld [vmem:[%s165] sm:$0xff]
      %v173 = vld [vmem:[%s165 + $0x8] sm:$0x1]
      %v174 = vld [vmem:[%s165 + $0x10] sm:$0xff]
      %v175 = vld [vmem:[%s165 + $0x18] sm:$0x1]
      %v176 = vld [vmem:[%s165 + $0x20] sm:$0xff]
      %v177 = vld [vmem:[%s165 + $0x28] sm:$0x1]
      %v178 = vld [vmem:[%s165 + $0x30] sm:$0xff]
      %v179 = vld [vmem:[%s165 + $0x38] sm:$0x1]
      %v180 = vld [vmem:[%s165 + $0x40] sm:$0xff]
      %v181 = vld [vmem:[%s165 + $0x48] sm:$0x1]
      %v182 = vld [vmem:[%s165 + $0x50] sm:$0xff]
      %v183 = vld [vmem:[%s165 + $0x58] sm:$0x1]
      %v184 = vld [vmem:[%s165 + $0x60] sm:$0xff]
      %v185 = vld [vmem:[%s165 + $0x68] sm:$0x1]
      %v186 = vld [vmem:[%s165 + $0x70] sm:$0xff]
      %v187 = vld [vmem:[%s165 + $0x78] sm:$0x1]
      %v188 = vld [vmem:[%s165 + $0x80] sm:$0xff]
      %v189 = vld [vmem:[%s165 + $0x88] sm:$0x1]
      %v190 = vpack.c.bf16 %v174, %v172
      %v191 = vpack.c.bf16 %v178, %v176
      %v192 = vpack.c.bf16 %v182, %v180
      %v193 = vpack.c.bf16 %v186, %v184
      %v194 = vld [vmem:[%s1] sm:$0x3]
      %vm211 = vcmask 1046528
      %v212 = vrot.slane %v172, 1
      %v213 = vrot.slane %v173, 1
      %v214 = vsel %vm211, %v212, %v213
      %v215 = vrot.slane %v174, 1
      %v216 = vrot.slane %v175, 1
      %v217 = vsel %vm211, %v215, %v216
      %v218 = vrot.slane %v176, 1
      %v219 = vrot.slane %v177, 1
      %v220 = vsel %vm211, %v218, %v219
      %v221 = vrot.slane %v178, 1
      %v222 = vrot.slane %v179, 1
      %v223 = vsel %vm211, %v221, %v222
      %v224 = vrot.slane %v180, 1
      %v225 = vrot.slane %v181, 1
      %v226 = vsel %vm211, %v224, %v225
      %v227 = vrot.slane %v182, 1
      %v228 = vrot.slane %v183, 1
      %v229 = vsel %vm211, %v227, %v228
      %v230 = vrot.slane %v184, 1
      %v231 = vrot.slane %v185, 1
      %v232 = vsel %vm211, %v230, %v231
      %v233 = vrot.slane %v186, 1
      %v234 = vrot.slane %v187, 1
      %v235 = vsel %vm211, %v233, %v234
      %v244 = vpack.c.bf16 %v217, %v214
      %v245 = vpack.c.bf16 %v223, %v220
      %v246 = vpack.c.bf16 %v229, %v226
      %v247 = vpack.c.bf16 %v235, %v232
      %s248 = scalar_lea.vmem %s1, 2
      %v249 = vld [vmem:[%s248] sm:$0x3]
      %vm250 = vcmask 31744
      %v252 = vsel %vm250, %v244, 0
      %v255 = vsel %vm250, %v245, 0
      %v258 = vsel %vm250, %v246, 0
      %v261 = vsel %vm250, %v247, 0
      %vm263 = vcmask 1041408
      %v265 = vsel %vm263, %v249, 0
      %267 = vmatprep.subr.bf16.mxu0 0
      %268 = vmatpush1.bf16.msra.mxu0 0
      %269 = vmatprep.subr.bf16.mxu0 0
      %270 = vmatpush1.bf16.msra.mxu0 0
      %271 = vmatprep.subr.bf16.mxu0 0
      %272 = vmatpush1.bf16.msra.mxu0 0
      %273 = vmatprep.subr.bf16.mxu0 0
      %274 = vmatpush1.bf16.msra.mxu0 0
      %275 = vmatprep.subr.bf16.mxu0 0
      %276 = vmatpush1.bf16.msra.mxu0 0
      %277 = vmatprep.subr.bf16.mxu0 0
      %278 = vmatpush1.bf16.msra.mxu0 0
      %279 = vmatprep.subr.bf16.mxu0 0
      %280 = vmatpush1.bf16.msra.mxu0 0
      %281 = vmatprep.subr.bf16.mxu0 0
      %282 = vmatpush1.bf16.msra.mxu0 %v265
      %283 = vmatprep.subr.bf16.mxu0 0
      %284 = vmatpush2.bf16.msra.mxu0 0
      %285 = vmatprep.subr.bf16.mxu0 0
      %286 = vmatpush2.bf16.msra.mxu0 0
      %287 = vmatprep.subr.bf16.mxu0 0
      %288 = vmatpush2.bf16.msra.mxu0 0
      %289 = vmatprep.subr.bf16.mxu0 0
      %290 = vmatpush2.bf16.msra.mxu0 0
      %291 = vmatprep.subr.bf16.mxu0 0
      %292 = vmatpush2.bf16.msra.mxu0 0
      %293 = vmatprep.subr.bf16.mxu0 0
      %294 = vmatpush2.bf16.msra.mxu0 0
      %295 = vmatprep.subr.bf16.mxu0 0
      %296 = vmatpush2.bf16.msra.mxu0 0
      %297 = vmatprep.subr.bf16.mxu0 0
      %298 = vmatpush2.bf16.msra.mxu0 0
      %299 = vmatprep.mubr.bf16.mxu0 0
      %300 = vmatmul.mubr.bf16.gmra.mxu0 %v252
      %v301 = vpop.f32.mrf.mxu0
      %v302 = vadd.f32 0.0, %v301
      %v303 = vpop.f32.mrf.mxu0
      %v304 = vpop.f32.mrf.mxu0
      %v305 = vadd.f32 0.0, %v304
      %v306 = vpop.f32.mrf.mxu0
      %307 = vmatprep.mubr.bf16.mxu0 0
      %308 = vmatmul.mubr.bf16.gmra.mxu0 %v255
      %v309 = vpop.f32.mrf.mxu0
      %v310 = vadd.f32 0.0, %v309
      %v311 = vpop.f32.mrf.mxu0
      %v312 = vpop.f32.mrf.mxu0
      %v313 = vadd.f32 0.0, %v312
      %v314 = vpop.f32.mrf.mxu0
      %315 = vmatprep.mubr.bf16.mxu0 0
      %316 = vmatmul.mubr.bf16.gmra.mxu0 %v258
      %v317 = vpop.f32.mrf.mxu0
      %v318 = vadd.f32 0.0, %v317
      %v319 = vpop.f32.mrf.mxu0
      %v320 = vpop.f32.mrf.mxu0
      %v321 = vadd.f32 0.0, %v320
      %v322 = vpop.f32.mrf.mxu0
      %323 = vmatprep.mubr.bf16.mxu0 0
      %324 = vmatmul.mubr.bf16.gmra.mxu0 %v261
      %v325 = vpop.f32.mrf.mxu0
      %v326 = vadd.f32 0.0, %v325
      %v327 = vpop.f32.mrf.mxu0
      %v328 = vpop.f32.mrf.mxu0
      %v329 = vadd.f32 0.0, %v328
      %v330 = vpop.f32.mrf.mxu0
      %331 = vdwg.mxu0
      %v333 = vsel %vm250, %v190, 0
      %v336 = vsel %vm250, %v191, 0
      %v339 = vsel %vm250, %v192, 0
      %v342 = vsel %vm250, %v193, 0
      %v345 = vsel %vm263, %v194, 0
      %347 = vmatprep.subr.bf16.mxu0 0
      %348 = vmatpush1.bf16.msra.mxu0 0
      %349 = vmatprep.subr.bf16.mxu0 0
      %350 = vmatpush1.bf16.msra.mxu0 0
      %351 = vmatprep.subr.bf16.mxu0 0
      %352 = vmatpush1.bf16.msra.mxu0 0
      %353 = vmatprep.subr.bf16.mxu0 0
      %354 = vmatpush1.bf16.msra.mxu0 0
      %355 = vmatprep.subr.bf16.mxu0 0
      %356 = vmatpush1.bf16.msra.mxu0 0
      %357 = vmatprep.subr.bf16.mxu0 0
      %358 = vmatpush1.bf16.msra.mxu0 0
      %359 = vmatprep.subr.bf16.mxu0 0
      %360 = vmatpush1.bf16.msra.mxu0 0
      %361 = vmatprep.subr.bf16.mxu0 0
      %362 = vmatpush1.bf16.msra.mxu0 %v345
      %363 = vmatprep.subr.bf16.mxu0 0
      %364 = vmatpush2.bf16.msra.mxu0 0
      %365 = vmatprep.subr.bf16.mxu0 0
      %366 = vmatpush2.bf16.msra.mxu0 0
      %367 = vmatprep.subr.bf16.mxu0 0
      %368 = vmatpush2.bf16.msra.mxu0 0
      %369 = vmatprep.subr.bf16.mxu0 0
      %370 = vmatpush2.bf16.msra.mxu0 0
      %371 = vmatprep.subr.bf16.mxu0 0
      %372 = vmatpush2.bf16.msra.mxu0 0
      %373 = vmatprep.subr.bf16.mxu0 0
      %374 = vmatpush2.bf16.msra.mxu0 0
      %375 = vmatprep.subr.bf16.mxu0 0
      %376 = vmatpush2.bf16.msra.mxu0 0
      %377 = vmatprep.subr.bf16.mxu0 0
      %378 = vmatpush2.bf16.msra.mxu0 0
      %379 = vmatprep.mubr.bf16.mxu0 0
      %380 = vmatmul.mubr.bf16.gmra.mxu0 %v333
      %v381 = vpop.f32.mrf.mxu0
      %v382 = vadd.f32 %v302, %v381
      %v383 = vpop.f32.mrf.mxu0
      %v384 = vpop.f32.mrf.mxu0
      %v385 = vadd.f32 %v305, %v384
      %v386 = vpop.f32.mrf.mxu0
      %387 = vmatprep.mubr.bf16.mxu0 0
      %388 = vmatmul.mubr.bf16.gmra.mxu0 %v336
      %v389 = vpop.f32.mrf.mxu0
      %v390 = vadd.f32 %v310, %v389
      %v391 = vpop.f32.mrf.mxu0
      %v392 = vpop.f32.mrf.mxu0
      %v393 = vadd.f32 %v313, %v392
      %v394 = vpop.f32.mrf.mxu0
      %395 = vmatprep.mubr.bf16.mxu0 0
      %396 = vmatmul.mubr.bf16.gmra.mxu0 %v339
      %v397 = vpop.f32.mrf.mxu0
      %v398 = vadd.f32 %v318, %v397
      %v399 = vpop.f32.mrf.mxu0
      %v400 = vpop.f32.mrf.mxu0
      %v401 = vadd.f32 %v321, %v400
      %v402 = vpop.f32.mrf.mxu0
      %403 = vmatprep.mubr.bf16.mxu0 0
      %404 = vmatmul.mubr.bf16.gmra.mxu0 %v342
      %v405 = vpop.f32.mrf.mxu0
      %v406 = vadd.f32 %v326, %v405
      %v407 = vpop.f32.mrf.mxu0
      %v408 = vpop.f32.mrf.mxu0
      %v409 = vadd.f32 %v329, %v408
      %v410 = vpop.f32.mrf.mxu0
      %411 = vdwg.mxu0
      %v412 = vpack.c.bf16 %v176, %v174
      %v413 = vpack.c.bf16 %v180, %v178
      %v414 = vpack.c.bf16 %v184, %v182
      %v415 = vpack.c.bf16 %v188, %v186
      %s416 = scalar_lea.vmem %s1, 4
      %v417 = vld [vmem:[%s416] sm:$0x3]
      %v419 = vsel %vm250, %v412, 0
      %v422 = vsel %vm250, %v413, 0
      %v425 = vsel %vm250, %v414, 0
      %v428 = vsel %vm250, %v415, 0
      %v431 = vsel %vm263, %v417, 0
      %433 = vmatprep.subr.bf16.mxu0 0
      %434 = vmatpush1.bf16.msra.mxu0 0
      %435 = vmatprep.subr.bf16.mxu0 0
      %436 = vmatpush1.bf16.msra.mxu0 0
      %437 = vmatprep.subr.bf16.mxu0 0
      %438 = vmatpush1.bf16.msra.mxu0 0
      %439 = vmatprep.subr.bf16.mxu0 0
      %440 = vmatpush1.bf16.msra.mxu0 0
      %441 = vmatprep.subr.bf16.mxu0 0
      %442 = vmatpush1.bf16.msra.mxu0 0
      %443 = vmatprep.subr.bf16.mxu0 0
      %444 = vmatpush1.bf16.msra.mxu0 0
      %445 = vmatprep.subr.bf16.mxu0 0
      %446 = vmatpush1.bf16.msra.mxu0 0
      %447 = vmatprep.subr.bf16.mxu0 0
      %448 = vmatpush1.bf16.msra.mxu0 %v431
      %449 = vmatprep.subr.bf16.mxu0 0
      %450 = vmatpush2.bf16.msra.mxu0 0
      %451 = vmatprep.subr.bf16.mxu0 0
      %452 = vmatpush2.bf16.msra.mxu0 0
      %453 = vmatprep.subr.bf16.mxu0 0
      %454 = vmatpush2.bf16.msra.mxu0 0
      %455 = vmatprep.subr.bf16.mxu0 0
      %456 = vmatpush2.bf16.msra.mxu0 0
      %457 = vmatprep.subr.bf16.mxu0 0
      %458 = vmatpush2.bf16.msra.mxu0 0
      %459 = vmatprep.subr.bf16.mxu0 0
      %460 = vmatpush2.bf16.msra.mxu0 0
      %461 = vmatprep.subr.bf16.mxu0 0
      %462 = vmatpush2.bf16.msra.mxu0 0
      %463 = vmatprep.subr.bf16.mxu0 0
      %464 = vmatpush2.bf16.msra.mxu0 0
      %465 = vmatprep.mubr.bf16.mxu0 0
      %466 = vmatmul.mubr.bf16.gmra.mxu0 %v419
      %v467 = vpop.f32.mrf.mxu0
      %v468 = vadd.f32 0.0, %v467
      %v469 = vpop.f32.mrf.mxu0
      %v470 = vpop.f32.mrf.mxu0
      %v471 = vadd.f32 0.0, %v470
      %v472 = vpop.f32.mrf.mxu0
      %473 = vmatprep.mubr.bf16.mxu0 0
      %474 = vmatmul.mubr.bf16.gmra.mxu0 %v422
      %v475 = vpop.f32.mrf.mxu0
      %v476 = vadd.f32 0.0, %v475
      %v477 = vpop.f32.mrf.mxu0
      %v478 = vpop.f32.mrf.mxu0
      %v479 = vadd.f32 0.0, %v478
      %v480 = vpop.f32.mrf.mxu0
      %481 = vmatprep.mubr.bf16.mxu0 0
      %482 = vmatmul.mubr.bf16.gmra.mxu0 %v425
      %v483 = vpop.f32.mrf.mxu0
      %v484 = vadd.f32 0.0, %v483
      %v485 = vpop.f32.mrf.mxu0
      %v486 = vpop.f32.mrf.mxu0
      %v487 = vadd.f32 0.0, %v486
      %v488 = vpop.f32.mrf.mxu0
      %489 = vmatprep.mubr.bf16.mxu0 0
      %490 = vmatmul.mubr.bf16.gmra.mxu0 %v428
      %v491 = vpop.f32.mrf.mxu0
      %v492 = vadd.f32 0.0, %v491
      %v493 = vpop.f32.mrf.mxu0
      %v494 = vpop.f32.mrf.mxu0
      %v495 = vadd.f32 0.0, %v494
      %v496 = vpop.f32.mrf.mxu0
      %497 = vdwg.mxu0
      %v498 = vadd.f32 %v382, %v468
      %v499 = vadd.f32 %v385, %v471
      %v500 = vadd.f32 %v390, %v476
      %v501 = vadd.f32 %v393, %v479
      %v502 = vadd.f32 %v398, %v484
      %v503 = vadd.f32 %v401, %v487
      %v504 = vadd.f32 %v406, %v492
      %v505 = vadd.f32 %v409, %v495
      %v508 = vrot.slane %v188, 1
      %v509 = vrot.slane %v189, 1
      %v510 = vsel %vm211, %v508, %v509
      %v512 = vpack.c.bf16 %v220, %v217
      %v513 = vpack.c.bf16 %v226, %v223
      %v514 = vpack.c.bf16 %v232, %v229
      %v515 = vpack.c.bf16 %v510, %v235
      %s516 = scalar_lea.vmem %s1, 6
      %v517 = vld [vmem:[%s516] sm:$0x3]
      %v519 = vsel %vm250, %v512, 0
      %v522 = vsel %vm250, %v513, 0
      %v525 = vsel %vm250, %v514, 0
      %v528 = vsel %vm250, %v515, 0
      %v531 = vsel %vm263, %v517, 0
      %533 = vmatprep.subr.bf16.mxu0 0
      %534 = vmatpush1.bf16.msra.mxu0 0
      %535 = vmatprep.subr.bf16.mxu0 0
      %536 = vmatpush1.bf16.msra.mxu0 0
      %537 = vmatprep.subr.bf16.mxu0 0
      %538 = vmatpush1.bf16.msra.mxu0 0
      %539 = vmatprep.subr.bf16.mxu0 0
      %540 = vmatpush1.bf16.msra.mxu0 0
      %541 = vmatprep.subr.bf16.mxu0 0
      %542 = vmatpush1.bf16.msra.mxu0 0
      %543 = vmatprep.subr.bf16.mxu0 0
      %544 = vmatpush1.bf16.msra.mxu0 0
      %545 = vmatprep.subr.bf16.mxu0 0
      %546 = vmatpush1.bf16.msra.mxu0 0
      %547 = vmatprep.subr.bf16.mxu0 0
      %548 = vmatpush1.bf16.msra.mxu0 %v531
      %549 = vmatprep.subr.bf16.mxu0 0
      %550 = vmatpush2.bf16.msra.mxu0 0
      %551 = vmatprep.subr.bf16.mxu0 0
      %552 = vmatpush2.bf16.msra.mxu0 0
      %553 = vmatprep.subr.bf16.mxu0 0
      %554 = vmatpush2.bf16.msra.mxu0 0
      %555 = vmatprep.subr.bf16.mxu0 0
      %556 = vmatpush2.bf16.msra.mxu0 0
      %557 = vmatprep.subr.bf16.mxu0 0
      %558 = vmatpush2.bf16.msra.mxu0 0
      %559 = vmatprep.subr.bf16.mxu0 0
      %560 = vmatpush2.bf16.msra.mxu0 0
      %561 = vmatprep.subr.bf16.mxu0 0
      %562 = vmatpush2.bf16.msra.mxu0 0
      %563 = vmatprep.subr.bf16.mxu0 0
      %564 = vmatpush2.bf16.msra.mxu0 0
      %565 = vmatprep.mubr.bf16.mxu0 0
      %566 = vmatmul.mubr.bf16.gmra.mxu0 %v519
      %v567 = vpop.f32.mrf.mxu0
      %v568 = vadd.f32 0.0, %v567
      %v569 = vpop.f32.mrf.mxu0
      %v570 = vpop.f32.mrf.mxu0
      %v571 = vadd.f32 0.0, %v570
      %v572 = vpop.f32.mrf.mxu0
      %573 = vmatprep.mubr.bf16.mxu0 0
      %574 = vmatmul.mubr.bf16.gmra.mxu0 %v522
      %v575 = vpop.f32.mrf.mxu0
      %v576 = vadd.f32 0.0, %v575
      %v577 = vpop.f32.mrf.mxu0
      %v578 = vpop.f32.mrf.mxu0
      %v579 = vadd.f32 0.0, %v578
      %v580 = vpop.f32.mrf.mxu0
      %581 = vmatprep.mubr.bf16.mxu0 0
      %582 = vmatmul.mubr.bf16.gmra.mxu0 %v525
      %v583 = vpop.f32.mrf.mxu0
      %v584 = vadd.f32 0.0, %v583
      %v585 = vpop.f32.mrf.mxu0
      %v586 = vpop.f32.mrf.mxu0
      %v587 = vadd.f32 0.0, %v586
      %v588 = vpop.f32.mrf.mxu0
      %589 = vmatprep.mubr.bf16.mxu0 0
      %590 = vmatmul.mubr.bf16.gmra.mxu0 %v528
      %v591 = vpop.f32.mrf.mxu0
      %v592 = vadd.f32 0.0, %v591
      %v593 = vpop.f32.mrf.mxu0
      %v594 = vpop.f32.mrf.mxu0
      %v595 = vadd.f32 0.0, %v594
      %v596 = vpop.f32.mrf.mxu0
      %597 = vdwg.mxu0
      %v598 = vadd.f32 %v498, %v568
      %v599 = vadd.f32 %v499, %v571
      %v600 = vadd.f32 %v500, %v576
      %v601 = vadd.f32 %v501, %v579
      %v602 = vadd.f32 %v502, %v584
      %v603 = vadd.f32 %v503, %v587
      %v604 = vadd.f32 %v504, %v592
      %v605 = vadd.f32 %v505, %v595
      %v606 = vld [vmem:[%s2] sm:$0x1]
      %v608 = vlaneseq
      %v609 = vshrl.u32 %v608, 7
      %v610 = vsub.s32 0, %v609
      %v611 = vrot.slane %v606, %v610
      %v613 = vadd.f32 %v598, %v611
      %v614 = vadd.f32 %v599, %v611
      %v615 = vadd.f32 %v600, %v611
      %v616 = vadd.f32 %v601, %v611
      %v617 = vadd.f32 %v602, %v611
      %v618 = vadd.f32 %v603, %v611
      %v619 = vadd.f32 %v604, %v611
      %v620 = vadd.f32 %v605, %v611
      %621 = vst [vmem:[%s170] sm:$0xff] %v613
      %622 = vst [vmem:[%s170 + $0x8] sm:$0xff] %v614
      %623 = vst [vmem:[%s170 + $0x10] sm:$0xff] %v615
      %624 = vst [vmem:[%s170 + $0x18] sm:$0xff] %v616
      %625 = vst [vmem:[%s170 + $0x20] sm:$0xff] %v617
      %626 = vst [vmem:[%s170 + $0x28] sm:$0xff] %v618
      %627 = vst [vmem:[%s170 + $0x30] sm:$0xff] %v619
      %628 = vst [vmem:[%s170 + $0x38] sm:$0xff] %v620
      %p629 = scmp.lt.s32.totalorder %s14, 1
      %s630 = scalar_select %p629, %s14, 1
      %s631 = smul.addr %s630, 8
      %s632 = smul.addr %s631, 8
      %s633 = scalar_lea.vmem %s3, %s632
      // Predicated region
      $region33: #{_encoder_forward.5} parent=31 // pred_check
        %p634 = pneg %p100
      $region34: #{_encoder_forward.5} parent=31 // pred_check_branch
        %636 = sbr.rel (%p634) target = $region36
      $region35: #{_encoder_forward.5} parent=31 // pred_region
        _
      $region36: #{_encoder_forward.5} parent=31 // pred_fallthru
        _
    $region32: #{_encoder_forward.5} parent=5 // pred_fallthru
      _
    %p637 = scmp.le.s32.totalorder 2, %s9
    // Predicated region
    $region37: #{_encoder_forward.5} parent=5 // pred_check
      %p638 = pneg %p637
    $region38: #{_encoder_forward.5} parent=5 // pred_check_branch
      %640 = sbr.rel (%p638) target = $region40
    $region39: #{_encoder_forward.5} parent=5 // pred_region
      %s641 = ssub.s32 %s9, 2
      // Predicated region
      $region41: #{_encoder_forward.5} parent=39 // pred_check
        %p642 = pneg %p106
      $region42: #{_encoder_forward.5} parent=39 // pred_check_branch
        %644 = sbr.rel (%p642) target = $region44
      $region43: #{_encoder_forward.5} parent=39 // pred_region
        %p645 = scmp.lt.s32.totalorder %s15, 1
        %s646 = scalar_select %p645, %s15, 1
        %s647 = smul.addr %s646, 8
        %s648 = smul.addr %s647, 8
        %s649 = scalar_lea.vmem %s3, %s648
      $region44: #{_encoder_forward.5} parent=39 // pred_fallthru
        _
    $region40: #{_encoder_forward.5} parent=5 // pred_fallthru
      _
  $region6: #{_encoder_forward.5} parent=0 // loop_footer
    %s13 = sadd.s32 1, %s9
  $region7: #{_encoder_forward.5} parent=0 // loop_footer_branch
    %8 = sbr.rel target = $region3
  $region8: #{_encoder_forward.5} parent=0 // loop_exit
    _

// kernel: _encoder_forward.7
$region0: #{_encoder_forward.7}
  #allocation0 [shape = 'u32[]', space=smem, size = 0x4, offset = 0x4, fixed_abs, tag = 'smem constant byte address 0x4 - core index']
  #allocation1 [shape = 'u32[144,128]{1,0:T(1,128)}', space=vmem, size = 0x12000, scoped, tag = 'internal scratch']
  %s0 = inlined_call_operand.vmem [shape: f32[2,16,128], index: 0, kind: input, shape index: {}]
  %s1 = inlined_call_operand.vmem [shape: f32[2,128], index: 1, kind: input, shape index: {}]
  %s2 = inlined_call_operand.vmem [shape: f32[2,16,128], index: 2, kind: output, shape index: {}]
  %s3 = sld [smem:[#allocation0]]
  $region41: #{_encoder_forward.7} parent=0
    _
  %s5 = ssub.s32 1, %s3
  %s6 = scalar_select 0, %s5, %s3
  loop: start=0, step=1, limit=4
  $region2: #{_encoder_forward.7} parent=0 // loop_pre_header
    _
  $region3: #{_encoder_forward.7} parent=0 // loop_header
    %s8 = sphi 0, %s12
    %p9 = scmp.ge.s32.totalorder %s8, 4
    %s18 = sphi 0, %s20
    %s21 = sphi 0, %s18
    %s22 = sphi 0, %s21
    %s38 = sphi 0, %s22
    %s42 = sphi 0, %s42
    %s44 = sphi 0, %s42
    %s45 = sphi 0, %s44
    %s59 = sphi 0, %s45
    %s65 = sphi 0, %s67
    %s68 = sphi 0, %s65
    %s69 = sphi 0, %s68
    %s85 = sphi 0, %s69
  $region4: #{_encoder_forward.7} parent=0 // loop_header_branch
    %11 = sbr.rel (%p9) target = $region8
  $region5: #{_encoder_forward.7} parent=0 // loop_body
    %s13 = ssub.s32 %s8, 1
    %s14 = ssub.s32 %s8, 2
    %s15 = sadd.s32 %s8, 1
    %s16 = ssub.s32 %s8, %s15
    %p17 = scmp.eq.s32.totalorder %s16, 0
    %s19 = sadd.s32 %s18, 1
    %s20 = scalar_select %p17, %s18, %s19
    %p23 = pneg %p17
    %p24 = scmp.eq.s32.totalorder %s8, 1
    %p25 = por %p23, %p24
    %p26 = scmp.ne.s32.totalorder %s18, %s21
    %p27 = scmp.eq.s32.totalorder %s8, 0
    %p28 = por %p26, %p27
    %p29 = scmp.ne.s32.totalorder %s18, %s21
    %p30 = scmp.eq.s32.totalorder %s13, 1
    %p31 = por %p29, %p30
    %p32 = scmp.ne.s32.totalorder %s21, %s22
    %p33 = scmp.eq.s32.totalorder %s13, 0
    %p34 = por %p32, %p33
    %p35 = scmp.ne.s32.totalorder %s21, %s22
    %p36 = scmp.eq.s32.totalorder %s14, 1
    %p37 = por %p35, %p36
    %p39 = scmp.ne.s32.totalorder %s22, %s38
    %p40 = scmp.eq.s32.totalorder %s14, 0
    %p41 = por %p39, %p40
    %s43 = sadd.s32 %s42, 1
    %p46 = scmp.eq.s32.totalorder %s8, 1
    %p47 = scmp.ne.s32.totalorder %s42, %s44
    %p48 = scmp.eq.s32.totalorder %s8, 0
    %p49 = por %p47, %p48
    %p50 = scmp.ne.s32.totalorder %s42, %s44
    %p51 = scmp.eq.s32.totalorder %s13, 1
    %p52 = por %p50, %p51
    %p53 = scmp.ne.s32.totalorder %s44, %s45
    %p54 = scmp.eq.s32.totalorder %s13, 0
    %p55 = por %p53, %p54
    %p56 = scmp.ne.s32.totalorder %s44, %s45
    %p57 = scmp.eq.s32.totalorder %s14, 1
    %p58 = por %p56, %p57
    %p60 = scmp.ne.s32.totalorder %s45, %s59
    %p61 = scmp.eq.s32.totalorder %s14, 0
    %p62 = por %p60, %p61
    %s63 = ssub.s32 %s8, %s15
    %p64 = scmp.eq.s32.totalorder %s63, 0
    %s66 = sadd.s32 %s65, 1
    %s67 = scalar_select %p64, %s65, %s66
    %p70 = pneg %p64
    %p71 = scmp.eq.s32.totalorder %s8, 1
    %p72 = por %p70, %p71
    %p73 = scmp.ne.s32.totalorder %s65, %s68
    %p74 = scmp.eq.s32.totalorder %s8, 0
    %p75 = por %p73, %p74
    %p76 = scmp.ne.s32.totalorder %s65, %s68
    %p77 = scmp.eq.s32.totalorder %s13, 1
    %p78 = por %p76, %p77
    %p79 = scmp.ne.s32.totalorder %s68, %s69
    %p80 = scmp.eq.s32.totalorder %s13, 0
    %p81 = por %p79, %p80
    %p82 = scmp.ne.s32.totalorder %s68, %s69
    %p83 = scmp.eq.s32.totalorder %s14, 1
    %p84 = por %p82, %p83
    %p86 = scmp.ne.s32.totalorder %s69, %s85
    %p87 = scmp.eq.s32.totalorder %s14, 0
    %p88 = por %p86, %p87
    %p89 = scmp.le.s32.totalorder 1, %s8
    %p90 = scmp.lt.s32.totalorder %s8, 3
    %p91 = pnand %p89, %p90
    %p92 = pneg %p91
    // Predicated region
    $region9: #{_encoder_forward.7} parent=5 // pred_check
      _
    $region10: #{_encoder_forward.7} parent=5 // pred_check_branch
      %94 = sbr.rel (%p91) target = $region12
    $region11: #{_encoder_forward.7} parent=5 // pred_region
      %s95 = ssub.s32 %s8, 1
      // Predicated region
      $region13: #{_encoder_forward.7} parent=11 // pred_check
        %p96 = pneg %p55
      $region14: #{_encoder_forward.7} parent=11 // pred_check_branch
        %98 = sbr.rel (%p96) target = $region16
      $region15: #{_encoder_forward.7} parent=11 // pred_region
        _
      $region16: #{_encoder_forward.7} parent=11 // pred_fallthru
        _
    $region12: #{_encoder_forward.7} parent=5 // pred_fallthru
      _
    %p99 = scmp.lt.s32.totalorder %s8, 2
    // Predicated region
    $region17: #{_encoder_forward.7} parent=5 // pred_check
      %p100 = pneg %p99
    $region18: #{_encoder_forward.7} parent=5 // pred_check_branch
      %102 = sbr.rel (%p100) target = $region20
    $region19: #{_encoder_forward.7} parent=5 // pred_region
      // Predicated region
      $region21: #{_encoder_forward.7} parent=19 // pred_check
        %p103 = pneg %p28
      $region22: #{_encoder_forward.7} parent=19 // pred_check_branch
        %105 = sbr.rel (%p103) target = $region24
      $region23: #{_encoder_forward.7} parent=19 // pred_region
        %p106 = scmp.lt.s32.totalorder %s8, 1
        %s107 = scalar_select %p106, %s8, 1
        %s108 = smul.addr %s107, 2
        %s109 = smul.addr %s108, 8
        %s110 = scalar_lea.vmem %s0, %s109
      $region24: #{_encoder_forward.7} parent=19 // pred_fallthru
        _
    $region20: #{_encoder_forward.7} parent=5 // pred_fallthru
      _
    %p111 = scmp.le.s32.totalorder 1, %s8
    %p112 = scmp.lt.s32.totalorder %s8, 3
    %p113 = pnand %p111, %p112
    %p114 = pneg %p113
    // Predicated region
    $region25: #{_encoder_forward.7} parent=5 // pred_check
      _
    $region26: #{_encoder_forward.7} parent=5 // pred_check_branch
      %116 = sbr.rel (%p113) target = $region28
    $region27: #{_encoder_forward.7} parent=5 // pred_region
      %s117 = ssub.s32 %s8, 1
      %p118 = scmp.lt.s32.totalorder %s13, 1
      %s119 = scalar_select %p118, %s13, 1
      %s120 = smul.addr %s119, 2
      %s121 = smul.addr %s120, 8
      %s122 = scalar_lea.vmem %s0, %s121
      %p123 = pneg %p34
      %p124 = pneg %p31
      %p125 = pneg %p55
      %p126 = pneg %p52
      %p127 = pneg %p81
      %p128 = pneg %p78
      %p129 = scmp.lt.s32.totalorder %s13, 1
      %s130 = scalar_select %p129, %s13, 1
      %s131 = smul.addr %s130, 2
      %s132 = smul.addr %s131, 8
      %s133 = scalar_lea.vmem %s2, %s132
      %p134 = scmp.lt.s32.totalorder %s13, 1
      %s135 = scalar_select %p134, %s13, 1
      %s136 = smul.addr %s135, 2
      %s137 = smul.addr %s136, 8
      %s138 = scalar_lea.vmem %s0, %s137
      %p139 = scmp.lt.s32.totalorder %s13, 1
      %s140 = scalar_select %p139, %s13, 1
      %s141 = smul.addr %s140, 2
      %s142 = smul.addr %s141, 8
      %s143 = scalar_lea.vmem %s2, %s142
      %v144 = vld [vmem:[%s1] sm:$0x1]
      %v145 = vld [vmem:[%s1 + $0x1] sm:$0x1]
      %v146 = vld [vmem:[%s138] sm:$0xff]
      %v147 = vld [vmem:[%s138 + $0x8] sm:$0xff]
      %v148 = vlaneseq
      %v149 = vshrl.u32 %v148, 7
      %v150 = vsub.s32 0, %v149
      %v151 = vrot.slane %v144, %v150
      %v152 = vmul.f32 %v146, %v151
      %v153 = vmul.f32 %v147, %v151
      %v154 = vlaneseq
      %v155 = vshrl.u32 %v154, 7
      %v156 = vsub.s32 0, %v155
      %v157 = vrot.slane %v145, %v156
      %v158 = vadd.f32 %v152, %v157
      %v159 = vadd.f32 %v153, %v157
      %160 = vst [vmem:[%s143] sm:$0xff] %v158
      %161 = vst [vmem:[%s143 + $0x8] sm:$0xff] %v159
      %p162 = scmp.lt.s32.totalorder %s13, 1
      %s163 = scalar_select %p162, %s13, 1
      %s164 = smul.addr %s163, 2
      %s165 = smul.addr %s164, 8
      %s166 = scalar_lea.vmem %s2, %s165
      // Predicated region
      $region29: #{_encoder_forward.7} parent=27 // pred_check
        %p167 = pneg %p78
      $region30: #{_encoder_forward.7} parent=27 // pred_check_branch
        %169 = sbr.rel (%p167) target = $region32
      $region31: #{_encoder_forward.7} parent=27 // pred_region
        _
      $region32: #{_encoder_forward.7} parent=27 // pred_fallthru
        _
    $region28: #{_encoder_forward.7} parent=5 // pred_fallthru
      _
    %p170 = scmp.le.s32.totalorder 2, %s8
    // Predicated region
    $region33: #{_encoder_forward.7} parent=5 // pred_check
      %p171 = pneg %p170
    $region34: #{_encoder_forward.7} parent=5 // pred_check_branch
      %173 = sbr.rel (%p171) target = $region36
    $region35: #{_encoder_forward.7} parent=5 // pred_region
      %s174 = ssub.s32 %s8, 2
      // Predicated region
      $region37: #{_encoder_forward.7} parent=35 // pred_check
        %p175 = pneg %p84
      $region38: #{_encoder_forward.7} parent=35 // pred_check_branch
        %177 = sbr.rel (%p175) target = $region40
      $region39: #{_encoder_forward.7} parent=35 // pred_region
        %p178 = scmp.lt.s32.totalorder %s14, 1
        %s179 = scalar_select %p178, %s14, 1
        %s180 = smul.addr %s179, 2
        %s181 = smul.addr %s180, 8
        %s182 = scalar_lea.vmem %s2, %s181
      $region40: #{_encoder_forward.7} parent=35 // pred_fallthru
        _
    $region36: #{_encoder_forward.7} parent=5 // pred_fallthru
      _
  $region6: #{_encoder_forward.7} parent=0 // loop_footer
    %s12 = sadd.s32 1, %s8
  $region7: #{_encoder_forward.7} parent=0 // loop_footer_branch
    %7 = sbr.rel target = $region3
  $region8: #{_encoder_forward.7} parent=0 // loop_exit
    _

// kernel: _encoder_forward.6
$region0: #{_encoder_forward.6}
  #allocation0 [shape = 'u32[]', space=smem, size = 0x4, offset = 0x4, fixed_abs, tag = 'smem constant byte address 0x4 - core index']
  #allocation1 [shape = 'u32[144,128]{1,0:T(1,128)}', space=vmem, size = 0x12000, scoped, tag = 'internal scratch']
  %s0 = inlined_call_operand.vmem [shape: f32[2,5,5,512], index: 0, kind: input, shape index: {}]
  %s1 = inlined_call_operand.vmem [shape: bf16[4,512,128], index: 1, kind: input, shape index: {}]
  %s2 = inlined_call_operand.vmem [shape: f32[2,16,128], index: 2, kind: output, shape index: {0}]
  %s3 = inlined_call_operand.vmem [shape: f32[2,2,128], index: 3, kind: output, shape index: {1}]
  %4 = xla_tuple %s2, %s3
  %s5 = sld [smem:[#allocation0]]
  $region49: #{_encoder_forward.6} parent=0
    _
  %s7 = ssub.s32 1, %s5
  %s8 = scalar_select 0, %s7, %s5
  loop: start=0, step=1, limit=4
  $region2: #{_encoder_forward.6} parent=0 // loop_pre_header
    _
  $region3: #{_encoder_forward.6} parent=0 // loop_header
    %s10 = sphi 0, %s14
    %p11 = scmp.ge.s32.totalorder %s10, 4
    %s20 = sphi 0, %s22
    %s23 = sphi 0, %s20
    %s24 = sphi 0, %s23
    %s40 = sphi 0, %s24
    %s44 = sphi 0, %s44
    %s46 = sphi 0, %s44
    %s47 = sphi 0, %s46
    %s61 = sphi 0, %s47
    %s67 = sphi 0, %s69
    %s70 = sphi 0, %s67
    %s71 = sphi 0, %s70
    %s87 = sphi 0, %s71
    %s93 = sphi 0, %s95
    %s96 = sphi 0, %s93
    %s97 = sphi 0, %s96
    %s113 = sphi 0, %s97
  $region4: #{_encoder_forward.6} parent=0 // loop_header_branch
    %13 = sbr.rel (%p11) target = $region8
  $region5: #{_encoder_forward.6} parent=0 // loop_body
    %s15 = ssub.s32 %s10, 1
    %s16 = ssub.s32 %s10, 2
    %s17 = sadd.s32 %s10, 1
    %s18 = ssub.s32 %s10, %s17
    %p19 = scmp.eq.s32.totalorder %s18, 0
    %s21 = sadd.s32 %s20, 1
    %s22 = scalar_select %p19, %s20, %s21
    %p25 = pneg %p19
    %p26 = scmp.eq.s32.totalorder %s10, 1
    %p27 = por %p25, %p26
    %p28 = scmp.ne.s32.totalorder %s20, %s23
    %p29 = scmp.eq.s32.totalorder %s10, 0
    %p30 = por %p28, %p29
    %p31 = scmp.ne.s32.totalorder %s20, %s23
    %p32 = scmp.eq.s32.totalorder %s15, 1
    %p33 = por %p31, %p32
    %p34 = scmp.ne.s32.totalorder %s23, %s24
    %p35 = scmp.eq.s32.totalorder %s15, 0
    %p36 = por %p34, %p35
    %p37 = scmp.ne.s32.totalorder %s23, %s24
    %p38 = scmp.eq.s32.totalorder %s16, 1
    %p39 = por %p37, %p38
    %p41 = scmp.ne.s32.totalorder %s24, %s40
    %p42 = scmp.eq.s32.totalorder %s16, 0
    %p43 = por %p41, %p42
    %s45 = sadd.s32 %s44, 1
    %p48 = scmp.eq.s32.totalorder %s10, 1
    %p49 = scmp.ne.s32.totalorder %s44, %s46
    %p50 = scmp.eq.s32.totalorder %s10, 0
    %p51 = por %p49, %p50
    %p52 = scmp.ne.s32.totalorder %s44, %s46
    %p53 = scmp.eq.s32.totalorder %s15, 1
    %p54 = por %p52, %p53
    %p55 = scmp.ne.s32.totalorder %s46, %s47
    %p56 = scmp.eq.s32.totalorder %s15, 0
    %p57 = por %p55, %p56
    %p58 = scmp.ne.s32.totalorder %s46, %s47
    %p59 = scmp.eq.s32.totalorder %s16, 1
    %p60 = por %p58, %p59
    %p62 = scmp.ne.s32.totalorder %s47, %s61
    %p63 = scmp.eq.s32.totalorder %s16, 0
    %p64 = por %p62, %p63
    %s65 = ssub.s32 %s10, %s17
    %p66 = scmp.eq.s32.totalorder %s65, 0
    %s68 = sadd.s32 %s67, 1
    %s69 = scalar_select %p66, %s67, %s68
    %p72 = pneg %p66
    %p73 = scmp.eq.s32.totalorder %s10, 1
    %p74 = por %p72, %p73
    %p75 = scmp.ne.s32.totalorder %s67, %s70
    %p76 = scmp.eq.s32.totalorder %s10, 0
    %p77 = por %p75, %p76
    %p78 = scmp.ne.s32.totalorder %s67, %s70
    %p79 = scmp.eq.s32.totalorder %s15, 1
    %p80 = por %p78, %p79
    %p81 = scmp.ne.s32.totalorder %s70, %s71
    %p82 = scmp.eq.s32.totalorder %s15, 0
    %p83 = por %p81, %p82
    %p84 = scmp.ne.s32.totalorder %s70, %s71
    %p85 = scmp.eq.s32.totalorder %s16, 1
    %p86 = por %p84, %p85
    %p88 = scmp.ne.s32.totalorder %s71, %s87
    %p89 = scmp.eq.s32.totalorder %s16, 0
    %p90 = por %p88, %p89
    %s91 = ssub.s32 %s10, %s17
    %p92 = scmp.eq.s32.totalorder %s91, 0
    %s94 = sadd.s32 %s93, 1
    %s95 = scalar_select %p92, %s93, %s94
    %p98 = pneg %p92
    %p99 = scmp.eq.s32.totalorder %s10, 1
    %p100 = por %p98, %p99
    %p101 = scmp.ne.s32.totalorder %s93, %s96
    %p102 = scmp.eq.s32.totalorder %s10, 0
    %p103 = por %p101, %p102
    %p104 = scmp.ne.s32.totalorder %s93, %s96
    %p105 = scmp.eq.s32.totalorder %s15, 1
    %p106 = por %p104, %p105
    %p107 = scmp.ne.s32.totalorder %s96, %s97
    %p108 = scmp.eq.s32.totalorder %s15, 0
    %p109 = por %p107, %p108
    %p110 = scmp.ne.s32.totalorder %s96, %s97
    %p111 = scmp.eq.s32.totalorder %s16, 1
    %p112 = por %p110, %p111
    %p114 = scmp.ne.s32.totalorder %s97, %s113
    %p115 = scmp.eq.s32.totalorder %s16, 0
    %p116 = por %p114, %p115
    %p117 = scmp.le.s32.totalorder 1, %s10
    %p118 = scmp.lt.s32.totalorder %s10, 3
    %p119 = pnand %p117, %p118
    %p120 = pneg %p119
    // Predicated region
    $region9: #{_encoder_forward.6} parent=5 // pred_check
      _
    $region10: #{_encoder_forward.6} parent=5 // pred_check_branch
      %122 = sbr.rel (%p119) target = $region12
    $region11: #{_encoder_forward.6} parent=5 // pred_region
      %s123 = ssub.s32 %s10, 1
      // Predicated region
      $region13: #{_encoder_forward.6} parent=11 // pred_check
        %p124 = pneg %p57
      $region14: #{_encoder_forward.6} parent=11 // pred_check_branch
        %126 = sbr.rel (%p124) target = $region16
      $region15: #{_encoder_forward.6} parent=11 // pred_region
        _
      $region16: #{_encoder_forward.6} parent=11 // pred_fallthru
        _
    $region12: #{_encoder_forward.6} parent=5 // pred_fallthru
      _
    %p127 = scmp.lt.s32.totalorder %s10, 2
    // Predicated region
    $region17: #{_encoder_forward.6} parent=5 // pred_check
      %p128 = pneg %p127
    $region18: #{_encoder_forward.6} parent=5 // pred_check_branch
      %130 = sbr.rel (%p128) target = $region20
    $region19: #{_encoder_forward.6} parent=5 // pred_region
      // Predicated region
      $region21: #{_encoder_forward.6} parent=19 // pred_check
        %p131 = pneg %p30
      $region22: #{_encoder_forward.6} parent=19 // pred_check_branch
        %133 = sbr.rel (%p131) target = $region24
      $region23: #{_encoder_forward.6} parent=19 // pred_region
        %p134 = scmp.lt.s32.totalorder %s10, 1
        %s135 = scalar_select %p134, %s10, 1
        %s136 = smul.addr %s135, 20
        %s137 = smul.addr %s136, 8
        %s138 = scalar_lea.vmem %s0, %s137
      $region24: #{_encoder_forward.6} parent=19 // pred_fallthru
        _
    $region20: #{_encoder_forward.6} parent=5 // pred_fallthru
      _
    %p139 = scmp.le.s32.totalorder 1, %s10
    %p140 = scmp.lt.s32.totalorder %s10, 3
    %p141 = pnand %p139, %p140
    %p142 = pneg %p141
    // Predicated region
    $region25: #{_encoder_forward.6} parent=5 // pred_check
      _
    $region26: #{_encoder_forward.6} parent=5 // pred_check_branch
      %144 = sbr.rel (%p141) target = $region28
    $region27: #{_encoder_forward.6} parent=5 // pred_region
      %s145 = ssub.s32 %s10, 1
      %p146 = scmp.lt.s32.totalorder %s15, 1
      %s147 = scalar_select %p146, %s15, 1
      %s148 = smul.addr %s147, 20
      %s149 = smul.addr %s148, 8
      %s150 = scalar_lea.vmem %s0, %s149
      %p151 = pneg %p36
      %p152 = pneg %p33
      %p153 = pneg %p57
      %p154 = pneg %p54
      %p155 = pneg %p83
      %p156 = pneg %p80
      %p157 = scmp.lt.s32.totalorder %s15, 1
      %s158 = scalar_select %p157, %s15, 1
      %s159 = smul.addr %s158, 2
      %s160 = smul.addr %s159, 8
      %s161 = scalar_lea.vmem %s2, %s160
      %p162 = pneg %p109
      %p163 = pneg %p106
      %p164 = scmp.lt.s32.totalorder %s15, 1
      %s165 = scalar_select %p164, %s15, 1
      %s166 = smul.addr %s165, 2
      %s167 = scalar_lea.vmem %s3, %s166
      %p168 = scmp.lt.s32.totalorder %s15, 1
      %s169 = scalar_select %p168, %s15, 1
      %s170 = smul.addr %s169, 20
      %s171 = smul.addr %s170, 8
      %s172 = scalar_lea.vmem %s0, %s171
      %p173 = scmp.lt.s32.totalorder %s15, 1
      %s174 = scalar_select %p173, %s15, 1
      %s175 = smul.addr %s174, 2
      %s176 = smul.addr %s175, 8
      %s177 = scalar_lea.vmem %s2, %s176
      %p178 = scmp.lt.s32.totalorder %s15, 1
      %s179 = scalar_select %p178, %s15, 1
      %s180 = smul.addr %s179, 2
      %s181 = scalar_lea.vmem %s3, %s180
      %v183 = vld [vmem:[%s172] sm:$0x1f]
      %v184 = vld [vmem:[%s172 + $0x8] sm:$0x1f]
      %v185 = vld [vmem:[%s172 + $0x10] sm:$0x1f]
      %v186 = vld [vmem:[%s172 + $0x18] sm:$0x1f]
      %v187 = vld [vmem:[%s172 + $0x20] sm:$0x1f]
      %v188 = vld [vmem:[%s172 + $0x28] sm:$0x1f]
      %v189 = vld [vmem:[%s172 + $0x30] sm:$0x1f]
      %v190 = vld [vmem:[%s172 + $0x38] sm:$0x1f]
      %v191 = vld [vmem:[%s172 + $0x40] sm:$0x1f]
      %v192 = vld [vmem:[%s172 + $0x48] sm:$0x1f]
      %v193 = vld [vmem:[%s172 + $0x50] sm:$0x1f]
      %v194 = vld [vmem:[%s172 + $0x58] sm:$0x1f]
      %v195 = vld [vmem:[%s172 + $0x60] sm:$0x1f]
      %v196 = vld [vmem:[%s172 + $0x68] sm:$0x1f]
      %v197 = vld [vmem:[%s172 + $0x70] sm:$0x1f]
      %v198 = vld [vmem:[%s172 + $0x78] sm:$0x1f]
      %v199 = vld [vmem:[%s172 + $0x80] sm:$0x1f]
      %v200 = vld [vmem:[%s172 + $0x88] sm:$0x1f]
      %v201 = vld [vmem:[%s172 + $0x90] sm:$0x1f]
      %v202 = vld [vmem:[%s172 + $0x98] sm:$0x1f]
      %vm203 = vcmp.ge.f32.partialorder %v183, 0.0
      %vm204 = vcmp.ge.f32.partialorder %v184, 0.0
      %vm205 = vcmp.ge.f32.partialorder %v185, 0.0
      %vm206 = vcmp.ge.f32.partialorder %v186, 0.0
      %vm207 = vcmp.ge.f32.partialorder %v187, 0.0
      %vm208 = vcmp.ge.f32.partialorder %v188, 0.0
      %vm209 = vcmp.ge.f32.partialorder %v189, 0.0
      %vm210 = vcmp.ge.f32.partialorder %v190, 0.0
      %vm211 = vcmp.ge.f32.partialorder %v191, 0.0
      %vm212 = vcmp.ge.f32.partialorder %v192, 0.0
      %vm213 = vcmp.ge.f32.partialorder %v193, 0.0
      %vm214 = vcmp.ge.f32.partialorder %v194, 0.0
      %vm215 = vcmp.ge.f32.partialorder %v195, 0.0
      %vm216 = vcmp.ge.f32.partialorder %v196, 0.0
      %vm217 = vcmp.ge.f32.partialorder %v197, 0.0
      %vm218 = vcmp.ge.f32.partialorder %v198, 0.0
      %vm219 = vcmp.ge.f32.partialorder %v199, 0.0
      %vm220 = vcmp.ge.f32.partialorder %v200, 0.0
      %vm221 = vcmp.ge.f32.partialorder %v201, 0.0
      %vm222 = vcmp.ge.f32.partialorder %v202, 0.0
      %v223 = vmul.f32 %v183, 0.2
      %v224 = vmul.f32 %v184, 0.2
      %v225 = vmul.f32 %v185, 0.2
      %v226 = vmul.f32 %v186, 0.2
      %v227 = vmul.f32 %v187, 0.2
      %v228 = vmul.f32 %v188, 0.2
      %v229 = vmul.f32 %v189, 0.2
      %v230 = vmul.f32 %v190, 0.2
      %v231 = vmul.f32 %v191, 0.2
      %v232 = vmul.f32 %v192, 0.2
      %v233 = vmul.f32 %v193, 0.2
      %v234 = vmul.f32 %v194, 0.2
      %v235 = vmul.f32 %v195, 0.2
      %v236 = vmul.f32 %v196, 0.2
      %v237 = vmul.f32 %v197, 0.2
      %v238 = vmul.f32 %v198, 0.2
      %v239 = vmul.f32 %v199, 0.2
      %v240 = vmul.f32 %v200, 0.2
      %v241 = vmul.f32 %v201, 0.2
      %v242 = vmul.f32 %v202, 0.2
      %v243 = vsel %vm203, %v183, %v223
      %v244 = vsel %vm204, %v184, %v224
      %v245 = vsel %vm205, %v185, %v225
      %v246 = vsel %vm206, %v186, %v226
      %v247 = vsel %vm207, %v187, %v227
      %v248 = vsel %vm208, %v188, %v228
      %v249 = vsel %vm209, %v189, %v229
      %v250 = vsel %vm210, %v190, %v230
      %v251 = vsel %vm211, %v191, %v231
      %v252 = vsel %vm212, %v192, %v232
      %v253 = vsel %vm213, %v193, %v233
      %v254 = vsel %vm214, %v194, %v234
      %v255 = vsel %vm215, %v195, %v235
      %v256 = vsel %vm216, %v196, %v236
      %v257 = vsel %vm217, %v197, %v237
      %v258 = vsel %vm218, %v198, %v238
      %v259 = vsel %vm219, %v199, %v239
      %v260 = vsel %vm220, %v200, %v240
      %v261 = vsel %vm221, %v201, %v241
      %v262 = vsel %vm222, %v202, %v242
      %v279 = vcombine.low %v243, %v244
      %v280 = vcombine.low %v245, %v246
      %v281 = vcombine.low %v247, %v248
      %v282 = vcombine.low %v249, %v250
      %v283 = vcombine.low %v251, %v252
      %v284 = vcombine.low %v253, %v254
      %v285 = vcombine.low %v255, %v256
      %v286 = vcombine.low %v257, %v258
      %v287 = vcombine.low %v279, %v281
      %v288 = vcombine.high %v279, %v281
      %v289 = vcombine.low %v280, %v282
      %v290 = vcombine.high %v280, %v282
      %v291 = vcombine.low %v283, %v285
      %v292 = vcombine.high %v283, %v285
      %v293 = vcombine.low %v284, %v286
      %v294 = vcombine.high %v284, %v286
      %v303 = vpack.c.bf16 %v291, %v287
      %v304 = vpack.c.bf16 %v292, %v288
      %v305 = vpack.c.bf16 %v293, %v289
      %v306 = vpack.c.bf16 %v294, %v290
      %v307 = vld [vmem:[%s1] sm:$0xf]
      %v308 = vld [vmem:[%s1 + $0x4] sm:$0xf]
      %v309 = vld [vmem:[%s1 + $0x8] sm:$0xf]
      %v310 = vld [vmem:[%s1 + $0xc] sm:$0xf]
      %v311 = vld [vmem:[%s1 + $0x10] sm:$0xf]
      %v312 = vld [vmem:[%s1 + $0x14] sm:$0xf]
      %v313 = vld [vmem:[%s1 + $0x18] sm:$0xf]
      %v314 = vld [vmem:[%s1 + $0x1c] sm:$0xf]
      %v315 = vld [vmem:[%s1 + $0x20] sm:$0xf]
      %v316 = vld [vmem:[%s1 + $0x24] sm:$0xf]
      %v317 = vld [vmem:[%s1 + $0x28] sm:$0xf]
      %v318 = vld [vmem:[%s1 + $0x2c] sm:$0xf]
      %v319 = vld [vmem:[%s1 + $0x30] sm:$0xf]
      %v320 = vld [vmem:[%s1 + $0x34] sm:$0xf]
      %v321 = vld [vmem:[%s1 + $0x38] sm:$0xf]
      %v322 = vld [vmem:[%s1 + $0x3c] sm:$0xf]
      %v323 = vld [vmem:[%s1 + $0x40] sm:$0xf]
      %v324 = vld [vmem:[%s1 + $0x44] sm:$0xf]
      %v325 = vld [vmem:[%s1 + $0x48] sm:$0xf]
      %v326 = vld [vmem:[%s1 + $0x4c] sm:$0xf]
      %v327 = vld [vmem:[%s1 + $0x50] sm:$0xf]
      %v328 = vld [vmem:[%s1 + $0x54] sm:$0xf]
      %v329 = vld [vmem:[%s1 + $0x58] sm:$0xf]
      %v330 = vld [vmem:[%s1 + $0x5c] sm:$0xf]
      %v331 = vld [vmem:[%s1 + $0x60] sm:$0xf]
      %v332 = vld [vmem:[%s1 + $0x64] sm:$0xf]
      %v333 = vld [vmem:[%s1 + $0x68] sm:$0xf]
      %v334 = vld [vmem:[%s1 + $0x6c] sm:$0xf]
      %v335 = vld [vmem:[%s1 + $0x70] sm:$0xf]
      %v336 = vld [vmem:[%s1 + $0x74] sm:$0xf]
      %v337 = vld [vmem:[%s1 + $0x78] sm:$0xf]
      %v338 = vld [vmem:[%s1 + $0x7c] sm:$0xf]
      %v339 = vld [vmem:[%s1 + $0x80] sm:$0xf]
      %v340 = vld [vmem:[%s1 + $0x84] sm:$0xf]
      %v341 = vld [vmem:[%s1 + $0x88] sm:$0xf]
      %v342 = vld [vmem:[%s1 + $0x8c] sm:$0xf]
      %v343 = vld [vmem:[%s1 + $0x90] sm:$0xf]
      %v344 = vld [vmem:[%s1 + $0x94] sm:$0xf]
      %v345 = vld [vmem:[%s1 + $0x98] sm:$0xf]
      %v346 = vld [vmem:[%s1 + $0x9c] sm:$0xf]
      %v347 = vld [vmem:[%s1 + $0xa0] sm:$0xf]
      %v348 = vld [vmem:[%s1 + $0xa4] sm:$0xf]
      %v349 = vld [vmem:[%s1 + $0xa8] sm:$0xf]
      %v350 = vld [vmem:[%s1 + $0xac] sm:$0xf]
      %v351 = vld [vmem:[%s1 + $0xb0] sm:$0xf]
      %v352 = vld [vmem:[%s1 + $0xb4] sm:$0xf]
      %v353 = vld [vmem:[%s1 + $0xb8] sm:$0xf]
      %v354 = vld [vmem:[%s1 + $0xbc] sm:$0xf]
      %v355 = vld [vmem:[%s1 + $0xc0] sm:$0xf]
      %v356 = vld [vmem:[%s1 + $0xc4] sm:$0xf]
      %v357 = vld [vmem:[%s1 + $0xc8] sm:$0xf]
      %v358 = vld [vmem:[%s1 + $0xcc] sm:$0xf]
      %v359 = vld [vmem:[%s1 + $0xd0] sm:$0xf]
      %v360 = vld [vmem:[%s1 + $0xd4] sm:$0xf]
      %v361 = vld [vmem:[%s1 + $0xd8] sm:$0xf]
      %v362 = vld [vmem:[%s1 + $0xdc] sm:$0xf]
      %v363 = vld [vmem:[%s1 + $0xe0] sm:$0xf]
      %v364 = vld [vmem:[%s1 + $0xe4] sm:$0xf]
      %v365 = vld [vmem:[%s1 + $0xe8] sm:$0xf]
      %v366 = vld [vmem:[%s1 + $0xec] sm:$0xf]
      %v367 = vld [vmem:[%s1 + $0xf0] sm:$0xf]
      %v368 = vld [vmem:[%s1 + $0xf4] sm:$0xf]
      %v369 = vld [vmem:[%s1 + $0xf8] sm:$0xf]
      %v370 = vld [vmem:[%s1 + $0xfc] sm:$0xf]
      %v371 = vcombine.high %v243, %v244
      %v372 = vcombine.high %v245, %v246
      %v373 = vcombine.high %v247, %v248
      %v374 = vcombine.high %v249, %v250
      %v375 = vcombine.high %v251, %v252
      %v376 = vcombine.high %v253, %v254
      %v377 = vcombine.high %v255, %v256
      %v378 = vcombine.high %v257, %v258
      %vm379 = vcmask 1042432
      %vm380 = vcmask 1046532
      %vm381 = vmor %vm379, %vm380
      %v382 = vrot.slane %v279, 5
      %v383 = vrot.slane %v382, 4
      %v384 = vrot.slane %v371, 5
      %v385 = vsel %vm381, %v383, %v384
      %v386 = vrot.slane %v280, 5
      %v387 = vrot.slane %v386, 4
      %v388 = vrot.slane %v372, 5
      %v389 = vsel %vm381, %v387, %v388
      %v390 = vrot.slane %v281, 5
      %v391 = vrot.slane %v390, 4
      %v392 = vrot.slane %v373, 5
      %v393 = vsel %vm381, %v391, %v392
      %v394 = vrot.slane %v282, 5
      %v395 = vrot.slane %v394, 4
      %v396 = vrot.slane %v374, 5
      %v397 = vsel %vm381, %v395, %v396
      %v398 = vrot.slane %v283, 5
      %v399 = vrot.slane %v398, 4
      %v400 = vrot.slane %v375, 5
      %v401 = vsel %vm381, %v399, %v400
      %v402 = vrot.slane %v284, 5
      %v403 = vrot.slane %v402, 4
      %v404 = vrot.slane %v376, 5
      %v405 = vsel %vm381, %v403, %v404
      %v406 = vrot.slane %v285, 5
      %v407 = vrot.slane %v406, 4
      %v408 = vrot.slane %v377, 5
      %v409 = vsel %vm381, %v407, %v408
      %v410 = vrot.slane %v286, 5
      %v411 = vrot.slane %v410, 4
      %v412 = vrot.slane %v378, 5
      %v413 = vsel %vm381, %v411, %v412
      %v414 = vcombine.low %v385, %v393
      %v415 = vcombine.high %v385, %v393
      %v416 = vcombine.low %v389, %v397
      %v417 = vcombine.high %v389, %v397
      %v418 = vcombine.low %v401, %v409
      %v419 = vcombine.high %v401, %v409
      %v420 = vcombine.low %v405, %v413
      %v421 = vcombine.high %v405, %v413
      %v430 = vpack.c.bf16 %v418, %v414
      %v431 = vpack.c.bf16 %v419, %v415
      %v432 = vpack.c.bf16 %v420, %v416
      %v433 = vpack.c.bf16 %v421, %v417
      %s434 = scalar_lea.vmem %s1, 256
      %v435 = vld [vmem:[%s434] sm:$0xf]
      %v436 = vld [vmem:[%s434 + $0x4] sm:$0xf]
      %v437 = vld [vmem:[%s434 + $0x8] sm:$0xf]
      %v438 = vld [vmem:[%s434 + $0xc] sm:$0xf]
      %v439 = vld [vmem:[%s434 + $0x10] sm:$0xf]
      %v440 = vld [vmem:[%s434 + $0x14] sm:$0xf]
      %v441 = vld [vmem:[%s434 + $0x18] sm:$0xf]
      %v442 = vld [vmem:[%s434 + $0x1c] sm:$0xf]
      %v443 = vld [vmem:[%s434 + $0x20] sm:$0xf]
      %v444 = vld [vmem:[%s434 + $0x24] sm:$0xf]
      %v445 = vld [vmem:[%s434 + $0x28] sm:$0xf]
      %v446 = vld [vmem:[%s434 + $0x2c] sm:$0xf]
      %v447 = vld [vmem:[%s434 + $0x30] sm:$0xf]
      %v448 = vld [vmem:[%s434 + $0x34] sm:$0xf]
      %v449 = vld [vmem:[%s434 + $0x38] sm:$0xf]
      %v450 = vld [vmem:[%s434 + $0x3c] sm:$0xf]
      %v451 = vld [vmem:[%s434 + $0x40] sm:$0xf]
      %v452 = vld [vmem:[%s434 + $0x44] sm:$0xf]
      %v453 = vld [vmem:[%s434 + $0x48] sm:$0xf]
      %v454 = vld [vmem:[%s434 + $0x4c] sm:$0xf]
      %v455 = vld [vmem:[%s434 + $0x50] sm:$0xf]
      %v456 = vld [vmem:[%s434 + $0x54] sm:$0xf]
      %v457 = vld [vmem:[%s434 + $0x58] sm:$0xf]
      %v458 = vld [vmem:[%s434 + $0x5c] sm:$0xf]
      %v459 = vld [vmem:[%s434 + $0x60] sm:$0xf]
      %v460 = vld [vmem:[%s434 + $0x64] sm:$0xf]
      %v461 = vld [vmem:[%s434 + $0x68] sm:$0xf]
      %v462 = vld [vmem:[%s434 + $0x6c] sm:$0xf]
      %v463 = vld [vmem:[%s434 + $0x70] sm:$0xf]
      %v464 = vld [vmem:[%s434 + $0x74] sm:$0xf]
      %v465 = vld [vmem:[%s434 + $0x78] sm:$0xf]
      %v466 = vld [vmem:[%s434 + $0x7c] sm:$0xf]
      %v467 = vld [vmem:[%s434 + $0x80] sm:$0xf]
      %v468 = vld [vmem:[%s434 + $0x84] sm:$0xf]
      %v469 = vld [vmem:[%s434 + $0x88] sm:$0xf]
      %v470 = vld [vmem:[%s434 + $0x8c] sm:$0xf]
      %v471 = vld [vmem:[%s434 + $0x90] sm:$0xf]
      %v472 = vld [vmem:[%s434 + $0x94] sm:$0xf]
      %v473 = vld [vmem:[%s434 + $0x98] sm:$0xf]
      %v474 = vld [vmem:[%s434 + $0x9c] sm:$0xf]
      %v475 = vld [vmem:[%s434 + $0xa0] sm:$0xf]
      %v476 = vld [vmem:[%s434 + $0xa4] sm:$0xf]
      %v477 = vld [vmem:[%s434 + $0xa8] sm:$0xf]
      %v478 = vld [vmem:[%s434 + $0xac] sm:$0xf]
      %v479 = vld [vmem:[%s434 + $0xb0] sm:$0xf]
      %v480 = vld [vmem:[%s434 + $0xb4] sm:$0xf]
      %v481 = vld [vmem:[%s434 + $0xb8] sm:$0xf]
      %v482 = vld [vmem:[%s434 + $0xbc] sm:$0xf]
      %v483 = vld [vmem:[%s434 + $0xc0] sm:$0xf]
      %v484 = vld [vmem:[%s434 + $0xc4] sm:$0xf]
      %v485 = vld [vmem:[%s434 + $0xc8] sm:$0xf]
      %v486 = vld [vmem:[%s434 + $0xcc] sm:$0xf]
      %v487 = vld [vmem:[%s434 + $0xd0] sm:$0xf]
      %v488 = vld [vmem:[%s434 + $0xd4] sm:$0xf]
      %v489 = vld [vmem:[%s434 + $0xd8] sm:$0xf]
      %v490 = vld [vmem:[%s434 + $0xdc] sm:$0xf]
      %v491 = vld [vmem:[%s434 + $0xe0] sm:$0xf]
      %v492 = vld [vmem:[%s434 + $0xe4] sm:$0xf]
      %v493 = vld [vmem:[%s434 + $0xe8] sm:$0xf]
      %v494 = vld [vmem:[%s434 + $0xec] sm:$0xf]
      %v495 = vld [vmem:[%s434 + $0xf0] sm:$0xf]
      %v496 = vld [vmem:[%s434 + $0xf4] sm:$0xf]
      %v497 = vld [vmem:[%s434 + $0xf8] sm:$0xf]
      %v498 = vld [vmem:[%s434 + $0xfc] sm:$0xf]
      %v563 = vunpack.c.l.b16 %v435
      %v564 = vunpack.c.l.b16 %v436
      %v565 = vunpack.c.l.b16 %v437
      %v566 = vunpack.c.l.b16 %v438
      %v567 = vunpack.c.l.b16 %v439
      %v568 = vunpack.c.l.b16 %v440
      %v569 = vunpack.c.l.b16 %v441
      %v570 = vunpack.c.l.b16 %v442
      %v571 = vunpack.c.l.b16 %v443
      %v572 = vunpack.c.l.b16 %v444
      %v573 = vunpack.c.l.b16 %v445
      %v574 = vunpack.c.l.b16 %v446
      %v575 = vunpack.c.l.b16 %v447
      %v576 = vunpack.c.l.b16 %v448
      %v577 = vunpack.c.l.b16 %v449
      %v578 = vunpack.c.l.b16 %v450
      %v579 = vunpack.c.l.b16 %v451
      %v580 = vunpack.c.l.b16 %v452
      %v581 = vunpack.c.l.b16 %v453
      %v582 = vunpack.c.l.b16 %v454
      %v583 = vunpack.c.l.b16 %v455
      %v584 = vunpack.c.l.b16 %v456
      %v585 = vunpack.c.l.b16 %v457
      %v586 = vunpack.c.l.b16 %v458
      %v587 = vunpack.c.l.b16 %v459
      %v588 = vunpack.c.l.b16 %v460
      %v589 = vunpack.c.l.b16 %v461
      %v590 = vunpack.c.l.b16 %v462
      %v591 = vunpack.c.l.b16 %v463
      %v592 = vunpack.c.l.b16 %v464
      %v593 = vunpack.c.l.b16 %v465
      %v594 = vunpack.c.l.b16 %v466
      %v595 = vunpack.c.l.b16 %v467
      %v596 = vunpack.c.l.b16 %v468
      %v597 = vunpack.c.l.b16 %v469
      %v598 = vunpack.c.l.b16 %v470
      %v599 = vunpack.c.l.b16 %v471
      %v600 = vunpack.c.l.b16 %v472
      %v601 = vunpack.c.l.b16 %v473
      %v602 = vunpack.c.l.b16 %v474
      %v603 = vunpack.c.l.b16 %v475
      %v604 = vunpack.c.l.b16 %v476
      %v605 = vunpack.c.l.b16 %v477
      %v606 = vunpack.c.l.b16 %v478
      %v607 = vunpack.c.l.b16 %v479
      %v608 = vunpack.c.l.b16 %v480
      %v609 = vunpack.c.l.b16 %v481
      %v610 = vunpack.c.l.b16 %v482
      %v611 = vunpack.c.l.b16 %v483
      %v612 = vunpack.c.l.b16 %v484
      %v613 = vunpack.c.l.b16 %v485
      %v614 = vunpack.c.l.b16 %v486
      %v615 = vunpack.c.l.b16 %v487
      %v616 = vunpack.c.l.b16 %v488
      %v617 = vunpack.c.l.b16 %v489
      %v618 = vunpack.c.l.b16 %v490
      %v619 = vunpack.c.l.b16 %v491
      %v620 = vunpack.c.l.b16 %v492
      %v621 = vunpack.c.l.b16 %v493
      %v622 = vunpack.c.l.b16 %v494
      %v623 = vunpack.c.l.b16 %v495
      %v624 = vunpack.c.l.b16 %v496
      %v625 = vunpack.c.l.b16 %v497
      %v626 = vunpack.c.l.b16 %v498
      %v627 = vpack.c.b16 %v564, %v563
      %v628 = vpack.c.b16 %v566, %v565
      %v629 = vpack.c.b16 %v568, %v567
      %v630 = vpack.c.b16 %v570, %v569
      %v631 = vpack.c.b16 %v572, %v571
      %v632 = vpack.c.b16 %v574, %v573
      %v633 = vpack.c.b16 %v576, %v575
      %v634 = vpack.c.b16 %v578, %v577
      %v635 = vpack.c.b16 %v580, %v579
      %v636 = vpack.c.b16 %v582, %v581
      %v637 = vpack.c.b16 %v584, %v583
      %v638 = vpack.c.b16 %v586, %v585
      %v639 = vpack.c.b16 %v588, %v587
      %v640 = vpack.c.b16 %v590, %v589
      %v641 = vpack.c.b16 %v592, %v591
      %v642 = vpack.c.b16 %v594, %v593
      %v643 = vpack.c.b16 %v596, %v595
      %v644 = vpack.c.b16 %v598, %v597
      %v645 = vpack.c.b16 %v600, %v599
      %v646 = vpack.c.b16 %v602, %v601
      %v647 = vpack.c.b16 %v604, %v603
      %v648 = vpack.c.b16 %v606, %v605
      %v649 = vpack.c.b16 %v608, %v607
      %v650 = vpack.c.b16 %v610, %v609
      %v651 = vpack.c.b16 %v612, %v611
      %v652 = vpack.c.b16 %v614, %v613
      %v653 = vpack.c.b16 %v616, %v615
      %v654 = vpack.c.b16 %v618, %v617
      %v655 = vpack.c.b16 %v620, %v619
      %v656 = vpack.c.b16 %v622, %v621
      %v657 = vpack.c.b16 %v624, %v623
      %v658 = vpack.c.b16 %v626, %v625
      %691 = vmatprep.subr.bf16.mxu0 0
      %692 = vmatpush1.bf16.msra.mxu0 %v634
      %693 = vmatprep.subr.bf16.mxu0 0
      %694 = vmatpush1.bf16.msra.mxu0 %v633
      %695 = vmatprep.subr.bf16.mxu0 0
      %696 = vmatpush1.bf16.msra.mxu0 %v632
      %697 = vmatprep.subr.bf16.mxu0 0
      %698 = vmatpush1.bf16.msra.mxu0 %v631
      %699 = vmatprep.subr.bf16.mxu0 0
      %700 = vmatpush1.bf16.msra.mxu0 %v630
      %701 = vmatprep.subr.bf16.mxu0 0
      %702 = vmatpush1.bf16.msra.mxu0 %v629
      %703 = vmatprep.subr.bf16.mxu0 0
      %704 = vmatpush1.bf16.msra.mxu0 %v628
      %705 = vmatprep.subr.bf16.mxu0 0
      %706 = vmatpush1.bf16.msra.mxu0 %v627
      %707 = vmatprep.subr.bf16.mxu0 0
      %708 = vmatpush2.bf16.msra.mxu0 %v642
      %709 = vmatprep.subr.bf16.mxu0 0
      %710 = vmatpush2.bf16.msra.mxu0 %v641
      %711 = vmatprep.subr.bf16.mxu0 0
      %712 = vmatpush2.bf16.msra.mxu0 %v640
      %713 = vmatprep.subr.bf16.mxu0 0
      %714 = vmatpush2.bf16.msra.mxu0 %v639
      %715 = vmatprep.subr.bf16.mxu0 0
      %716 = vmatpush2.bf16.msra.mxu0 %v638
      %717 = vmatprep.subr.bf16.mxu0 0
      %718 = vmatpush2.bf16.msra.mxu0 %v637
      %719 = vmatprep.subr.bf16.mxu0 0
      %720 = vmatpush2.bf16.msra.mxu0 %v636
      %721 = vmatprep.subr.bf16.mxu0 0
      %722 = vmatpush2.bf16.msra.mxu0 %v635
      %723 = vmatprep.mubr.bf16.mxu0 %v431
      %724 = vmatmul.mubr.bf16.gmra.mxu0 %v430
      %v725 = vpop.f32.mrf.mxu0
      %v726 = vadd.f32 0.0, %v725
      %v727 = vpop.f32.mrf.mxu0
      %v728 = vpop.f32.mrf.mxu0
      %v729 = vadd.f32 0.0, %v728
      %v730 = vpop.f32.mrf.mxu0
      %731 = vdwg.mxu0
      %732 = vmatprep.subr.bf16.mxu0 0
      %733 = vmatpush1.bf16.msra.mxu0 %v650
      %734 = vmatprep.subr.bf16.mxu0 0
      %735 = vmatpush1.bf16.msra.mxu0 %v649
      %736 = vmatprep.subr.bf16.mxu0 0
      %737 = vmatpush1.bf16.msra.mxu0 %v648
      %738 = vmatprep.subr.bf16.mxu0 0
      %739 = vmatpush1.bf16.msra.mxu0 %v647
      %740 = vmatprep.subr.bf16.mxu0 0
      %741 = vmatpush1.bf16.msra.mxu0 %v646
      %742 = vmatprep.subr.bf16.mxu0 0
      %743 = vmatpush1.bf16.msra.mxu0 %v645
      %744 = vmatprep.subr.bf16.mxu0 0
      %745 = vmatpush1.bf16.msra.mxu0 %v644
      %746 = vmatprep.subr.bf16.mxu0 0
      %747 = vmatpush1.bf16.msra.mxu0 %v643
      %748 = vmatprep.subr.bf16.mxu0 0
      %749 = vmatpush2.bf16.msra.mxu0 %v658
      %750 = vmatprep.subr.bf16.mxu0 0
      %751 = vmatpush2.bf16.msra.mxu0 %v657
      %752 = vmatprep.subr.bf16.mxu0 0
      %753 = vmatpush2.bf16.msra.mxu0 %v656
      %754 = vmatprep.subr.bf16.mxu0 0
      %755 = vmatpush2.bf16.msra.mxu0 %v655
      %756 = vmatprep.subr.bf16.mxu0 0
      %757 = vmatpush2.bf16.msra.mxu0 %v654
      %758 = vmatprep.subr.bf16.mxu0 0
      %759 = vmatpush2.bf16.msra.mxu0 %v653
      %760 = vmatprep.subr.bf16.mxu0 0
      %761 = vmatpush2.bf16.msra.mxu0 %v652
      %762 = vmatprep.subr.bf16.mxu0 0
      %763 = vmatpush2.bf16.msra.mxu0 %v651
      %764 = vmatprep.mubr.bf16.mxu0 %v433
      %765 = vmatmul.mubr.bf16.gmra.mxu0 %v432
      %v766 = vpop.f32.mrf.mxu0
      %v767 = vadd.f32 %v726, %v766
      %v768 = vpop.f32.mrf.mxu0
      %v769 = vpop.f32.mrf.mxu0
      %v770 = vadd.f32 %v729, %v769
      %v771 = vpop.f32.mrf.mxu0
      %772 = vdwg.mxu0
      %v837 = vunpack.c.l.b16 %v307
      %v838 = vunpack.c.l.b16 %v308
      %v839 = vunpack.c.l.b16 %v309
      %v840 = vunpack.c.l.b16 %v310
      %v841 = vunpack.c.l.b16 %v311
      %v842 = vunpack.c.l.b16 %v312
      %v843 = vunpack.c.l.b16 %v313
      %v844 = vunpack.c.l.b16 %v314
      %v845 = vunpack.c.l.b16 %v315
      %v846 = vunpack.c.l.b16 %v316
      %v847 = vunpack.c.l.b16 %v317
      %v848 = vunpack.c.l.b16 %v318
      %v849 = vunpack.c.l.b16 %v319
      %v850 = vunpack.c.l.b16 %v320
      %v851 = vunpack.c.l.b16 %v321
      %v852 = vunpack.c.l.b16 %v322
      %v853 = vunpack.c.l.b16 %v323
      %v854 = vunpack.c.l.b16 %v324
      %v855 = vunpack.c.l.b16 %v325
      %v856 = vunpack.c.l.b16 %v326
      %v857 = vunpack.c.l.b16 %v327
      %v858 = vunpack.c.l.b16 %v328
      %v859 = vunpack.c.l.b16 %v329
      %v860 = vunpack.c.l.b16 %v330
      %v861 = vunpack.c.l.b16 %v331
      %v862 = vunpack.c.l.b16 %v332
      %v863 = vunpack.c.l.b16 %v333
      %v864 = vunpack.c.l.b16 %v334
      %v865 = vunpack.c.l.b16 %v335
      %v866 = vunpack.c.l.b16 %v336
      %v867 = vunpack.c.l.b16 %v337
      %v868 = vunpack.c.l.b16 %v338
      %v869 = vunpack.c.l.b16 %v339
      %v870 = vunpack.c.l.b16 %v340
      %v871 = vunpack.c.l.b16 %v341
      %v872 = vunpack.c.l.b16 %v342
      %v873 = vunpack.c.l.b16 %v343
      %v874 = vunpack.c.l.b16 %v344
      %v875 = vunpack.c.l.b16 %v345
      %v876 = vunpack.c.l.b16 %v346
      %v877 = vunpack.c.l.b16 %v347
      %v878 = vunpack.c.l.b16 %v348
      %v879 = vunpack.c.l.b16 %v349
      %v880 = vunpack.c.l.b16 %v350
      %v881 = vunpack.c.l.b16 %v351
      %v882 = vunpack.c.l.b16 %v352
      %v883 = vunpack.c.l.b16 %v353
      %v884 = vunpack.c.l.b16 %v354
      %v885 = vunpack.c.l.b16 %v355
      %v886 = vunpack.c.l.b16 %v356
      %v887 = vunpack.c.l.b16 %v357
      %v888 = vunpack.c.l.b16 %v358
      %v889 = vunpack.c.l.b16 %v359
      %v890 = vunpack.c.l.b16 %v360
      %v891 = vunpack.c.l.b16 %v361
      %v892 = vunpack.c.l.b16 %v362
      %v893 = vunpack.c.l.b16 %v363
      %v894 = vunpack.c.l.b16 %v364
      %v895 = vunpack.c.l.b16 %v365
      %v896 = vunpack.c.l.b16 %v366
      %v897 = vunpack.c.l.b16 %v367
      %v898 = vunpack.c.l.b16 %v368
      %v899 = vunpack.c.l.b16 %v369
      %v900 = vunpack.c.l.b16 %v370
      %v901 = vpack.c.b16 %v838, %v837
      %v902 = vpack.c.b16 %v840, %v839
      %v903 = vpack.c.b16 %v842, %v841
      %v904 = vpack.c.b16 %v844, %v843
      %v905 = vpack.c.b16 %v846, %v845
      %v906 = vpack.c.b16 %v848, %v847
      %v907 = vpack.c.b16 %v850, %v849
      %v908 = vpack.c.b16 %v852, %v851
      %v909 = vpack.c.b16 %v854, %v853
      %v910 = vpack.c.b16 %v856, %v855
      %v911 = vpack.c.b16 %v858, %v857
      %v912 = vpack.c.b16 %v860, %v859
      %v913 = vpack.c.b16 %v862, %v861
      %v914 = vpack.c.b16 %v864, %v863
      %v915 = vpack.c.b16 %v866, %v865
      %v916 = vpack.c.b16 %v868, %v867
      %v917 = vpack.c.b16 %v870, %v869
      %v918 = vpack.c.b16 %v872, %v871
      %v919 = vpack.c.b16 %v874, %v873
      %v920 = vpack.c.b16 %v876, %v875
      %v921 = vpack.c.b16 %v878, %v877
      %v922 = vpack.c.b16 %v880, %v879
      %v923 = vpack.c.b16 %v882, %v881
      %v924 = vpack.c.b16 %v884, %v883
      %v925 = vpack.c.b16 %v886, %v885
      %v926 = vpack.c.b16 %v888, %v887
      %v927 = vpack.c.b16 %v890, %v889
      %v928 = vpack.c.b16 %v892, %v891
      %v929 = vpack.c.b16 %v894, %v893
      %v930 = vpack.c.b16 %v896, %v895
      %v931 = vpack.c.b16 %v898, %v897
      %v932 = vpack.c.b16 %v900, %v899
      %965 = vmatprep.subr.bf16.mxu0 0
      %966 = vmatpush1.bf16.msra.mxu0 %v908
      %967 = vmatprep.subr.bf16.mxu0 0
      %968 = vmatpush1.bf16.msra.mxu0 %v907
      %969 = vmatprep.subr.bf16.mxu0 0
      %970 = vmatpush1.bf16.msra.mxu0 %v906
      %971 = vmatprep.subr.bf16.mxu0 0
      %972 = vmatpush1.bf16.msra.mxu0 %v905
      %973 = vmatprep.subr.bf16.mxu0 0
      %974 = vmatpush1.bf16.msra.mxu0 %v904
      %975 = vmatprep.subr.bf16.mxu0 0
      %976 = vmatpush1.bf16.msra.mxu0 %v903
      %977 = vmatprep.subr.bf16.mxu0 0
      %978 = vmatpush1.bf16.msra.mxu0 %v902
      %979 = vmatprep.subr.bf16.mxu0 0
      %980 = vmatpush1.bf16.msra.mxu0 %v901
      %981 = vmatprep.subr.bf16.mxu0 0
      %982 = vmatpush2.bf16.msra.mxu0 %v916
      %983 = vmatprep.subr.bf16.mxu0 0
      %984 = vmatpush2.bf16.msra.mxu0 %v915
      %985 = vmatprep.subr.bf16.mxu0 0
      %986 = vmatpush2.bf16.msra.mxu0 %v914
      %987 = vmatprep.subr.bf16.mxu0 0
      %988 = vmatpush2.bf16.msra.mxu0 %v913
      %989 = vmatprep.subr.bf16.mxu0 0
      %990 = vmatpush2.bf16.msra.mxu0 %v912
      %991 = vmatprep.subr.bf16.mxu0 0
      %992 = vmatpush2.bf16.msra.mxu0 %v911
      %993 = vmatprep.subr.bf16.mxu0 0
      %994 = vmatpush2.bf16.msra.mxu0 %v910
      %995 = vmatprep.subr.bf16.mxu0 0
      %996 = vmatpush2.bf16.msra.mxu0 %v909
      %997 = vmatprep.mubr.bf16.mxu0 %v304
      %998 = vmatmul.mubr.bf16.gmra.mxu0 %v303
      %v999 = vpop.f32.mrf.mxu0
      %v1000 = vadd.f32 %v767, %v999
      %v1001 = vpop.f32.mrf.mxu0
      %v1002 = vpop.f32.mrf.mxu0
      %v1003 = vadd.f32 %v770, %v1002
      %v1004 = vpop.f32.mrf.mxu0
      %1005 = vdwg.mxu0
      %1006 = vmatprep.subr.bf16.mxu0 0
      %1007 = vmatpush1.bf16.msra.mxu0 %v924
      %1008 = vmatprep.subr.bf16.mxu0 0
      %1009 = vmatpush1.bf16.msra.mxu0 %v923
      %1010 = vmatprep.subr.bf16.mxu0 0
      %1011 = vmatpush1.bf16.msra.mxu0 %v922
      %1012 = vmatprep.subr.bf16.mxu0 0
      %1013 = vmatpush1.bf16.msra.mxu0 %v921
      %1014 = vmatprep.subr.bf16.mxu0 0
      %1015 = vmatpush1.bf16.msra.mxu0 %v920
      %1016 = vmatprep.subr.bf16.mxu0 0
      %1017 = vmatpush1.bf16.msra.mxu0 %v919
      %1018 = vmatprep.subr.bf16.mxu0 0
      %1019 = vmatpush1.bf16.msra.mxu0 %v918
      %1020 = vmatprep.subr.bf16.mxu0 0
      %1021 = vmatpush1.bf16.msra.mxu0 %v917
      %1022 = vmatprep.subr.bf16.mxu0 0
      %1023 = vmatpush2.bf16.msra.mxu0 %v932
      %1024 = vmatprep.subr.bf16.mxu0 0
      %1025 = vmatpush2.bf16.msra.mxu0 %v931
      %1026 = vmatprep.subr.bf16.mxu0 0
      %1027 = vmatpush2.bf16.msra.mxu0 %v930
      %1028 = vmatprep.subr.bf16.mxu0 0
      %1029 = vmatpush2.bf16.msra.mxu0 %v929
      %1030 = vmatprep.subr.bf16.mxu0 0
      %1031 = vmatpush2.bf16.msra.mxu0 %v928
      %1032 = vmatprep.subr.bf16.mxu0 0
      %1033 = vmatpush2.bf16.msra.mxu0 %v927
      %1034 = vmatprep.subr.bf16.mxu0 0
      %1035 = vmatpush2.bf16.msra.mxu0 %v926
      %1036 = vmatprep.subr.bf16.mxu0 0
      %1037 = vmatpush2.bf16.msra.mxu0 %v925
      %1038 = vmatprep.mubr.bf16.mxu0 %v306
      %1039 = vmatmul.mubr.bf16.gmra.mxu0 %v305
      %v1040 = vpop.f32.mrf.mxu0
      %v1041 = vadd.f32 %v1000, %v1040
      %v1042 = vpop.f32.mrf.mxu0
      %v1043 = vpop.f32.mrf.mxu0
      %v1044 = vadd.f32 %v1003, %v1043
      %v1045 = vpop.f32.mrf.mxu0
      %1046 = vdwg.mxu0
      %v1051 = vcombine.low %v259, %v260
      %v1052 = vcombine.low %v261, %v262
      %v1053 = vcombine.low %v281, %v283
      %v1054 = vcombine.high %v281, %v283
      %v1055 = vcombine.low %v282, %v284
      %v1056 = vcombine.high %v282, %v284
      %v1057 = vcombine.low %v285, %v1051
      %v1058 = vcombine.high %v285, %v1051
      %v1059 = vcombine.low %v286, %v1052
      %v1060 = vcombine.high %v286, %v1052
      %v1069 = vpack.c.bf16 %v1057, %v1053
      %v1070 = vpack.c.bf16 %v1058, %v1054
      %v1071 = vpack.c.bf16 %v1059, %v1055
      %v1072 = vpack.c.bf16 %v1060, %v1056
      %s1073 = scalar_lea.vmem %s1, 512
      %v1074 = vld [vmem:[%s1073] sm:$0xf]
      %v1075 = vld [vmem:[%s1073 + $0x4] sm:$0xf]
      %v1076 = vld [vmem:[%s1073 + $0x8] sm:$0xf]
      %v1077 = vld [vmem:[%s1073 + $0xc] sm:$0xf]
      %v1078 = vld [vmem:[%s1073 + $0x10] sm:$0xf]
      %v1079 = vld [vmem:[%s1073 + $0x14] sm:$0xf]
      %v1080 = vld [vmem:[%s1073 + $0x18] sm:$0xf]
      %v1081 = vld [vmem:[%s1073 + $0x1c] sm:$0xf]
      %v1082 = vld [vmem:[%s1073 + $0x20] sm:$0xf]
      %v1083 = vld [vmem:[%s1073 + $0x24] sm:$0xf]
      %v1084 = vld [vmem:[%s1073 + $0x28] sm:$0xf]
      %v1085 = vld [vmem:[%s1073 + $0x2c] sm:$0xf]
      %v1086 = vld [vmem:[%s1073 + $0x30] sm:$0xf]
      %v1087 = vld [vmem:[%s1073 + $0x34] sm:$0xf]
      %v1088 = vld [vmem:[%s1073 + $0x38] sm:$0xf]
      %v1089 = vld [vmem:[%s1073 + $0x3c] sm:$0xf]
      %v1090 = vld [vmem:[%s1073 + $0x40] sm:$0xf]
      %v1091 = vld [vmem:[%s1073 + $0x44] sm:$0xf]
      %v1092 = vld [vmem:[%s1073 + $0x48] sm:$0xf]
      %v1093 = vld [vmem:[%s1073 + $0x4c] sm:$0xf]
      %v1094 = vld [vmem:[%s1073 + $0x50] sm:$0xf]
      %v1095 = vld [vmem:[%s1073 + $0x54] sm:$0xf]
      %v1096 = vld [vmem:[%s1073 + $0x58] sm:$0xf]
      %v1097 = vld [vmem:[%s1073 + $0x5c] sm:$0xf]
      %v1098 = vld [vmem:[%s1073 + $0x60] sm:$0xf]
      %v1099 = vld [vmem:[%s1073 + $0x64] sm:$0xf]
      %v1100 = vld [vmem:[%s1073 + $0x68] sm:$0xf]
      %v1101 = vld [vmem:[%s1073 + $0x6c] sm:$0xf]
      %v1102 = vld [vmem:[%s1073 + $0x70] sm:$0xf]
      %v1103 = vld [vmem:[%s1073 + $0x74] sm:$0xf]
      %v1104 = vld [vmem:[%s1073 + $0x78] sm:$0xf]
      %v1105 = vld [vmem:[%s1073 + $0x7c] sm:$0xf]
      %v1106 = vld [vmem:[%s1073 + $0x80] sm:$0xf]
      %v1107 = vld [vmem:[%s1073 + $0x84] sm:$0xf]
      %v1108 = vld [vmem:[%s1073 + $0x88] sm:$0xf]
      %v1109 = vld [vmem:[%s1073 + $0x8c] sm:$0xf]
      %v1110 = vld [vmem:[%s1073 + $0x90] sm:$0xf]
      %v1111 = vld [vmem:[%s1073 + $0x94] sm:$0xf]
      %v1112 = vld [vmem:[%s1073 + $0x98] sm:$0xf]
      %v1113 = vld [vmem:[%s1073 + $0x9c] sm:$0xf]
      %v1114 = vld [vmem:[%s1073 + $0xa0] sm:$0xf]
      %v1115 = vld [vmem:[%s1073 + $0xa4] sm:$0xf]
      %v1116 = vld [vmem:[%s1073 + $0xa8] sm:$0xf]
      %v1117 = vld [vmem:[%s1073 + $0xac] sm:$0xf]
      %v1118 = vld [vmem:[%s1073 + $0xb0] sm:$0xf]
      %v1119 = vld [vmem:[%s1073 + $0xb4] sm:$0xf]
      %v1120 = vld [vmem:[%s1073 + $0xb8] sm:$0xf]
      %v1121 = vld [vmem:[%s1073 + $0xbc] sm:$0xf]
      %v1122 = vld [vmem:[%s1073 + $0xc0] sm:$0xf]
      %v1123 = vld [vmem:[%s1073 + $0xc4] sm:$0xf]
      %v1124 = vld [vmem:[%s1073 + $0xc8] sm:$0xf]
      %v1125 = vld [vmem:[%s1073 + $0xcc] sm:$0xf]
      %v1126 = vld [vmem:[%s1073 + $0xd0] sm:$0xf]
      %v1127 = vld [vmem:[%s1073 + $0xd4] sm:$0xf]
      %v1128 = vld [vmem:[%s1073 + $0xd8] sm:$0xf]
      %v1129 = vld [vmem:[%s1073 + $0xdc] sm:$0xf]
      %v1130 = vld [vmem:[%s1073 + $0xe0] sm:$0xf]
      %v1131 = vld [vmem:[%s1073 + $0xe4] sm:$0xf]
      %v1132 = vld [vmem:[%s1073 + $0xe8] sm:$0xf]
      %v1133 = vld [vmem:[%s1073 + $0xec] sm:$0xf]
      %v1134 = vld [vmem:[%s1073 + $0xf0] sm:$0xf]
      %v1135 = vld [vmem:[%s1073 + $0xf4] sm:$0xf]
      %v1136 = vld [vmem:[%s1073 + $0xf8] sm:$0xf]
      %v1137 = vld [vmem:[%s1073 + $0xfc] sm:$0xf]
      %v1202 = vunpack.c.l.b16 %v1074
      %v1203 = vunpack.c.l.b16 %v1075
      %v1204 = vunpack.c.l.b16 %v1076
      %v1205 = vunpack.c.l.b16 %v1077
      %v1206 = vunpack.c.l.b16 %v1078
      %v1207 = vunpack.c.l.b16 %v1079
      %v1208 = vunpack.c.l.b16 %v1080
      %v1209 = vunpack.c.l.b16 %v1081
      %v1210 = vunpack.c.l.b16 %v1082
      %v1211 = vunpack.c.l.b16 %v1083
      %v1212 = vunpack.c.l.b16 %v1084
      %v1213 = vunpack.c.l.b16 %v1085
      %v1214 = vunpack.c.l.b16 %v1086
      %v1215 = vunpack.c.l.b16 %v1087
      %v1216 = vunpack.c.l.b16 %v1088
      %v1217 = vunpack.c.l.b16 %v1089
      %v1218 = vunpack.c.l.b16 %v1090
      %v1219 = vunpack.c.l.b16 %v1091
      %v1220 = vunpack.c.l.b16 %v1092
      %v1221 = vunpack.c.l.b16 %v1093
      %v1222 = vunpack.c.l.b16 %v1094
      %v1223 = vunpack.c.l.b16 %v1095
      %v1224 = vunpack.c.l.b16 %v1096
      %v1225 = vunpack.c.l.b16 %v1097
      %v1226 = vunpack.c.l.b16 %v1098
      %v1227 = vunpack.c.l.b16 %v1099
      %v1228 = vunpack.c.l.b16 %v1100
      %v1229 = vunpack.c.l.b16 %v1101
      %v1230 = vunpack.c.l.b16 %v1102
      %v1231 = vunpack.c.l.b16 %v1103
      %v1232 = vunpack.c.l.b16 %v1104
      %v1233 = vunpack.c.l.b16 %v1105
      %v1234 = vunpack.c.l.b16 %v1106
      %v1235 = vunpack.c.l.b16 %v1107
      %v1236 = vunpack.c.l.b16 %v1108
      %v1237 = vunpack.c.l.b16 %v1109
      %v1238 = vunpack.c.l.b16 %v1110
      %v1239 = vunpack.c.l.b16 %v1111
      %v1240 = vunpack.c.l.b16 %v1112
      %v1241 = vunpack.c.l.b16 %v1113
      %v1242 = vunpack.c.l.b16 %v1114
      %v1243 = vunpack.c.l.b16 %v1115
      %v1244 = vunpack.c.l.b16 %v1116
      %v1245 = vunpack.c.l.b16 %v1117
      %v1246 = vunpack.c.l.b16 %v1118
      %v1247 = vunpack.c.l.b16 %v1119
      %v1248 = vunpack.c.l.b16 %v1120
      %v1249 = vunpack.c.l.b16 %v1121
      %v1250 = vunpack.c.l.b16 %v1122
      %v1251 = vunpack.c.l.b16 %v1123
      %v1252 = vunpack.c.l.b16 %v1124
      %v1253 = vunpack.c.l.b16 %v1125
      %v1254 = vunpack.c.l.b16 %v1126
      %v1255 = vunpack.c.l.b16 %v1127
      %v1256 = vunpack.c.l.b16 %v1128
      %v1257 = vunpack.c.l.b16 %v1129
      %v1258 = vunpack.c.l.b16 %v1130
      %v1259 = vunpack.c.l.b16 %v1131
      %v1260 = vunpack.c.l.b16 %v1132
      %v1261 = vunpack.c.l.b16 %v1133
      %v1262 = vunpack.c.l.b16 %v1134
      %v1263 = vunpack.c.l.b16 %v1135
      %v1264 = vunpack.c.l.b16 %v1136
      %v1265 = vunpack.c.l.b16 %v1137
      %v1266 = vpack.c.b16 %v1203, %v1202
      %v1267 = vpack.c.b16 %v1205, %v1204
      %v1268 = vpack.c.b16 %v1207, %v1206
      %v1269 = vpack.c.b16 %v1209, %v1208
      %v1270 = vpack.c.b16 %v1211, %v1210
      %v1271 = vpack.c.b16 %v1213, %v1212
      %v1272 = vpack.c.b16 %v1215, %v1214
      %v1273 = vpack.c.b16 %v1217, %v1216
      %v1274 = vpack.c.b16 %v1219, %v1218
      %v1275 = vpack.c.b16 %v1221, %v1220
      %v1276 = vpack.c.b16 %v1223, %v1222
      %v1277 = vpack.c.b16 %v1225, %v1224
      %v1278 = vpack.c.b16 %v1227, %v1226
      %v1279 = vpack.c.b16 %v1229, %v1228
      %v1280 = vpack.c.b16 %v1231, %v1230
      %v1281 = vpack.c.b16 %v1233, %v1232
      %v1282 = vpack.c.b16 %v1235, %v1234
      %v1283 = vpack.c.b16 %v1237, %v1236
      %v1284 = vpack.c.b16 %v1239, %v1238
      %v1285 = vpack.c.b16 %v1241, %v1240
      %v1286 = vpack.c.b16 %v1243, %v1242
      %v1287 = vpack.c.b16 %v1245, %v1244
      %v1288 = vpack.c.b16 %v1247, %v1246
      %v1289 = vpack.c.b16 %v1249, %v1248
      %v1290 = vpack.c.b16 %v1251, %v1250
      %v1291 = vpack.c.b16 %v1253, %v1252
      %v1292 = vpack.c.b16 %v1255, %v1254
      %v1293 = vpack.c.b16 %v1257, %v1256
      %v1294 = vpack.c.b16 %v1259, %v1258
      %v1295 = vpack.c.b16 %v1261, %v1260
      %v1296 = vpack.c.b16 %v1263, %v1262
      %v1297 = vpack.c.b16 %v1265, %v1264
      %1330 = vmatprep.subr.bf16.mxu0 0
      %1331 = vmatpush1.bf16.msra.mxu0 %v1273
      %1332 = vmatprep.subr.bf16.mxu0 0
      %1333 = vmatpush1.bf16.msra.mxu0 %v1272
      %1334 = vmatprep.subr.bf16.mxu0 0
      %1335 = vmatpush1.bf16.msra.mxu0 %v1271
      %1336 = vmatprep.subr.bf16.mxu0 0
      %1337 = vmatpush1.bf16.msra.mxu0 %v1270
      %1338 = vmatprep.subr.bf16.mxu0 0
      %1339 = vmatpush1.bf16.msra.mxu0 %v1269
      %1340 = vmatprep.subr.bf16.mxu0 0
      %1341 = vmatpush1.bf16.msra.mxu0 %v1268
      %1342 = vmatprep.subr.bf16.mxu0 0
      %1343 = vmatpush1.bf16.msra.mxu0 %v1267
      %1344 = vmatprep.subr.bf16.mxu0 0
      %1345 = vmatpush1.bf16.msra.mxu0 %v1266
      %1346 = vmatprep.subr.bf16.mxu0 0
      %1347 = vmatpush2.bf16.msra.mxu0 %v1281
      %1348 = vmatprep.subr.bf16.mxu0 0
      %1349 = vmatpush2.bf16.msra.mxu0 %v1280
      %1350 = vmatprep.subr.bf16.mxu0 0
      %1351 = vmatpush2.bf16.msra.mxu0 %v1279
      %1352 = vmatprep.subr.bf16.mxu0 0
      %1353 = vmatpush2.bf16.msra.mxu0 %v1278
      %1354 = vmatprep.subr.bf16.mxu0 0
      %1355 = vmatpush2.bf16.msra.mxu0 %v1277
      %1356 = vmatprep.subr.bf16.mxu0 0
      %1357 = vmatpush2.bf16.msra.mxu0 %v1276
      %1358 = vmatprep.subr.bf16.mxu0 0
      %1359 = vmatpush2.bf16.msra.mxu0 %v1275
      %1360 = vmatprep.subr.bf16.mxu0 0
      %1361 = vmatpush2.bf16.msra.mxu0 %v1274
      %1362 = vmatprep.mubr.bf16.mxu0 %v1070
      %1363 = vmatmul.mubr.bf16.gmra.mxu0 %v1069
      %v1364 = vpop.f32.mrf.mxu0
      %v1365 = vadd.f32 0.0, %v1364
      %v1366 = vpop.f32.mrf.mxu0
      %v1367 = vpop.f32.mrf.mxu0
      %v1368 = vadd.f32 0.0, %v1367
      %v1369 = vpop.f32.mrf.mxu0
      %1370 = vdwg.mxu0
      %1371 = vmatprep.subr.bf16.mxu0 0
      %1372 = vmatpush1.bf16.msra.mxu0 %v1289
      %1373 = vmatprep.subr.bf16.mxu0 0
      %1374 = vmatpush1.bf16.msra.mxu0 %v1288
      %1375 = vmatprep.subr.bf16.mxu0 0
      %1376 = vmatpush1.bf16.msra.mxu0 %v1287
      %1377 = vmatprep.subr.bf16.mxu0 0
      %1378 = vmatpush1.bf16.msra.mxu0 %v1286
      %1379 = vmatprep.subr.bf16.mxu0 0
      %1380 = vmatpush1.bf16.msra.mxu0 %v1285
      %1381 = vmatprep.subr.bf16.mxu0 0
      %1382 = vmatpush1.bf16.msra.mxu0 %v1284
      %1383 = vmatprep.subr.bf16.mxu0 0
      %1384 = vmatpush1.bf16.msra.mxu0 %v1283
      %1385 = vmatprep.subr.bf16.mxu0 0
      %1386 = vmatpush1.bf16.msra.mxu0 %v1282
      %1387 = vmatprep.subr.bf16.mxu0 0
      %1388 = vmatpush2.bf16.msra.mxu0 %v1297
      %1389 = vmatprep.subr.bf16.mxu0 0
      %1390 = vmatpush2.bf16.msra.mxu0 %v1296
      %1391 = vmatprep.subr.bf16.mxu0 0
      %1392 = vmatpush2.bf16.msra.mxu0 %v1295
      %1393 = vmatprep.subr.bf16.mxu0 0
      %1394 = vmatpush2.bf16.msra.mxu0 %v1294
      %1395 = vmatprep.subr.bf16.mxu0 0
      %1396 = vmatpush2.bf16.msra.mxu0 %v1293
      %1397 = vmatprep.subr.bf16.mxu0 0
      %1398 = vmatpush2.bf16.msra.mxu0 %v1292
      %1399 = vmatprep.subr.bf16.mxu0 0
      %1400 = vmatpush2.bf16.msra.mxu0 %v1291
      %1401 = vmatprep.subr.bf16.mxu0 0
      %1402 = vmatpush2.bf16.msra.mxu0 %v1290
      %1403 = vmatprep.mubr.bf16.mxu0 %v1072
      %1404 = vmatmul.mubr.bf16.gmra.mxu0 %v1071
      %v1405 = vpop.f32.mrf.mxu0
      %v1406 = vadd.f32 %v1365, %v1405
      %v1407 = vpop.f32.mrf.mxu0
      %v1408 = vpop.f32.mrf.mxu0
      %v1409 = vadd.f32 %v1368, %v1408
      %v1410 = vpop.f32.mrf.mxu0
      %1411 = vdwg.mxu0
      %v1412 = vadd.f32 %v1041, %v1406
      %v1413 = vadd.f32 %v1044, %v1409
      %v1414 = vcombine.high %v259, %v260
      %v1415 = vcombine.high %v261, %v262
      %v1416 = vrot.slane %v1051, 5
      %v1417 = vrot.slane %v1416, 4
      %v1418 = vrot.slane %v1414, 5
      %v1419 = vsel %vm381, %v1417, %v1418
      %v1420 = vrot.slane %v1052, 5
      %v1421 = vrot.slane %v1420, 4
      %v1422 = vrot.slane %v1415, 5
      %v1423 = vsel %vm381, %v1421, %v1422
      %v1424 = vcombine.low %v393, %v401
      %v1425 = vcombine.high %v393, %v401
      %v1426 = vcombine.low %v397, %v405
      %v1427 = vcombine.high %v397, %v405
      %v1428 = vcombine.low %v409, %v1419
      %v1429 = vcombine.high %v409, %v1419
      %v1430 = vcombine.low %v413, %v1423
      %v1431 = vcombine.high %v413, %v1423
      %v1440 = vpack.c.bf16 %v1428, %v1424
      %v1441 = vpack.c.bf16 %v1429, %v1425
      %v1442 = vpack.c.bf16 %v1430, %v1426
      %v1443 = vpack.c.bf16 %v1431, %v1427
      %s1444 = scalar_lea.vmem %s1, 768
      %v1445 = vld [vmem:[%s1444] sm:$0xf]
      %v1446 = vld [vmem:[%s1444 + $0x4] sm:$0xf]
      %v1447 = vld [vmem:[%s1444 + $0x8] sm:$0xf]
      %v1448 = vld [vmem:[%s1444 + $0xc] sm:$0xf]
      %v1449 = vld [vmem:[%s1444 + $0x10] sm:$0xf]
      %v1450 = vld [vmem:[%s1444 + $0x14] sm:$0xf]
      %v1451 = vld [vmem:[%s1444 + $0x18] sm:$0xf]
      %v1452 = vld [vmem:[%s1444 + $0x1c] sm:$0xf]
      %v1453 = vld [vmem:[%s1444 + $0x20] sm:$0xf]
      %v1454 = vld [vmem:[%s1444 + $0x24] sm:$0xf]
      %v1455 = vld [vmem:[%s1444 + $0x28] sm:$0xf]
      %v1456 = vld [vmem:[%s1444 + $0x2c] sm:$0xf]
      %v1457 = vld [vmem:[%s1444 + $0x30] sm:$0xf]
      %v1458 = vld [vmem:[%s1444 + $0x34] sm:$0xf]
      %v1459 = vld [vmem:[%s1444 + $0x38] sm:$0xf]
      %v1460 = vld [vmem:[%s1444 + $0x3c] sm:$0xf]
      %v1461 = vld [vmem:[%s1444 + $0x40] sm:$0xf]
      %v1462 = vld [vmem:[%s1444 + $0x44] sm:$0xf]
      %v1463 = vld [vmem:[%s1444 + $0x48] sm:$0xf]
      %v1464 = vld [vmem:[%s1444 + $0x4c] sm:$0xf]
      %v1465 = vld [vmem:[%s1444 + $0x50] sm:$0xf]
      %v1466 = vld [vmem:[%s1444 + $0x54] sm:$0xf]
      %v1467 = vld [vmem:[%s1444 + $0x58] sm:$0xf]
      %v1468 = vld [vmem:[%s1444 + $0x5c] sm:$0xf]
      %v1469 = vld [vmem:[%s1444 + $0x60] sm:$0xf]
      %v1470 = vld [vmem:[%s1444 + $0x64] sm:$0xf]
      %v1471 = vld [vmem:[%s1444 + $0x68] sm:$0xf]
      %v1472 = vld [vmem:[%s1444 + $0x6c] sm:$0xf]
      %v1473 = vld [vmem:[%s1444 + $0x70] sm:$0xf]
      %v1474 = vld [vmem:[%s1444 + $0x74] sm:$0xf]
      %v1475 = vld [vmem:[%s1444 + $0x78] sm:$0xf]
      %v1476 = vld [vmem:[%s1444 + $0x7c] sm:$0xf]
      %v1477 = vld [vmem:[%s1444 + $0x80] sm:$0xf]
      %v1478 = vld [vmem:[%s1444 + $0x84] sm:$0xf]
      %v1479 = vld [vmem:[%s1444 + $0x88] sm:$0xf]
      %v1480 = vld [vmem:[%s1444 + $0x8c] sm:$0xf]
      %v1481 = vld [vmem:[%s1444 + $0x90] sm:$0xf]
      %v1482 = vld [vmem:[%s1444 + $0x94] sm:$0xf]
      %v1483 = vld [vmem:[%s1444 + $0x98] sm:$0xf]
      %v1484 = vld [vmem:[%s1444 + $0x9c] sm:$0xf]
      %v1485 = vld [vmem:[%s1444 + $0xa0] sm:$0xf]
      %v1486 = vld [vmem:[%s1444 + $0xa4] sm:$0xf]
      %v1487 = vld [vmem:[%s1444 + $0xa8] sm:$0xf]
      %v1488 = vld [vmem:[%s1444 + $0xac] sm:$0xf]
      %v1489 = vld [vmem:[%s1444 + $0xb0] sm:$0xf]
      %v1490 = vld [vmem:[%s1444 + $0xb4] sm:$0xf]
      %v1491 = vld [vmem:[%s1444 + $0xb8] sm:$0xf]
      %v1492 = vld [vmem:[%s1444 + $0xbc] sm:$0xf]
      %v1493 = vld [vmem:[%s1444 + $0xc0] sm:$0xf]
      %v1494 = vld [vmem:[%s1444 + $0xc4] sm:$0xf]
      %v1495 = vld [vmem:[%s1444 + $0xc8] sm:$0xf]
      %v1496 = vld [vmem:[%s1444 + $0xcc] sm:$0xf]
      %v1497 = vld [vmem:[%s1444 + $0xd0] sm:$0xf]
      %v1498 = vld [vmem:[%s1444 + $0xd4] sm:$0xf]
      %v1499 = vld [vmem:[%s1444 + $0xd8] sm:$0xf]
      %v1500 = vld [vmem:[%s1444 + $0xdc] sm:$0xf]
      %v1501 = vld [vmem:[%s1444 + $0xe0] sm:$0xf]
      %v1502 = vld [vmem:[%s1444 + $0xe4] sm:$0xf]
      %v1503 = vld [vmem:[%s1444 + $0xe8] sm:$0xf]
      %v1504 = vld [vmem:[%s1444 + $0xec] sm:$0xf]
      %v1505 = vld [vmem:[%s1444 + $0xf0] sm:$0xf]
      %v1506 = vld [vmem:[%s1444 + $0xf4] sm:$0xf]
      %v1507 = vld [vmem:[%s1444 + $0xf8] sm:$0xf]
      %v1508 = vld [vmem:[%s1444 + $0xfc] sm:$0xf]
      %v1573 = vunpack.c.l.b16 %v1445
      %v1574 = vunpack.c.l.b16 %v1446
      %v1575 = vunpack.c.l.b16 %v1447
      %v1576 = vunpack.c.l.b16 %v1448
      %v1577 = vunpack.c.l.b16 %v1449
      %v1578 = vunpack.c.l.b16 %v1450
      %v1579 = vunpack.c.l.b16 %v1451
      %v1580 = vunpack.c.l.b16 %v1452
      %v1581 = vunpack.c.l.b16 %v1453
      %v1582 = vunpack.c.l.b16 %v1454
      %v1583 = vunpack.c.l.b16 %v1455
      %v1584 = vunpack.c.l.b16 %v1456
      %v1585 = vunpack.c.l.b16 %v1457
      %v1586 = vunpack.c.l.b16 %v1458
      %v1587 = vunpack.c.l.b16 %v1459
      %v1588 = vunpack.c.l.b16 %v1460
      %v1589 = vunpack.c.l.b16 %v1461
      %v1590 = vunpack.c.l.b16 %v1462
      %v1591 = vunpack.c.l.b16 %v1463
      %v1592 = vunpack.c.l.b16 %v1464
      %v1593 = vunpack.c.l.b16 %v1465
      %v1594 = vunpack.c.l.b16 %v1466
      %v1595 = vunpack.c.l.b16 %v1467
      %v1596 = vunpack.c.l.b16 %v1468
      %v1597 = vunpack.c.l.b16 %v1469
      %v1598 = vunpack.c.l.b16 %v1470
      %v1599 = vunpack.c.l.b16 %v1471
      %v1600 = vunpack.c.l.b16 %v1472
      %v1601 = vunpack.c.l.b16 %v1473
      %v1602 = vunpack.c.l.b16 %v1474
      %v1603 = vunpack.c.l.b16 %v1475
      %v1604 = vunpack.c.l.b16 %v1476
      %v1605 = vunpack.c.l.b16 %v1477
      %v1606 = vunpack.c.l.b16 %v1478
      %v1607 = vunpack.c.l.b16 %v1479
      %v1608 = vunpack.c.l.b16 %v1480
      %v1609 = vunpack.c.l.b16 %v1481
      %v1610 = vunpack.c.l.b16 %v1482
      %v1611 = vunpack.c.l.b16 %v1483
      %v1612 = vunpack.c.l.b16 %v1484
      %v1613 = vunpack.c.l.b16 %v1485
      %v1614 = vunpack.c.l.b16 %v1486
      %v1615 = vunpack.c.l.b16 %v1487
      %v1616 = vunpack.c.l.b16 %v1488
      %v1617 = vunpack.c.l.b16 %v1489
      %v1618 = vunpack.c.l.b16 %v1490
      %v1619 = vunpack.c.l.b16 %v1491
      %v1620 = vunpack.c.l.b16 %v1492
      %v1621 = vunpack.c.l.b16 %v1493
      %v1622 = vunpack.c.l.b16 %v1494
      %v1623 = vunpack.c.l.b16 %v1495
      %v1624 = vunpack.c.l.b16 %v1496
      %v1625 = vunpack.c.l.b16 %v1497
      %v1626 = vunpack.c.l.b16 %v1498
      %v1627 = vunpack.c.l.b16 %v1499
      %v1628 = vunpack.c.l.b16 %v1500
      %v1629 = vunpack.c.l.b16 %v1501
      %v1630 = vunpack.c.l.b16 %v1502
      %v1631 = vunpack.c.l.b16 %v1503
      %v1632 = vunpack.c.l.b16 %v1504
      %v1633 = vunpack.c.l.b16 %v1505
      %v1634 = vunpack.c.l.b16 %v1506
      %v1635 = vunpack.c.l.b16 %v1507
      %v1636 = vunpack.c.l.b16 %v1508
      %v1637 = vpack.c.b16 %v1574, %v1573
      %v1638 = vpack.c.b16 %v1576, %v1575
      %v1639 = vpack.c.b16 %v1578, %v1577
      %v1640 = vpack.c.b16 %v1580, %v1579
      %v1641 = vpack.c.b16 %v1582, %v1581
      %v1642 = vpack.c.b16 %v1584, %v1583
      %v1643 = vpack.c.b16 %v1586, %v1585
      %v1644 = vpack.c.b16 %v1588, %v1587
      %v1645 = vpack.c.b16 %v1590, %v1589
      %v1646 = vpack.c.b16 %v1592, %v1591
      %v1647 = vpack.c.b16 %v1594, %v1593
      %v1648 = vpack.c.b16 %v1596, %v1595
      %v1649 = vpack.c.b16 %v1598, %v1597
      %v1650 = vpack.c.b16 %v1600, %v1599
      %v1651 = vpack.c.b16 %v1602, %v1601
      %v1652 = vpack.c.b16 %v1604, %v1603
      %v1653 = vpack.c.b16 %v1606, %v1605
      %v1654 = vpack.c.b16 %v1608, %v1607
      %v1655 = vpack.c.b16 %v1610, %v1609
      %v1656 = vpack.c.b16 %v1612, %v1611
      %v1657 = vpack.c.b16 %v1614, %v1613
      %v1658 = vpack.c.b16 %v1616, %v1615
      %v1659 = vpack.c.b16 %v1618, %v1617
      %v1660 = vpack.c.b16 %v1620, %v1619
      %v1661 = vpack.c.b16 %v1622, %v1621
      %v1662 = vpack.c.b16 %v1624, %v1623
      %v1663 = vpack.c.b16 %v1626, %v1625
      %v1664 = vpack.c.b16 %v1628, %v1627
      %v1665 = vpack.c.b16 %v1630, %v1629
      %v1666 = vpack.c.b16 %v1632, %v1631
      %v1667 = vpack.c.b16 %v1634, %v1633
      %v1668 = vpack.c.b16 %v1636, %v1635
      %1701 = vmatprep.subr.bf16.mxu0 0
      %1702 = vmatpush1.bf16.msra.mxu0 %v1644
      %1703 = vmatprep.subr.bf16.mxu0 0
      %1704 = vmatpush1.bf16.msra.mxu0 %v1643
      %1705 = vmatprep.subr.bf16.mxu0 0
      %1706 = vmatpush1.bf16.msra.mxu0 %v1642
      %1707 = vmatprep.subr.bf16.mxu0 0
      %1708 = vmatpush1.bf16.msra.mxu0 %v1641
      %1709 = vmatprep.subr.bf16.mxu0 0
      %1710 = vmatpush1.bf16.msra.mxu0 %v1640
      %1711 = vmatprep.subr.bf16.mxu0 0
      %1712 = vmatpush1.bf16.msra.mxu0 %v1639
      %1713 = vmatprep.subr.bf16.mxu0 0
      %1714 = vmatpush1.bf16.msra.mxu0 %v1638
      %1715 = vmatprep.subr.bf16.mxu0 0
      %1716 = vmatpush1.bf16.msra.mxu0 %v1637
      %1717 = vmatprep.subr.bf16.mxu0 0
      %1718 = vmatpush2.bf16.msra.mxu0 %v1652
      %1719 = vmatprep.subr.bf16.mxu0 0
      %1720 = vmatpush2.bf16.msra.mxu0 %v1651
      %1721 = vmatprep.subr.bf16.mxu0 0
      %1722 = vmatpush2.bf16.msra.mxu0 %v1650
      %1723 = vmatprep.subr.bf16.mxu0 0
      %1724 = vmatpush2.bf16.msra.mxu0 %v1649
      %1725 = vmatprep.subr.bf16.mxu0 0
      %1726 = vmatpush2.bf16.msra.mxu0 %v1648
      %1727 = vmatprep.subr.bf16.mxu0 0
      %1728 = vmatpush2.bf16.msra.mxu0 %v1647
      %1729 = vmatprep.subr.bf16.mxu0 0
      %1730 = vmatpush2.bf16.msra.mxu0 %v1646
      %1731 = vmatprep.subr.bf16.mxu0 0
      %1732 = vmatpush2.bf16.msra.mxu0 %v1645
      %1733 = vmatprep.mubr.bf16.mxu0 %v1441
      %1734 = vmatmul.mubr.bf16.gmra.mxu0 %v1440
      %v1735 = vpop.f32.mrf.mxu0
      %v1736 = vadd.f32 0.0, %v1735
      %v1737 = vpop.f32.mrf.mxu0
      %v1738 = vpop.f32.mrf.mxu0
      %v1739 = vadd.f32 0.0, %v1738
      %v1740 = vpop.f32.mrf.mxu0
      %1741 = vdwg.mxu0
      %1742 = vmatprep.subr.bf16.mxu0 0
      %1743 = vmatpush1.bf16.msra.mxu0 %v1660
      %1744 = vmatprep.subr.bf16.mxu0 0
      %1745 = vmatpush1.bf16.msra.mxu0 %v1659
      %1746 = vmatprep.subr.bf16.mxu0 0
      %1747 = vmatpush1.bf16.msra.mxu0 %v1658
      %1748 = vmatprep.subr.bf16.mxu0 0
      %1749 = vmatpush1.bf16.msra.mxu0 %v1657
      %1750 = vmatprep.subr.bf16.mxu0 0
      %1751 = vmatpush1.bf16.msra.mxu0 %v1656
      %1752 = vmatprep.subr.bf16.mxu0 0
      %1753 = vmatpush1.bf16.msra.mxu0 %v1655
      %1754 = vmatprep.subr.bf16.mxu0 0
      %1755 = vmatpush1.bf16.msra.mxu0 %v1654
      %1756 = vmatprep.subr.bf16.mxu0 0
      %1757 = vmatpush1.bf16.msra.mxu0 %v1653
      %1758 = vmatprep.subr.bf16.mxu0 0
      %1759 = vmatpush2.bf16.msra.mxu0 %v1668
      %1760 = vmatprep.subr.bf16.mxu0 0
      %1761 = vmatpush2.bf16.msra.mxu0 %v1667
      %1762 = vmatprep.subr.bf16.mxu0 0
      %1763 = vmatpush2.bf16.msra.mxu0 %v1666
      %1764 = vmatprep.subr.bf16.mxu0 0
      %1765 = vmatpush2.bf16.msra.mxu0 %v1665
      %1766 = vmatprep.subr.bf16.mxu0 0
      %1767 = vmatpush2.bf16.msra.mxu0 %v1664
      %1768 = vmatprep.subr.bf16.mxu0 0
      %1769 = vmatpush2.bf16.msra.mxu0 %v1663
      %1770 = vmatprep.subr.bf16.mxu0 0
      %1771 = vmatpush2.bf16.msra.mxu0 %v1662
      %1772 = vmatprep.subr.bf16.mxu0 0
      %1773 = vmatpush2.bf16.msra.mxu0 %v1661
      %1774 = vmatprep.mubr.bf16.mxu0 %v1443
      %1775 = vmatmul.mubr.bf16.gmra.mxu0 %v1442
      %v1776 = vpop.f32.mrf.mxu0
      %v1777 = vadd.f32 %v1736, %v1776
      %v1778 = vpop.f32.mrf.mxu0
      %v1779 = vpop.f32.mrf.mxu0
      %v1780 = vadd.f32 %v1739, %v1779
      %v1781 = vpop.f32.mrf.mxu0
      %1782 = vdwg.mxu0
      %v1783 = vadd.f32 %v1412, %v1777
      %v1784 = vadd.f32 %v1413, %v1780
      %1785 = vst [vmem:[%s177] sm:$0xff] %v1783
      %1786 = vst [vmem:[%s177 + $0x8] sm:$0xff] %v1784
      %v1787 = vadd.f32 %v1783, %v1784
      %v1788 = vrot.slane %v1787, 4
      %v1789 = vadd.f32 %v1787, %v1788
      %v1790 = vrot.slane %v1789, 2
      %v1791 = vadd.f32 %v1789, %v1790
      %v1792 = vrot.slane %v1791, 1
      %v1793 = vadd.f32 %v1791, %v1792
      %v1794 = vmul.f32 %v1783, %v1783
      %v1795 = vmul.f32 %v1784, %v1784
      %v1796 = vadd.f32 %v1794, %v1795
      %v1797 = vrot.slane %v1796, 4
      %v1798 = vadd.f32 %v1796, %v1797
      %v1799 = vrot.slane %v1798, 2
      %v1800 = vadd.f32 %v1798, %v1799
      %v1801 = vrot.slane %v1800, 1
      %v1802 = vadd.f32 %v1800, %v1801
      %vm1803 = vcmask 1040384
      %v1804 = vsel %vm1803, %v1793, %v1802
      %1805 = vst [vmem:[%s181] sm:$0x3] %v1804
      %p1806 = scmp.lt.s32.totalorder %s15, 1
      %s1807 = scalar_select %p1806, %s15, 1
      %s1808 = smul.addr %s1807, 2
      %s1809 = smul.addr %s1808, 8
      %s1810 = scalar_lea.vmem %s2, %s1809
      %p1811 = scmp.lt.s32.totalorder %s15, 1
      %s1812 = scalar_select %p1811, %s15, 1
      %s1813 = smul.addr %s1812, 2
      %s1814 = scalar_lea.vmem %s3, %s1813
      // Predicated region
      $region29: #{_encoder_forward.6} parent=27 // pred_check
        %p1815 = pneg %p80
      $region30: #{_encoder_forward.6} parent=27 // pred_check_branch
        %1817 = sbr.rel (%p1815) target = $region32
      $region31: #{_encoder_forward.6} parent=27 // pred_region
        _
      $region32: #{_encoder_forward.6} parent=27 // pred_fallthru
        _
      // Predicated region
      $region33: #{_encoder_forward.6} parent=27 // pred_check
        %p1818 = pneg %p106
      $region34: #{_encoder_forward.6} parent=27 // pred_check_branch
        %1820 = sbr.rel (%p1818) target = $region36
      $region35: #{_encoder_forward.6} parent=27 // pred_region
        _
      $region36: #{_encoder_forward.6} parent=27 // pred_fallthru
        _
    $region28: #{_encoder_forward.6} parent=5 // pred_fallthru
      _
    %p1821 = scmp.le.s32.totalorder 2, %s10
    // Predicated region
    $region37: #{_encoder_forward.6} parent=5 // pred_check
      %p1822 = pneg %p1821
    $region38: #{_encoder_forward.6} parent=5 // pred_check_branch
      %1824 = sbr.rel (%p1822) target = $region40
    $region39: #{_encoder_forward.6} parent=5 // pred_region
      %s1825 = ssub.s32 %s10, 2
      // Predicated region
      $region41: #{_encoder_forward.6} parent=39 // pred_check
        %p1826 = pneg %p86
      $region42: #{_encoder_forward.6} parent=39 // pred_check_branch
        %1828 = sbr.rel (%p1826) target = $region44
      $region43: #{_encoder_forward.6} parent=39 // pred_region
        %p1829 = scmp.lt.s32.totalorder %s16, 1
        %s1830 = scalar_select %p1829, %s16, 1
        %s1831 = smul.addr %s1830, 2
        %s1832 = smul.addr %s1831, 8
        %s1833 = scalar_lea.vmem %s2, %s1832
      $region44: #{_encoder_forward.6} parent=39 // pred_fallthru
        _
      // Predicated region
      $region45: #{_encoder_forward.6} parent=39 // pred_check
        %p1834 = pneg %p112
      $region46: #{_encoder_forward.6} parent=39 // pred_check_branch
        %1836 = sbr.rel (%p1834) target = $region48
      $region47: #{_encoder_forward.6} parent=39 // pred_region
        %p1837 = scmp.lt.s32.totalorder %s16, 1
        %s1838 = scalar_select %p1837, %s16, 1
        %s1839 = smul.addr %s1838, 2
        %s1840 = scalar_lea.vmem %s3, %s1839
      $region48: #{_encoder_forward.6} parent=39 // pred_fallthru
        _
    $region40: #{_encoder_forward.6} parent=5 // pred_fallthru
      _
  $region6: #{_encoder_forward.6} parent=0 // loop_footer
    %s14 = sadd.s32 1, %s10
  $region7: #{_encoder_forward.6} parent=0 // loop_footer_branch
    %9 = sbr.rel target = $region3
  $region8: #{_encoder_forward.6} parent=0 // loop_exit
    _

// kernel: _encoder_forward.9
$region0: #{_encoder_forward.9}
  #allocation0 [shape = 'u32[]', space=smem, size = 0x4, offset = 0x4, fixed_abs, tag = 'smem constant byte address 0x4 - core index']
  #allocation1 [shape = 'u32[144,128]{1,0:T(1,128)}', space=vmem, size = 0x12000, scoped, tag = 'internal scratch']
  %s0 = inlined_call_operand.vmem [shape: f32[2,4,128], index: 0, kind: input, shape index: {}]
  %s1 = inlined_call_operand.vmem [shape: f32[2,128], index: 1, kind: input, shape index: {}]
  %s2 = inlined_call_operand.vmem [shape: f32[2,4,128], index: 2, kind: output, shape index: {}]
  %s3 = sld [smem:[#allocation0]]
  $region41: #{_encoder_forward.9} parent=0
    _
  %s5 = ssub.s32 1, %s3
  %s6 = scalar_select 0, %s5, %s3
  loop: start=0, step=1, limit=4
  $region2: #{_encoder_forward.9} parent=0 // loop_pre_header
    _
  $region3: #{_encoder_forward.9} parent=0 // loop_header
    %s8 = sphi 0, %s12
    %p9 = scmp.ge.s32.totalorder %s8, 4
    %s18 = sphi 0, %s20
    %s21 = sphi 0, %s18
    %s22 = sphi 0, %s21
    %s38 = sphi 0, %s22
    %s42 = sphi 0, %s42
    %s44 = sphi 0, %s42
    %s45 = sphi 0, %s44
    %s59 = sphi 0, %s45
    %s65 = sphi 0, %s67
    %s68 = sphi 0, %s65
    %s69 = sphi 0, %s68
    %s85 = sphi 0, %s69
  $region4: #{_encoder_forward.9} parent=0 // loop_header_branch
    %11 = sbr.rel (%p9) target = $region8
  $region5: #{_encoder_forward.9} parent=0 // loop_body
    %s13 = ssub.s32 %s8, 1
    %s14 = ssub.s32 %s8, 2
    %s15 = sadd.s32 %s8, 1
    %s16 = ssub.s32 %s8, %s15
    %p17 = scmp.eq.s32.totalorder %s16, 0
    %s19 = sadd.s32 %s18, 1
    %s20 = scalar_select %p17, %s18, %s19
    %p23 = pneg %p17
    %p24 = scmp.eq.s32.totalorder %s8, 1
    %p25 = por %p23, %p24
    %p26 = scmp.ne.s32.totalorder %s18, %s21
    %p27 = scmp.eq.s32.totalorder %s8, 0
    %p28 = por %p26, %p27
    %p29 = scmp.ne.s32.totalorder %s18, %s21
    %p30 = scmp.eq.s32.totalorder %s13, 1
    %p31 = por %p29, %p30
    %p32 = scmp.ne.s32.totalorder %s21, %s22
    %p33 = scmp.eq.s32.totalorder %s13, 0
    %p34 = por %p32, %p33
    %p35 = scmp.ne.s32.totalorder %s21, %s22
    %p36 = scmp.eq.s32.totalorder %s14, 1
    %p37 = por %p35, %p36
    %p39 = scmp.ne.s32.totalorder %s22, %s38
    %p40 = scmp.eq.s32.totalorder %s14, 0
    %p41 = por %p39, %p40
    %s43 = sadd.s32 %s42, 1
    %p46 = scmp.eq.s32.totalorder %s8, 1
    %p47 = scmp.ne.s32.totalorder %s42, %s44
    %p48 = scmp.eq.s32.totalorder %s8, 0
    %p49 = por %p47, %p48
    %p50 = scmp.ne.s32.totalorder %s42, %s44
    %p51 = scmp.eq.s32.totalorder %s13, 1
    %p52 = por %p50, %p51
    %p53 = scmp.ne.s32.totalorder %s44, %s45
    %p54 = scmp.eq.s32.totalorder %s13, 0
    %p55 = por %p53, %p54
    %p56 = scmp.ne.s32.totalorder %s44, %s45
    %p57 = scmp.eq.s32.totalorder %s14, 1
    %p58 = por %p56, %p57
    %p60 = scmp.ne.s32.totalorder %s45, %s59
    %p61 = scmp.eq.s32.totalorder %s14, 0
    %p62 = por %p60, %p61
    %s63 = ssub.s32 %s8, %s15
    %p64 = scmp.eq.s32.totalorder %s63, 0
    %s66 = sadd.s32 %s65, 1
    %s67 = scalar_select %p64, %s65, %s66
    %p70 = pneg %p64
    %p71 = scmp.eq.s32.totalorder %s8, 1
    %p72 = por %p70, %p71
    %p73 = scmp.ne.s32.totalorder %s65, %s68
    %p74 = scmp.eq.s32.totalorder %s8, 0
    %p75 = por %p73, %p74
    %p76 = scmp.ne.s32.totalorder %s65, %s68
    %p77 = scmp.eq.s32.totalorder %s13, 1
    %p78 = por %p76, %p77
    %p79 = scmp.ne.s32.totalorder %s68, %s69
    %p80 = scmp.eq.s32.totalorder %s13, 0
    %p81 = por %p79, %p80
    %p82 = scmp.ne.s32.totalorder %s68, %s69
    %p83 = scmp.eq.s32.totalorder %s14, 1
    %p84 = por %p82, %p83
    %p86 = scmp.ne.s32.totalorder %s69, %s85
    %p87 = scmp.eq.s32.totalorder %s14, 0
    %p88 = por %p86, %p87
    %p89 = scmp.le.s32.totalorder 1, %s8
    %p90 = scmp.lt.s32.totalorder %s8, 3
    %p91 = pnand %p89, %p90
    %p92 = pneg %p91
    // Predicated region
    $region9: #{_encoder_forward.9} parent=5 // pred_check
      _
    $region10: #{_encoder_forward.9} parent=5 // pred_check_branch
      %94 = sbr.rel (%p91) target = $region12
    $region11: #{_encoder_forward.9} parent=5 // pred_region
      %s95 = ssub.s32 %s8, 1
      // Predicated region
      $region13: #{_encoder_forward.9} parent=11 // pred_check
        %p96 = pneg %p55
      $region14: #{_encoder_forward.9} parent=11 // pred_check_branch
        %98 = sbr.rel (%p96) target = $region16
      $region15: #{_encoder_forward.9} parent=11 // pred_region
        _
      $region16: #{_encoder_forward.9} parent=11 // pred_fallthru
        _
    $region12: #{_encoder_forward.9} parent=5 // pred_fallthru
      _
    %p99 = scmp.lt.s32.totalorder %s8, 2
    // Predicated region
    $region17: #{_encoder_forward.9} parent=5 // pred_check
      %p100 = pneg %p99
    $region18: #{_encoder_forward.9} parent=5 // pred_check_branch
      %102 = sbr.rel (%p100) target = $region20
    $region19: #{_encoder_forward.9} parent=5 // pred_region
      // Predicated region
      $region21: #{_encoder_forward.9} parent=19 // pred_check
        %p103 = pneg %p28
      $region22: #{_encoder_forward.9} parent=19 // pred_check_branch
        %105 = sbr.rel (%p103) target = $region24
      $region23: #{_encoder_forward.9} parent=19 // pred_region
        %p106 = scmp.lt.s32.totalorder %s8, 1
        %s107 = scalar_select %p106, %s8, 1
        %s108 = smul.addr %s107, 4
        %s109 = scalar_lea.vmem %s0, %s108
      $region24: #{_encoder_forward.9} parent=19 // pred_fallthru
        _
    $region20: #{_encoder_forward.9} parent=5 // pred_fallthru
      _
    %p110 = scmp.le.s32.totalorder 1, %s8
    %p111 = scmp.lt.s32.totalorder %s8, 3
    %p112 = pnand %p110, %p111
    %p113 = pneg %p112
    // Predicated region
    $region25: #{_encoder_forward.9} parent=5 // pred_check
      _
    $region26: #{_encoder_forward.9} parent=5 // pred_check_branch
      %115 = sbr.rel (%p112) target = $region28
    $region27: #{_encoder_forward.9} parent=5 // pred_region
      %s116 = ssub.s32 %s8, 1
      %p117 = scmp.lt.s32.totalorder %s13, 1
      %s118 = scalar_select %p117, %s13, 1
      %s119 = smul.addr %s118, 4
      %s120 = scalar_lea.vmem %s0, %s119
      %p121 = pneg %p34
      %p122 = pneg %p31
      %p123 = pneg %p55
      %p124 = pneg %p52
      %p125 = pneg %p81
      %p126 = pneg %p78
      %p127 = scmp.lt.s32.totalorder %s13, 1
      %s128 = scalar_select %p127, %s13, 1
      %s129 = smul.addr %s128, 4
      %s130 = scalar_lea.vmem %s2, %s129
      %p131 = scmp.lt.s32.totalorder %s13, 1
      %s132 = scalar_select %p131, %s13, 1
      %s133 = smul.addr %s132, 4
      %s134 = scalar_lea.vmem %s0, %s133
      %p135 = scmp.lt.s32.totalorder %s13, 1
      %s136 = scalar_select %p135, %s13, 1
      %s137 = smul.addr %s136, 4
      %s138 = scalar_lea.vmem %s2, %s137
      %v139 = vld [vmem:[%s1] sm:$0x1]
      %v140 = vld [vmem:[%s1 + $0x1] sm:$0x1]
      %v141 = vld [vmem:[%s134] sm:$0xf]
      %v142 = vlaneseq
      %v143 = vshrl.u32 %v142, 7
      %v144 = vsub.s32 0, %v143
      %v145 = vrot.slane %v139, %v144
      %v146 = vmul.f32 %v141, %v145
      %v147 = vlaneseq
      %v148 = vshrl.u32 %v147, 7
      %v149 = vsub.s32 0, %v148
      %v150 = vrot.slane %v140, %v149
      %v151 = vadd.f32 %v146, %v150
      %152 = vst [vmem:[%s138] sm:$0xf] %v151
      %p153 = scmp.lt.s32.totalorder %s13, 1
      %s154 = scalar_select %p153, %s13, 1
      %s155 = smul.addr %s154, 4
      %s156 = scalar_lea.vmem %s2, %s155
      // Predicated region
      $region29: #{_encoder_forward.9} parent=27 // pred_check
        %p157 = pneg %p78
      $region30: #{_encoder_forward.9} parent=27 // pred_check_branch
        %159 = sbr.rel (%p157) target = $region32
      $region31: #{_encoder_forward.9} parent=27 // pred_region
        _
      $region32: #{_encoder_forward.9} parent=27 // pred_fallthru
        _
    $region28: #{_encoder_forward.9} parent=5 // pred_fallthru
      _
    %p160 = scmp.le.s32.totalorder 2, %s8
    // Predicated region
    $region33: #{_encoder_forward.9} parent=5 // pred_check
      %p161 = pneg %p160
    $region34: #{_encoder_forward.9} parent=5 // pred_check_branch
      %163 = sbr.rel (%p161) target = $region36
    $region35: #{_encoder_forward.9} parent=5 // pred_region
      %s164 = ssub.s32 %s8, 2
      // Predicated region
      $region37: #{_encoder_forward.9} parent=35 // pred_check
        %p165 = pneg %p84
      $region38: #{_encoder_forward.9} parent=35 // pred_check_branch
        %167 = sbr.rel (%p165) target = $region40
      $region39: #{_encoder_forward.9} parent=35 // pred_region
        %p168 = scmp.lt.s32.totalorder %s14, 1
        %s169 = scalar_select %p168, %s14, 1
        %s170 = smul.addr %s169, 4
        %s171 = scalar_lea.vmem %s2, %s170
      $region40: #{_encoder_forward.9} parent=35 // pred_fallthru
        _
    $region36: #{_encoder_forward.9} parent=5 // pred_fallthru
      _
  $region6: #{_encoder_forward.9} parent=0 // loop_footer
    %s12 = sadd.s32 1, %s8
  $region7: #{_encoder_forward.9} parent=0 // loop_footer_branch
    %7 = sbr.rel target = $region3
  $region8: #{_encoder_forward.9} parent=0 // loop_exit
    _

// kernel: _encoder_forward.8
$region0: #{_encoder_forward.8}
  #allocation0 [shape = 'u32[]', space=smem, size = 0x4, offset = 0x4, fixed_abs, tag = 'smem constant byte address 0x4 - core index']
  #allocation1 [shape = 'u32[144,128]{1,0:T(1,128)}', space=vmem, size = 0x12000, scoped, tag = 'internal scratch']
  %s0 = inlined_call_operand.vmem [shape: f32[2,3,3,512], index: 0, kind: input, shape index: {}]
  %s1 = inlined_call_operand.vmem [shape: bf16[4,512,128], index: 1, kind: input, shape index: {}]
  %s2 = inlined_call_operand.vmem [shape: f32[2,4,128], index: 2, kind: output, shape index: {0}]
  %s3 = inlined_call_operand.vmem [shape: f32[2,2,128], index: 3, kind: output, shape index: {1}]
  %4 = xla_tuple %s2, %s3
  %s5 = sld [smem:[#allocation0]]
  $region49: #{_encoder_forward.8} parent=0
    _
  %s7 = ssub.s32 1, %s5
  %s8 = scalar_select 0, %s7, %s5
  loop: start=0, step=1, limit=4
  $region2: #{_encoder_forward.8} parent=0 // loop_pre_header
    _
  $region3: #{_encoder_forward.8} parent=0 // loop_header
    %s10 = sphi 0, %s14
    %p11 = scmp.ge.s32.totalorder %s10, 4
    %s20 = sphi 0, %s22
    %s23 = sphi 0, %s20
    %s24 = sphi 0, %s23
    %s40 = sphi 0, %s24
    %s44 = sphi 0, %s44
    %s46 = sphi 0, %s44
    %s47 = sphi 0, %s46
    %s61 = sphi 0, %s47
    %s67 = sphi 0, %s69
    %s70 = sphi 0, %s67
    %s71 = sphi 0, %s70
    %s87 = sphi 0, %s71
    %s93 = sphi 0, %s95
    %s96 = sphi 0, %s93
    %s97 = sphi 0, %s96
    %s113 = sphi 0, %s97
  $region4: #{_encoder_forward.8} parent=0 // loop_header_branch
    %13 = sbr.rel (%p11) target = $region8
  $region5: #{_encoder_forward.8} parent=0 // loop_body
    %s15 = ssub.s32 %s10, 1
    %s16 = ssub.s32 %s10, 2
    %s17 = sadd.s32 %s10, 1
    %s18 = ssub.s32 %s10, %s17
    %p19 = scmp.eq.s32.totalorder %s18, 0
    %s21 = sadd.s32 %s20, 1
    %s22 = scalar_select %p19, %s20, %s21
    %p25 = pneg %p19
    %p26 = scmp.eq.s32.totalorder %s10, 1
    %p27 = por %p25, %p26
    %p28 = scmp.ne.s32.totalorder %s20, %s23
    %p29 = scmp.eq.s32.totalorder %s10, 0
    %p30 = por %p28, %p29
    %p31 = scmp.ne.s32.totalorder %s20, %s23
    %p32 = scmp.eq.s32.totalorder %s15, 1
    %p33 = por %p31, %p32
    %p34 = scmp.ne.s32.totalorder %s23, %s24
    %p35 = scmp.eq.s32.totalorder %s15, 0
    %p36 = por %p34, %p35
    %p37 = scmp.ne.s32.totalorder %s23, %s24
    %p38 = scmp.eq.s32.totalorder %s16, 1
    %p39 = por %p37, %p38
    %p41 = scmp.ne.s32.totalorder %s24, %s40
    %p42 = scmp.eq.s32.totalorder %s16, 0
    %p43 = por %p41, %p42
    %s45 = sadd.s32 %s44, 1
    %p48 = scmp.eq.s32.totalorder %s10, 1
    %p49 = scmp.ne.s32.totalorder %s44, %s46
    %p50 = scmp.eq.s32.totalorder %s10, 0
    %p51 = por %p49, %p50
    %p52 = scmp.ne.s32.totalorder %s44, %s46
    %p53 = scmp.eq.s32.totalorder %s15, 1
    %p54 = por %p52, %p53
    %p55 = scmp.ne.s32.totalorder %s46, %s47
    %p56 = scmp.eq.s32.totalorder %s15, 0
    %p57 = por %p55, %p56
    %p58 = scmp.ne.s32.totalorder %s46, %s47
    %p59 = scmp.eq.s32.totalorder %s16, 1
    %p60 = por %p58, %p59
    %p62 = scmp.ne.s32.totalorder %s47, %s61
    %p63 = scmp.eq.s32.totalorder %s16, 0
    %p64 = por %p62, %p63
    %s65 = ssub.s32 %s10, %s17
    %p66 = scmp.eq.s32.totalorder %s65, 0
    %s68 = sadd.s32 %s67, 1
    %s69 = scalar_select %p66, %s67, %s68
    %p72 = pneg %p66
    %p73 = scmp.eq.s32.totalorder %s10, 1
    %p74 = por %p72, %p73
    %p75 = scmp.ne.s32.totalorder %s67, %s70
    %p76 = scmp.eq.s32.totalorder %s10, 0
    %p77 = por %p75, %p76
    %p78 = scmp.ne.s32.totalorder %s67, %s70
    %p79 = scmp.eq.s32.totalorder %s15, 1
    %p80 = por %p78, %p79
    %p81 = scmp.ne.s32.totalorder %s70, %s71
    %p82 = scmp.eq.s32.totalorder %s15, 0
    %p83 = por %p81, %p82
    %p84 = scmp.ne.s32.totalorder %s70, %s71
    %p85 = scmp.eq.s32.totalorder %s16, 1
    %p86 = por %p84, %p85
    %p88 = scmp.ne.s32.totalorder %s71, %s87
    %p89 = scmp.eq.s32.totalorder %s16, 0
    %p90 = por %p88, %p89
    %s91 = ssub.s32 %s10, %s17
    %p92 = scmp.eq.s32.totalorder %s91, 0
    %s94 = sadd.s32 %s93, 1
    %s95 = scalar_select %p92, %s93, %s94
    %p98 = pneg %p92
    %p99 = scmp.eq.s32.totalorder %s10, 1
    %p100 = por %p98, %p99
    %p101 = scmp.ne.s32.totalorder %s93, %s96
    %p102 = scmp.eq.s32.totalorder %s10, 0
    %p103 = por %p101, %p102
    %p104 = scmp.ne.s32.totalorder %s93, %s96
    %p105 = scmp.eq.s32.totalorder %s15, 1
    %p106 = por %p104, %p105
    %p107 = scmp.ne.s32.totalorder %s96, %s97
    %p108 = scmp.eq.s32.totalorder %s15, 0
    %p109 = por %p107, %p108
    %p110 = scmp.ne.s32.totalorder %s96, %s97
    %p111 = scmp.eq.s32.totalorder %s16, 1
    %p112 = por %p110, %p111
    %p114 = scmp.ne.s32.totalorder %s97, %s113
    %p115 = scmp.eq.s32.totalorder %s16, 0
    %p116 = por %p114, %p115
    %p117 = scmp.le.s32.totalorder 1, %s10
    %p118 = scmp.lt.s32.totalorder %s10, 3
    %p119 = pnand %p117, %p118
    %p120 = pneg %p119
    // Predicated region
    $region9: #{_encoder_forward.8} parent=5 // pred_check
      _
    $region10: #{_encoder_forward.8} parent=5 // pred_check_branch
      %122 = sbr.rel (%p119) target = $region12
    $region11: #{_encoder_forward.8} parent=5 // pred_region
      %s123 = ssub.s32 %s10, 1
      // Predicated region
      $region13: #{_encoder_forward.8} parent=11 // pred_check
        %p124 = pneg %p57
      $region14: #{_encoder_forward.8} parent=11 // pred_check_branch
        %126 = sbr.rel (%p124) target = $region16
      $region15: #{_encoder_forward.8} parent=11 // pred_region
        _
      $region16: #{_encoder_forward.8} parent=11 // pred_fallthru
        _
    $region12: #{_encoder_forward.8} parent=5 // pred_fallthru
      _
    %p127 = scmp.lt.s32.totalorder %s10, 2
    // Predicated region
    $region17: #{_encoder_forward.8} parent=5 // pred_check
      %p128 = pneg %p127
    $region18: #{_encoder_forward.8} parent=5 // pred_check_branch
      %130 = sbr.rel (%p128) target = $region20
    $region19: #{_encoder_forward.8} parent=5 // pred_region
      // Predicated region
      $region21: #{_encoder_forward.8} parent=19 // pred_check
        %p131 = pneg %p30
      $region22: #{_encoder_forward.8} parent=19 // pred_check_branch
        %133 = sbr.rel (%p131) target = $region24
      $region23: #{_encoder_forward.8} parent=19 // pred_region
        %p134 = scmp.lt.s32.totalorder %s10, 1
        %s135 = scalar_select %p134, %s10, 1
        %s136 = smul.addr %s135, 12
        %s137 = smul.addr %s136, 4
        %s138 = scalar_lea.vmem %s0, %s137
      $region24: #{_encoder_forward.8} parent=19 // pred_fallthru
        _
    $region20: #{_encoder_forward.8} parent=5 // pred_fallthru
      _
    %p139 = scmp.le.s32.totalorder 1, %s10
    %p140 = scmp.lt.s32.totalorder %s10, 3
    %p141 = pnand %p139, %p140
    %p142 = pneg %p141
    // Predicated region
    $region25: #{_encoder_forward.8} parent=5 // pred_check
      _
    $region26: #{_encoder_forward.8} parent=5 // pred_check_branch
      %144 = sbr.rel (%p141) target = $region28
    $region27: #{_encoder_forward.8} parent=5 // pred_region
      %s145 = ssub.s32 %s10, 1
      %p146 = scmp.lt.s32.totalorder %s15, 1
      %s147 = scalar_select %p146, %s15, 1
      %s148 = smul.addr %s147, 12
      %s149 = smul.addr %s148, 4
      %s150 = scalar_lea.vmem %s0, %s149
      %p151 = pneg %p36
      %p152 = pneg %p33
      %p153 = pneg %p57
      %p154 = pneg %p54
      %p155 = pneg %p83
      %p156 = pneg %p80
      %p157 = scmp.lt.s32.totalorder %s15, 1
      %s158 = scalar_select %p157, %s15, 1
      %s159 = smul.addr %s158, 4
      %s160 = scalar_lea.vmem %s2, %s159
      %p161 = pneg %p109
      %p162 = pneg %p106
      %p163 = scmp.lt.s32.totalorder %s15, 1
      %s164 = scalar_select %p163, %s15, 1
      %s165 = smul.addr %s164, 2
      %s166 = scalar_lea.vmem %s3, %s165
      %p167 = scmp.lt.s32.totalorder %s15, 1
      %s168 = scalar_select %p167, %s15, 1
      %s169 = smul.addr %s168, 12
      %s170 = smul.addr %s169, 4
      %s171 = scalar_lea.vmem %s0, %s170
      %p172 = scmp.lt.s32.totalorder %s15, 1
      %s173 = scalar_select %p172, %s15, 1
      %s174 = smul.addr %s173, 4
      %s175 = scalar_lea.vmem %s2, %s174
      %p176 = scmp.lt.s32.totalorder %s15, 1
      %s177 = scalar_select %p176, %s15, 1
      %s178 = smul.addr %s177, 2
      %s179 = scalar_lea.vmem %s3, %s178
      %v181 = vld [vmem:[%s171] sm:$0x77]
      %v182 = vld [vmem:[%s171 + $0x8] sm:$0x77]
      %v183 = vld [vmem:[%s171 + $0x10] sm:$0x77]
      %v184 = vld [vmem:[%s171 + $0x18] sm:$0x77]
      %v185 = vld [vmem:[%s171 + $0x20] sm:$0x77]
      %v186 = vld [vmem:[%s171 + $0x28] sm:$0x77]
      %vm187 = vcmp.ge.f32.partialorder %v181, 0.0
      %vm188 = vcmp.ge.f32.partialorder %v182, 0.0
      %vm189 = vcmp.ge.f32.partialorder %v183, 0.0
      %vm190 = vcmp.ge.f32.partialorder %v184, 0.0
      %vm191 = vcmp.ge.f32.partialorder %v185, 0.0
      %vm192 = vcmp.ge.f32.partialorder %v186, 0.0
      %v193 = vmul.f32 %v181, 0.2
      %v194 = vmul.f32 %v182, 0.2
      %v195 = vmul.f32 %v183, 0.2
      %v196 = vmul.f32 %v184, 0.2
      %v197 = vmul.f32 %v185, 0.2
      %v198 = vmul.f32 %v186, 0.2
      %v199 = vsel %vm187, %v181, %v193
      %v200 = vsel %vm188, %v182, %v194
      %v201 = vsel %vm189, %v183, %v195
      %v202 = vsel %vm190, %v184, %v196
      %v203 = vsel %vm191, %v185, %v197
      %v204 = vsel %vm192, %v186, %v198
      %v210 = vunpack.c.l.s4 1983009808
      %v211 = vunpack.c.0.s8 %v210
      %v212 = vlaneseq
      %v213 = vshrl.u32 %v212, 7
      %v214 = vsub.s32 %v211, %v213
      %v215 = vrot.slane %v199, %v214
      %v217 = vunpack.c.l.s4 1983009808
      %v218 = vunpack.c.0.s8 %v217
      %v219 = vlaneseq
      %v220 = vshrl.u32 %v219, 7
      %v221 = vsub.s32 %v218, %v220
      %v222 = vrot.slane %v200, %v221
      %v223 = vcombine.low %v215, %v222
      %v225 = vunpack.c.l.s4 1983009808
      %v226 = vunpack.c.0.s8 %v225
      %v227 = vlaneseq
      %v228 = vshrl.u32 %v227, 7
      %v229 = vsub.s32 %v226, %v228
      %v230 = vrot.slane %v201, %v229
      %v232 = vunpack.c.l.s4 1983009808
      %v233 = vunpack.c.0.s8 %v232
      %v234 = vlaneseq
      %v235 = vshrl.u32 %v234, 7
      %v236 = vsub.s32 %v233, %v235
      %v237 = vrot.slane %v202, %v236
      %v238 = vcombine.low %v230, %v237
      %v239 = vcombine.low %v223, %v238
      %v240 = vcombine.high %v223, %v238
      %v242 = vunpack.c.l.s4 1983009808
      %v243 = vunpack.c.0.s8 %v242
      %v244 = vlaneseq
      %v245 = vshrl.u32 %v244, 7
      %v246 = vsub.s32 %v243, %v245
      %v247 = vrot.slane %v239, %v246
      %v249 = vunpack.c.l.s4 1983009808
      %v250 = vunpack.c.0.s8 %v249
      %v251 = vlaneseq
      %v252 = vshrl.u32 %v251, 7
      %v253 = vsub.s32 %v250, %v252
      %v254 = vrot.slane %v240, %v253
      %v255 = vcombine.high %v247, %v247
      %v256 = vcombine.high %v254, %v254
      %v261 = vpack.c.bf16 %v247, %v247
      %v262 = vpack.c.bf16 %v255, %v255
      %v263 = vpack.c.bf16 %v254, %v254
      %v264 = vpack.c.bf16 %v256, %v256
      %v265 = vld [vmem:[%s1] sm:$0xf]
      %v266 = vld [vmem:[%s1 + $0x4] sm:$0xf]
      %v267 = vld [vmem:[%s1 + $0x8] sm:$0xf]
      %v268 = vld [vmem:[%s1 + $0xc] sm:$0xf]
      %v269 = vld [vmem:[%s1 + $0x10] sm:$0xf]
      %v270 = vld [vmem:[%s1 + $0x14] sm:$0xf]
      %v271 = vld [vmem:[%s1 + $0x18] sm:$0xf]
      %v272 = vld [vmem:[%s1 + $0x1c] sm:$0xf]
      %v273 = vld [vmem:[%s1 + $0x20] sm:$0xf]
      %v274 = vld [vmem:[%s1 + $0x24] sm:$0xf]
      %v275 = vld [vmem:[%s1 + $0x28] sm:$0xf]
      %v276 = vld [vmem:[%s1 + $0x2c] sm:$0xf]
      %v277 = vld [vmem:[%s1 + $0x30] sm:$0xf]
      %v278 = vld [vmem:[%s1 + $0x34] sm:$0xf]
      %v279 = vld [vmem:[%s1 + $0x38] sm:$0xf]
      %v280 = vld [vmem:[%s1 + $0x3c] sm:$0xf]
      %v281 = vld [vmem:[%s1 + $0x40] sm:$0xf]
      %v282 = vld [vmem:[%s1 + $0x44] sm:$0xf]
      %v283 = vld [vmem:[%s1 + $0x48] sm:$0xf]
      %v284 = vld [vmem:[%s1 + $0x4c] sm:$0xf]
      %v285 = vld [vmem:[%s1 + $0x50] sm:$0xf]
      %v286 = vld [vmem:[%s1 + $0x54] sm:$0xf]
      %v287 = vld [vmem:[%s1 + $0x58] sm:$0xf]
      %v288 = vld [vmem:[%s1 + $0x5c] sm:$0xf]
      %v289 = vld [vmem:[%s1 + $0x60] sm:$0xf]
      %v290 = vld [vmem:[%s1 + $0x64] sm:$0xf]
      %v291 = vld [vmem:[%s1 + $0x68] sm:$0xf]
      %v292 = vld [vmem:[%s1 + $0x6c] sm:$0xf]
      %v293 = vld [vmem:[%s1 + $0x70] sm:$0xf]
      %v294 = vld [vmem:[%s1 + $0x74] sm:$0xf]
      %v295 = vld [vmem:[%s1 + $0x78] sm:$0xf]
      %v296 = vld [vmem:[%s1 + $0x7c] sm:$0xf]
      %v297 = vld [vmem:[%s1 + $0x80] sm:$0xf]
      %v298 = vld [vmem:[%s1 + $0x84] sm:$0xf]
      %v299 = vld [vmem:[%s1 + $0x88] sm:$0xf]
      %v300 = vld [vmem:[%s1 + $0x8c] sm:$0xf]
      %v301 = vld [vmem:[%s1 + $0x90] sm:$0xf]
      %v302 = vld [vmem:[%s1 + $0x94] sm:$0xf]
      %v303 = vld [vmem:[%s1 + $0x98] sm:$0xf]
      %v304 = vld [vmem:[%s1 + $0x9c] sm:$0xf]
      %v305 = vld [vmem:[%s1 + $0xa0] sm:$0xf]
      %v306 = vld [vmem:[%s1 + $0xa4] sm:$0xf]
      %v307 = vld [vmem:[%s1 + $0xa8] sm:$0xf]
      %v308 = vld [vmem:[%s1 + $0xac] sm:$0xf]
      %v309 = vld [vmem:[%s1 + $0xb0] sm:$0xf]
      %v310 = vld [vmem:[%s1 + $0xb4] sm:$0xf]
      %v311 = vld [vmem:[%s1 + $0xb8] sm:$0xf]
      %v312 = vld [vmem:[%s1 + $0xbc] sm:$0xf]
      %v313 = vld [vmem:[%s1 + $0xc0] sm:$0xf]
      %v314 = vld [vmem:[%s1 + $0xc4] sm:$0xf]
      %v315 = vld [vmem:[%s1 + $0xc8] sm:$0xf]
      %v316 = vld [vmem:[%s1 + $0xcc] sm:$0xf]
      %v317 = vld [vmem:[%s1 + $0xd0] sm:$0xf]
      %v318 = vld [vmem:[%s1 + $0xd4] sm:$0xf]
      %v319 = vld [vmem:[%s1 + $0xd8] sm:$0xf]
      %v320 = vld [vmem:[%s1 + $0xdc] sm:$0xf]
      %v321 = vld [vmem:[%s1 + $0xe0] sm:$0xf]
      %v322 = vld [vmem:[%s1 + $0xe4] sm:$0xf]
      %v323 = vld [vmem:[%s1 + $0xe8] sm:$0xf]
      %v324 = vld [vmem:[%s1 + $0xec] sm:$0xf]
      %v325 = vld [vmem:[%s1 + $0xf0] sm:$0xf]
      %v326 = vld [vmem:[%s1 + $0xf4] sm:$0xf]
      %v327 = vld [vmem:[%s1 + $0xf8] sm:$0xf]
      %v328 = vld [vmem:[%s1 + $0xfc] sm:$0xf]
      %v329 = vcombine.high %v215, %v222
      %v330 = vcombine.high %v230, %v237
      %vm331 = vcmask 1040384
      %vm332 = vcmask 1042434
      %vm333 = vmor %vm331, %vm332
      %vm334 = vcmask 1044484
      %vm335 = vmor %vm333, %vm334
      %vm336 = vcmask 1046534
      %vm337 = vmor %vm335, %vm336
      %v338 = vrot.slane %v223, 7
      %v339 = vrot.slane %v338, 2
      %v340 = vrot.slane %v329, 7
      %v341 = vsel %vm337, %v339, %v340
      %v342 = vrot.slane %v238, 7
      %v343 = vrot.slane %v342, 2
      %v344 = vrot.slane %v330, 7
      %v345 = vsel %vm337, %v343, %v344
      %v346 = vcombine.low %v341, %v345
      %v347 = vcombine.high %v341, %v345
      %v349 = vunpack.c.l.s4 1983009808
      %v350 = vunpack.c.0.s8 %v349
      %v351 = vlaneseq
      %v352 = vshrl.u32 %v351, 7
      %v353 = vsub.s32 %v350, %v352
      %v354 = vrot.slane %v346, %v353
      %v356 = vunpack.c.l.s4 1983009808
      %v357 = vunpack.c.0.s8 %v356
      %v358 = vlaneseq
      %v359 = vshrl.u32 %v358, 7
      %v360 = vsub.s32 %v357, %v359
      %v361 = vrot.slane %v347, %v360
      %v362 = vcombine.high %v354, %v354
      %v363 = vcombine.high %v361, %v361
      %v368 = vpack.c.bf16 %v354, %v354
      %v369 = vpack.c.bf16 %v362, %v362
      %v370 = vpack.c.bf16 %v361, %v361
      %v371 = vpack.c.bf16 %v363, %v363
      %s372 = scalar_lea.vmem %s1, 256
      %v373 = vld [vmem:[%s372] sm:$0xf]
      %v374 = vld [vmem:[%s372 + $0x4] sm:$0xf]
      %v375 = vld [vmem:[%s372 + $0x8] sm:$0xf]
      %v376 = vld [vmem:[%s372 + $0xc] sm:$0xf]
      %v377 = vld [vmem:[%s372 + $0x10] sm:$0xf]
      %v378 = vld [vmem:[%s372 + $0x14] sm:$0xf]
      %v379 = vld [vmem:[%s372 + $0x18] sm:$0xf]
      %v380 = vld [vmem:[%s372 + $0x1c] sm:$0xf]
      %v381 = vld [vmem:[%s372 + $0x20] sm:$0xf]
      %v382 = vld [vmem:[%s372 + $0x24] sm:$0xf]
      %v383 = vld [vmem:[%s372 + $0x28] sm:$0xf]
      %v384 = vld [vmem:[%s372 + $0x2c] sm:$0xf]
      %v385 = vld [vmem:[%s372 + $0x30] sm:$0xf]
      %v386 = vld [vmem:[%s372 + $0x34] sm:$0xf]
      %v387 = vld [vmem:[%s372 + $0x38] sm:$0xf]
      %v388 = vld [vmem:[%s372 + $0x3c] sm:$0xf]
      %v389 = vld [vmem:[%s372 + $0x40] sm:$0xf]
      %v390 = vld [vmem:[%s372 + $0x44] sm:$0xf]
      %v391 = vld [vmem:[%s372 + $0x48] sm:$0xf]
      %v392 = vld [vmem:[%s372 + $0x4c] sm:$0xf]
      %v393 = vld [vmem:[%s372 + $0x50] sm:$0xf]
      %v394 = vld [vmem:[%s372 + $0x54] sm:$0xf]
      %v395 = vld [vmem:[%s372 + $0x58] sm:$0xf]
      %v396 = vld [vmem:[%s372 + $0x5c] sm:$0xf]
      %v397 = vld [vmem:[%s372 + $0x60] sm:$0xf]
      %v398 = vld [vmem:[%s372 + $0x64] sm:$0xf]
      %v399 = vld [vmem:[%s372 + $0x68] sm:$0xf]
      %v400 = vld [vmem:[%s372 + $0x6c] sm:$0xf]
      %v401 = vld [vmem:[%s372 + $0x70] sm:$0xf]
      %v402 = vld [vmem:[%s372 + $0x74] sm:$0xf]
      %v403 = vld [vmem:[%s372 + $0x78] sm:$0xf]
      %v404 = vld [vmem:[%s372 + $0x7c] sm:$0xf]
      %v405 = vld [vmem:[%s372 + $0x80] sm:$0xf]
      %v406 = vld [vmem:[%s372 + $0x84] sm:$0xf]
      %v407 = vld [vmem:[%s372 + $0x88] sm:$0xf]
      %v408 = vld [vmem:[%s372 + $0x8c] sm:$0xf]
      %v409 = vld [vmem:[%s372 + $0x90] sm:$0xf]
      %v410 = vld [vmem:[%s372 + $0x94] sm:$0xf]
      %v411 = vld [vmem:[%s372 + $0x98] sm:$0xf]
      %v412 = vld [vmem:[%s372 + $0x9c] sm:$0xf]
      %v413 = vld [vmem:[%s372 + $0xa0] sm:$0xf]
      %v414 = vld [vmem:[%s372 + $0xa4] sm:$0xf]
      %v415 = vld [vmem:[%s372 + $0xa8] sm:$0xf]
      %v416 = vld [vmem:[%s372 + $0xac] sm:$0xf]
      %v417 = vld [vmem:[%s372 + $0xb0] sm:$0xf]
      %v418 = vld [vmem:[%s372 + $0xb4] sm:$0xf]
      %v419 = vld [vmem:[%s372 + $0xb8] sm:$0xf]
      %v420 = vld [vmem:[%s372 + $0xbc] sm:$0xf]
      %v421 = vld [vmem:[%s372 + $0xc0] sm:$0xf]
      %v422 = vld [vmem:[%s372 + $0xc4] sm:$0xf]
      %v423 = vld [vmem:[%s372 + $0xc8] sm:$0xf]
      %v424 = vld [vmem:[%s372 + $0xcc] sm:$0xf]
      %v425 = vld [vmem:[%s372 + $0xd0] sm:$0xf]
      %v426 = vld [vmem:[%s372 + $0xd4] sm:$0xf]
      %v427 = vld [vmem:[%s372 + $0xd8] sm:$0xf]
      %v428 = vld [vmem:[%s372 + $0xdc] sm:$0xf]
      %v429 = vld [vmem:[%s372 + $0xe0] sm:$0xf]
      %v430 = vld [vmem:[%s372 + $0xe4] sm:$0xf]
      %v431 = vld [vmem:[%s372 + $0xe8] sm:$0xf]
      %v432 = vld [vmem:[%s372 + $0xec] sm:$0xf]
      %v433 = vld [vmem:[%s372 + $0xf0] sm:$0xf]
      %v434 = vld [vmem:[%s372 + $0xf4] sm:$0xf]
      %v435 = vld [vmem:[%s372 + $0xf8] sm:$0xf]
      %v436 = vld [vmem:[%s372 + $0xfc] sm:$0xf]
      %v501 = vunpack.c.l.b16 %v373
      %v502 = vunpack.c.l.b16 %v374
      %v503 = vunpack.c.l.b16 %v375
      %v504 = vunpack.c.l.b16 %v376
      %v505 = vunpack.c.l.b16 %v377
      %v506 = vunpack.c.l.b16 %v378
      %v507 = vunpack.c.l.b16 %v379
      %v508 = vunpack.c.l.b16 %v380
      %v509 = vunpack.c.l.b16 %v381
      %v510 = vunpack.c.l.b16 %v382
      %v511 = vunpack.c.l.b16 %v383
      %v512 = vunpack.c.l.b16 %v384
      %v513 = vunpack.c.l.b16 %v385
      %v514 = vunpack.c.l.b16 %v386
      %v515 = vunpack.c.l.b16 %v387
      %v516 = vunpack.c.l.b16 %v388
      %v517 = vunpack.c.l.b16 %v389
      %v518 = vunpack.c.l.b16 %v390
      %v519 = vunpack.c.l.b16 %v391
      %v520 = vunpack.c.l.b16 %v392
      %v521 = vunpack.c.l.b16 %v393
      %v522 = vunpack.c.l.b16 %v394
      %v523 = vunpack.c.l.b16 %v395
      %v524 = vunpack.c.l.b16 %v396
      %v525 = vunpack.c.l.b16 %v397
      %v526 = vunpack.c.l.b16 %v398
      %v527 = vunpack.c.l.b16 %v399
      %v528 = vunpack.c.l.b16 %v400
      %v529 = vunpack.c.l.b16 %v401
      %v530 = vunpack.c.l.b16 %v402
      %v531 = vunpack.c.l.b16 %v403
      %v532 = vunpack.c.l.b16 %v404
      %v533 = vunpack.c.l.b16 %v405
      %v534 = vunpack.c.l.b16 %v406
      %v535 = vunpack.c.l.b16 %v407
      %v536 = vunpack.c.l.b16 %v408
      %v537 = vunpack.c.l.b16 %v409
      %v538 = vunpack.c.l.b16 %v410
      %v539 = vunpack.c.l.b16 %v411
      %v540 = vunpack.c.l.b16 %v412
      %v541 = vunpack.c.l.b16 %v413
      %v542 = vunpack.c.l.b16 %v414
      %v543 = vunpack.c.l.b16 %v415
      %v544 = vunpack.c.l.b16 %v416
      %v545 = vunpack.c.l.b16 %v417
      %v546 = vunpack.c.l.b16 %v418
      %v547 = vunpack.c.l.b16 %v419
      %v548 = vunpack.c.l.b16 %v420
      %v549 = vunpack.c.l.b16 %v421
      %v550 = vunpack.c.l.b16 %v422
      %v551 = vunpack.c.l.b16 %v423
      %v552 = vunpack.c.l.b16 %v424
      %v553 = vunpack.c.l.b16 %v425
      %v554 = vunpack.c.l.b16 %v426
      %v555 = vunpack.c.l.b16 %v427
      %v556 = vunpack.c.l.b16 %v428
      %v557 = vunpack.c.l.b16 %v429
      %v558 = vunpack.c.l.b16 %v430
      %v559 = vunpack.c.l.b16 %v431
      %v560 = vunpack.c.l.b16 %v432
      %v561 = vunpack.c.l.b16 %v433
      %v562 = vunpack.c.l.b16 %v434
      %v563 = vunpack.c.l.b16 %v435
      %v564 = vunpack.c.l.b16 %v436
      %v565 = vpack.c.b16 %v502, %v501
      %v566 = vpack.c.b16 %v504, %v503
      %v567 = vpack.c.b16 %v506, %v505
      %v568 = vpack.c.b16 %v508, %v507
      %v569 = vpack.c.b16 %v510, %v509
      %v570 = vpack.c.b16 %v512, %v511
      %v571 = vpack.c.b16 %v514, %v513
      %v572 = vpack.c.b16 %v516, %v515
      %v573 = vpack.c.b16 %v518, %v517
      %v574 = vpack.c.b16 %v520, %v519
      %v575 = vpack.c.b16 %v522, %v521
      %v576 = vpack.c.b16 %v524, %v523
      %v577 = vpack.c.b16 %v526, %v525
      %v578 = vpack.c.b16 %v528, %v527
      %v579 = vpack.c.b16 %v530, %v529
      %v580 = vpack.c.b16 %v532, %v531
      %v581 = vpack.c.b16 %v534, %v533
      %v582 = vpack.c.b16 %v536, %v535
      %v583 = vpack.c.b16 %v538, %v537
      %v584 = vpack.c.b16 %v540, %v539
      %v585 = vpack.c.b16 %v542, %v541
      %v586 = vpack.c.b16 %v544, %v543
      %v587 = vpack.c.b16 %v546, %v545
      %v588 = vpack.c.b16 %v548, %v547
      %v589 = vpack.c.b16 %v550, %v549
      %v590 = vpack.c.b16 %v552, %v551
      %v591 = vpack.c.b16 %v554, %v553
      %v592 = vpack.c.b16 %v556, %v555
      %v593 = vpack.c.b16 %v558, %v557
      %v594 = vpack.c.b16 %v560, %v559
      %v595 = vpack.c.b16 %v562, %v561
      %v596 = vpack.c.b16 %v564, %v563
      %629 = vmatprep.subr.bf16.mxu0 0
      %630 = vmatpush1.bf16.msra.mxu0 %v572
      %631 = vmatprep.subr.bf16.mxu0 0
      %632 = vmatpush1.bf16.msra.mxu0 %v571
      %633 = vmatprep.subr.bf16.mxu0 0
      %634 = vmatpush1.bf16.msra.mxu0 %v570
      %635 = vmatprep.subr.bf16.mxu0 0
      %636 = vmatpush1.bf16.msra.mxu0 %v569
      %637 = vmatprep.subr.bf16.mxu0 0
      %638 = vmatpush1.bf16.msra.mxu0 %v568
      %639 = vmatprep.subr.bf16.mxu0 0
      %640 = vmatpush1.bf16.msra.mxu0 %v567
      %641 = vmatprep.subr.bf16.mxu0 0
      %642 = vmatpush1.bf16.msra.mxu0 %v566
      %643 = vmatprep.subr.bf16.mxu0 0
      %644 = vmatpush1.bf16.msra.mxu0 %v565
      %645 = vmatprep.subr.bf16.mxu0 0
      %646 = vmatpush2.bf16.msra.mxu0 %v580
      %647 = vmatprep.subr.bf16.mxu0 0
      %648 = vmatpush2.bf16.msra.mxu0 %v579
      %649 = vmatprep.subr.bf16.mxu0 0
      %650 = vmatpush2.bf16.msra.mxu0 %v578
      %651 = vmatprep.subr.bf16.mxu0 0
      %652 = vmatpush2.bf16.msra.mxu0 %v577
      %653 = vmatprep.subr.bf16.mxu0 0
      %654 = vmatpush2.bf16.msra.mxu0 %v576
      %655 = vmatprep.subr.bf16.mxu0 0
      %656 = vmatpush2.bf16.msra.mxu0 %v575
      %657 = vmatprep.subr.bf16.mxu0 0
      %658 = vmatpush2.bf16.msra.mxu0 %v574
      %659 = vmatprep.subr.bf16.mxu0 0
      %660 = vmatpush2.bf16.msra.mxu0 %v573
      %661 = vmatprep.mubr.bf16.mxu0 %v369
      %662 = vmatmul.mubr.bf16.gmra.mxu0 %v368
      %v663 = vpop.f32.mrf.mxu0
      %v664 = vadd.f32 0.0, %v663
      %v665 = vpop.f32.mrf.mxu0
      %v666 = vpop.f32.mrf.mxu0
      %v667 = vpop.f32.mrf.mxu0
      %668 = vdwg.mxu0
      %669 = vmatprep.subr.bf16.mxu0 0
      %670 = vmatpush1.bf16.msra.mxu0 %v588
      %671 = vmatprep.subr.bf16.mxu0 0
      %672 = vmatpush1.bf16.msra.mxu0 %v587
      %673 = vmatprep.subr.bf16.mxu0 0
      %674 = vmatpush1.bf16.msra.mxu0 %v586
      %675 = vmatprep.subr.bf16.mxu0 0
      %676 = vmatpush1.bf16.msra.mxu0 %v585
      %677 = vmatprep.subr.bf16.mxu0 0
      %678 = vmatpush1.bf16.msra.mxu0 %v584
      %679 = vmatprep.subr.bf16.mxu0 0
      %680 = vmatpush1.bf16.msra.mxu0 %v583
      %681 = vmatprep.subr.bf16.mxu0 0
      %682 = vmatpush1.bf16.msra.mxu0 %v582
      %683 = vmatprep.subr.bf16.mxu0 0
      %684 = vmatpush1.bf16.msra.mxu0 %v581
      %685 = vmatprep.subr.bf16.mxu0 0
      %686 = vmatpush2.bf16.msra.mxu0 %v596
      %687 = vmatprep.subr.bf16.mxu0 0
      %688 = vmatpush2.bf16.msra.mxu0 %v595
      %689 = vmatprep.subr.bf16.mxu0 0
      %690 = vmatpush2.bf16.msra.mxu0 %v594
      %691 = vmatprep.subr.bf16.mxu0 0
      %692 = vmatpush2.bf16.msra.mxu0 %v593
      %693 = vmatprep.subr.bf16.mxu0 0
      %694 = vmatpush2.bf16.msra.mxu0 %v592
      %695 = vmatprep.subr.bf16.mxu0 0
      %696 = vmatpush2.bf16.msra.mxu0 %v591
      %697 = vmatprep.subr.bf16.mxu0 0
      %698 = vmatpush2.bf16.msra.mxu0 %v590
      %699 = vmatprep.subr.bf16.mxu0 0
      %700 = vmatpush2.bf16.msra.mxu0 %v589
      %701 = vmatprep.mubr.bf16.mxu0 %v371
      %702 = vmatmul.mubr.bf16.gmra.mxu0 %v370
      %v703 = vpop.f32.mrf.mxu0
      %v704 = vadd.f32 %v664, %v703
      %v705 = vpop.f32.mrf.mxu0
      %v706 = vpop.f32.mrf.mxu0
      %v707 = vpop.f32.mrf.mxu0
      %708 = vdwg.mxu0
      %v773 = vunpack.c.l.b16 %v265
      %v774 = vunpack.c.l.b16 %v266
      %v775 = vunpack.c.l.b16 %v267
      %v776 = vunpack.c.l.b16 %v268
      %v777 = vunpack.c.l.b16 %v269
      %v778 = vunpack.c.l.b16 %v270
      %v779 = vunpack.c.l.b16 %v271
      %v780 = vunpack.c.l.b16 %v272
      %v781 = vunpack.c.l.b16 %v273
      %v782 = vunpack.c.l.b16 %v274
      %v783 = vunpack.c.l.b16 %v275
      %v784 = vunpack.c.l.b16 %v276
      %v785 = vunpack.c.l.b16 %v277
      %v786 = vunpack.c.l.b16 %v278
      %v787 = vunpack.c.l.b16 %v279
      %v788 = vunpack.c.l.b16 %v280
      %v789 = vunpack.c.l.b16 %v281
      %v790 = vunpack.c.l.b16 %v282
      %v791 = vunpack.c.l.b16 %v283
      %v792 = vunpack.c.l.b16 %v284
      %v793 = vunpack.c.l.b16 %v285
      %v794 = vunpack.c.l.b16 %v286
      %v795 = vunpack.c.l.b16 %v287
      %v796 = vunpack.c.l.b16 %v288
      %v797 = vunpack.c.l.b16 %v289
      %v798 = vunpack.c.l.b16 %v290
      %v799 = vunpack.c.l.b16 %v291
      %v800 = vunpack.c.l.b16 %v292
      %v801 = vunpack.c.l.b16 %v293
      %v802 = vunpack.c.l.b16 %v294
      %v803 = vunpack.c.l.b16 %v295
      %v804 = vunpack.c.l.b16 %v296
      %v805 = vunpack.c.l.b16 %v297
      %v806 = vunpack.c.l.b16 %v298
      %v807 = vunpack.c.l.b16 %v299
      %v808 = vunpack.c.l.b16 %v300
      %v809 = vunpack.c.l.b16 %v301
      %v810 = vunpack.c.l.b16 %v302
      %v811 = vunpack.c.l.b16 %v303
      %v812 = vunpack.c.l.b16 %v304
      %v813 = vunpack.c.l.b16 %v305
      %v814 = vunpack.c.l.b16 %v306
      %v815 = vunpack.c.l.b16 %v307
      %v816 = vunpack.c.l.b16 %v308
      %v817 = vunpack.c.l.b16 %v309
      %v818 = vunpack.c.l.b16 %v310
      %v819 = vunpack.c.l.b16 %v311
      %v820 = vunpack.c.l.b16 %v312
      %v821 = vunpack.c.l.b16 %v313
      %v822 = vunpack.c.l.b16 %v314
      %v823 = vunpack.c.l.b16 %v315
      %v824 = vunpack.c.l.b16 %v316
      %v825 = vunpack.c.l.b16 %v317
      %v826 = vunpack.c.l.b16 %v318
      %v827 = vunpack.c.l.b16 %v319
      %v828 = vunpack.c.l.b16 %v320
      %v829 = vunpack.c.l.b16 %v321
      %v830 = vunpack.c.l.b16 %v322
      %v831 = vunpack.c.l.b16 %v323
      %v832 = vunpack.c.l.b16 %v324
      %v833 = vunpack.c.l.b16 %v325
      %v834 = vunpack.c.l.b16 %v326
      %v835 = vunpack.c.l.b16 %v327
      %v836 = vunpack.c.l.b16 %v328
      %v837 = vpack.c.b16 %v774, %v773
      %v838 = vpack.c.b16 %v776, %v775
      %v839 = vpack.c.b16 %v778, %v777
      %v840 = vpack.c.b16 %v780, %v779
      %v841 = vpack.c.b16 %v782, %v781
      %v842 = vpack.c.b16 %v784, %v783
      %v843 = vpack.c.b16 %v786, %v785
      %v844 = vpack.c.b16 %v788, %v787
      %v845 = vpack.c.b16 %v790, %v789
      %v846 = vpack.c.b16 %v792, %v791
      %v847 = vpack.c.b16 %v794, %v793
      %v848 = vpack.c.b16 %v796, %v795
      %v849 = vpack.c.b16 %v798, %v797
      %v850 = vpack.c.b16 %v800, %v799
      %v851 = vpack.c.b16 %v802, %v801
      %v852 = vpack.c.b16 %v804, %v803
      %v853 = vpack.c.b16 %v806, %v805
      %v854 = vpack.c.b16 %v808, %v807
      %v855 = vpack.c.b16 %v810, %v809
      %v856 = vpack.c.b16 %v812, %v811
      %v857 = vpack.c.b16 %v814, %v813
      %v858 = vpack.c.b16 %v816, %v815
      %v859 = vpack.c.b16 %v818, %v817
      %v860 = vpack.c.b16 %v820, %v819
      %v861 = vpack.c.b16 %v822, %v821
      %v862 = vpack.c.b16 %v824, %v823
      %v863 = vpack.c.b16 %v826, %v825
      %v864 = vpack.c.b16 %v828, %v827
      %v865 = vpack.c.b16 %v830, %v829
      %v866 = vpack.c.b16 %v832, %v831
      %v867 = vpack.c.b16 %v834, %v833
      %v868 = vpack.c.b16 %v836, %v835
      %901 = vmatprep.subr.bf16.mxu0 0
      %902 = vmatpush1.bf16.msra.mxu0 %v844
      %903 = vmatprep.subr.bf16.mxu0 0
      %904 = vmatpush1.bf16.msra.mxu0 %v843
      %905 = vmatprep.subr.bf16.mxu0 0
      %906 = vmatpush1.bf16.msra.mxu0 %v842
      %907 = vmatprep.subr.bf16.mxu0 0
      %908 = vmatpush1.bf16.msra.mxu0 %v841
      %909 = vmatprep.subr.bf16.mxu0 0
      %910 = vmatpush1.bf16.msra.mxu0 %v840
      %911 = vmatprep.subr.bf16.mxu0 0
      %912 = vmatpush1.bf16.msra.mxu0 %v839
      %913 = vmatprep.subr.bf16.mxu0 0
      %914 = vmatpush1.bf16.msra.mxu0 %v838
      %915 = vmatprep.subr.bf16.mxu0 0
      %916 = vmatpush1.bf16.msra.mxu0 %v837
      %917 = vmatprep.subr.bf16.mxu0 0
      %918 = vmatpush2.bf16.msra.mxu0 %v852
      %919 = vmatprep.subr.bf16.mxu0 0
      %920 = vmatpush2.bf16.msra.mxu0 %v851
      %921 = vmatprep.subr.bf16.mxu0 0
      %922 = vmatpush2.bf16.msra.mxu0 %v850
      %923 = vmatprep.subr.bf16.mxu0 0
      %924 = vmatpush2.bf16.msra.mxu0 %v849
      %925 = vmatprep.subr.bf16.mxu0 0
      %926 = vmatpush2.bf16.msra.mxu0 %v848
      %927 = vmatprep.subr.bf16.mxu0 0
      %928 = vmatpush2.bf16.msra.mxu0 %v847
      %929 = vmatprep.subr.bf16.mxu0 0
      %930 = vmatpush2.bf16.msra.mxu0 %v846
      %931 = vmatprep.subr.bf16.mxu0 0
      %932 = vmatpush2.bf16.msra.mxu0 %v845
      %933 = vmatprep.mubr.bf16.mxu0 %v262
      %934 = vmatmul.mubr.bf16.gmra.mxu0 %v261
      %v935 = vpop.f32.mrf.mxu0
      %v936 = vadd.f32 %v704, %v935
      %v937 = vpop.f32.mrf.mxu0
      %v938 = vpop.f32.mrf.mxu0
      %v939 = vpop.f32.mrf.mxu0
      %940 = vdwg.mxu0
      %941 = vmatprep.subr.bf16.mxu0 0
      %942 = vmatpush1.bf16.msra.mxu0 %v860
      %943 = vmatprep.subr.bf16.mxu0 0
      %944 = vmatpush1.bf16.msra.mxu0 %v859
      %945 = vmatprep.subr.bf16.mxu0 0
      %946 = vmatpush1.bf16.msra.mxu0 %v858
      %947 = vmatprep.subr.bf16.mxu0 0
      %948 = vmatpush1.bf16.msra.mxu0 %v857
      %949 = vmatprep.subr.bf16.mxu0 0
      %950 = vmatpush1.bf16.msra.mxu0 %v856
      %951 = vmatprep.subr.bf16.mxu0 0
      %952 = vmatpush1.bf16.msra.mxu0 %v855
      %953 = vmatprep.subr.bf16.mxu0 0
      %954 = vmatpush1.bf16.msra.mxu0 %v854
      %955 = vmatprep.subr.bf16.mxu0 0
      %956 = vmatpush1.bf16.msra.mxu0 %v853
      %957 = vmatprep.subr.bf16.mxu0 0
      %958 = vmatpush2.bf16.msra.mxu0 %v868
      %959 = vmatprep.subr.bf16.mxu0 0
      %960 = vmatpush2.bf16.msra.mxu0 %v867
      %961 = vmatprep.subr.bf16.mxu0 0
      %962 = vmatpush2.bf16.msra.mxu0 %v866
      %963 = vmatprep.subr.bf16.mxu0 0
      %964 = vmatpush2.bf16.msra.mxu0 %v865
      %965 = vmatprep.subr.bf16.mxu0 0
      %966 = vmatpush2.bf16.msra.mxu0 %v864
      %967 = vmatprep.subr.bf16.mxu0 0
      %968 = vmatpush2.bf16.msra.mxu0 %v863
      %969 = vmatprep.subr.bf16.mxu0 0
      %970 = vmatpush2.bf16.msra.mxu0 %v862
      %971 = vmatprep.subr.bf16.mxu0 0
      %972 = vmatpush2.bf16.msra.mxu0 %v861
      %973 = vmatprep.mubr.bf16.mxu0 %v264
      %974 = vmatmul.mubr.bf16.gmra.mxu0 %v263
      %v975 = vpop.f32.mrf.mxu0
      %v976 = vadd.f32 %v936, %v975
      %v977 = vpop.f32.mrf.mxu0
      %v978 = vpop.f32.mrf.mxu0
      %v979 = vpop.f32.mrf.mxu0
      %980 = vdwg.mxu0
      %v984 = vunpack.c.l.s4 1983009808
      %v985 = vunpack.c.0.s8 %v984
      %v986 = vlaneseq
      %v987 = vshrl.u32 %v986, 7
      %v988 = vsub.s32 %v985, %v987
      %v989 = vrot.slane %v203, %v988
      %v991 = vunpack.c.l.s4 1983009808
      %v992 = vunpack.c.0.s8 %v991
      %v993 = vlaneseq
      %v994 = vshrl.u32 %v993, 7
      %v995 = vsub.s32 %v992, %v994
      %v996 = vrot.slane %v204, %v995
      %v997 = vcombine.low %v989, %v996
      %v998 = vcombine.low %v238, %v997
      %v999 = vcombine.high %v238, %v997
      %v1001 = vunpack.c.l.s4 1983009808
      %v1002 = vunpack.c.0.s8 %v1001
      %v1003 = vlaneseq
      %v1004 = vshrl.u32 %v1003, 7
      %v1005 = vsub.s32 %v1002, %v1004
      %v1006 = vrot.slane %v998, %v1005
      %v1008 = vunpack.c.l.s4 1983009808
      %v1009 = vunpack.c.0.s8 %v1008
      %v1010 = vlaneseq
      %v1011 = vshrl.u32 %v1010, 7
      %v1012 = vsub.s32 %v1009, %v1011
      %v1013 = vrot.slane %v999, %v1012
      %v1014 = vcombine.high %v1006, %v1006
      %v1015 = vcombine.high %v1013, %v1013
      %v1020 = vpack.c.bf16 %v1006, %v1006
      %v1021 = vpack.c.bf16 %v1014, %v1014
      %v1022 = vpack.c.bf16 %v1013, %v1013
      %v1023 = vpack.c.bf16 %v1015, %v1015
      %s1024 = scalar_lea.vmem %s1, 512
      %v1025 = vld [vmem:[%s1024] sm:$0xf]
      %v1026 = vld [vmem:[%s1024 + $0x4] sm:$0xf]
      %v1027 = vld [vmem:[%s1024 + $0x8] sm:$0xf]
      %v1028 = vld [vmem:[%s1024 + $0xc] sm:$0xf]
      %v1029 = vld [vmem:[%s1024 + $0x10] sm:$0xf]
      %v1030 = vld [vmem:[%s1024 + $0x14] sm:$0xf]
      %v1031 = vld [vmem:[%s1024 + $0x18] sm:$0xf]
      %v1032 = vld [vmem:[%s1024 + $0x1c] sm:$0xf]
      %v1033 = vld [vmem:[%s1024 + $0x20] sm:$0xf]
      %v1034 = vld [vmem:[%s1024 + $0x24] sm:$0xf]
      %v1035 = vld [vmem:[%s1024 + $0x28] sm:$0xf]
      %v1036 = vld [vmem:[%s1024 + $0x2c] sm:$0xf]
      %v1037 = vld [vmem:[%s1024 + $0x30] sm:$0xf]
      %v1038 = vld [vmem:[%s1024 + $0x34] sm:$0xf]
      %v1039 = vld [vmem:[%s1024 + $0x38] sm:$0xf]
      %v1040 = vld [vmem:[%s1024 + $0x3c] sm:$0xf]
      %v1041 = vld [vmem:[%s1024 + $0x40] sm:$0xf]
      %v1042 = vld [vmem:[%s1024 + $0x44] sm:$0xf]
      %v1043 = vld [vmem:[%s1024 + $0x48] sm:$0xf]
      %v1044 = vld [vmem:[%s1024 + $0x4c] sm:$0xf]
      %v1045 = vld [vmem:[%s1024 + $0x50] sm:$0xf]
      %v1046 = vld [vmem:[%s1024 + $0x54] sm:$0xf]
      %v1047 = vld [vmem:[%s1024 + $0x58] sm:$0xf]
      %v1048 = vld [vmem:[%s1024 + $0x5c] sm:$0xf]
      %v1049 = vld [vmem:[%s1024 + $0x60] sm:$0xf]
      %v1050 = vld [vmem:[%s1024 + $0x64] sm:$0xf]
      %v1051 = vld [vmem:[%s1024 + $0x68] sm:$0xf]
      %v1052 = vld [vmem:[%s1024 + $0x6c] sm:$0xf]
      %v1053 = vld [vmem:[%s1024 + $0x70] sm:$0xf]
      %v1054 = vld [vmem:[%s1024 + $0x74] sm:$0xf]
      %v1055 = vld [vmem:[%s1024 + $0x78] sm:$0xf]
      %v1056 = vld [vmem:[%s1024 + $0x7c] sm:$0xf]
      %v1057 = vld [vmem:[%s1024 + $0x80] sm:$0xf]
      %v1058 = vld [vmem:[%s1024 + $0x84] sm:$0xf]
      %v1059 = vld [vmem:[%s1024 + $0x88] sm:$0xf]
      %v1060 = vld [vmem:[%s1024 + $0x8c] sm:$0xf]
      %v1061 = vld [vmem:[%s1024 + $0x90] sm:$0xf]
      %v1062 = vld [vmem:[%s1024 + $0x94] sm:$0xf]
      %v1063 = vld [vmem:[%s1024 + $0x98] sm:$0xf]
      %v1064 = vld [vmem:[%s1024 + $0x9c] sm:$0xf]
      %v1065 = vld [vmem:[%s1024 + $0xa0] sm:$0xf]
      %v1066 = vld [vmem:[%s1024 + $0xa4] sm:$0xf]
      %v1067 = vld [vmem:[%s1024 + $0xa8] sm:$0xf]
      %v1068 = vld [vmem:[%s1024 + $0xac] sm:$0xf]
      %v1069 = vld [vmem:[%s1024 + $0xb0] sm:$0xf]
      %v1070 = vld [vmem:[%s1024 + $0xb4] sm:$0xf]
      %v1071 = vld [vmem:[%s1024 + $0xb8] sm:$0xf]
      %v1072 = vld [vmem:[%s1024 + $0xbc] sm:$0xf]
      %v1073 = vld [vmem:[%s1024 + $0xc0] sm:$0xf]
      %v1074 = vld [vmem:[%s1024 + $0xc4] sm:$0xf]
      %v1075 = vld [vmem:[%s1024 + $0xc8] sm:$0xf]
      %v1076 = vld [vmem:[%s1024 + $0xcc] sm:$0xf]
      %v1077 = vld [vmem:[%s1024 + $0xd0] sm:$0xf]
      %v1078 = vld [vmem:[%s1024 + $0xd4] sm:$0xf]
      %v1079 = vld [vmem:[%s1024 + $0xd8] sm:$0xf]
      %v1080 = vld [vmem:[%s1024 + $0xdc] sm:$0xf]
      %v1081 = vld [vmem:[%s1024 + $0xe0] sm:$0xf]
      %v1082 = vld [vmem:[%s1024 + $0xe4] sm:$0xf]
      %v1083 = vld [vmem:[%s1024 + $0xe8] sm:$0xf]
      %v1084 = vld [vmem:[%s1024 + $0xec] sm:$0xf]
      %v1085 = vld [vmem:[%s1024 + $0xf0] sm:$0xf]
      %v1086 = vld [vmem:[%s1024 + $0xf4] sm:$0xf]
      %v1087 = vld [vmem:[%s1024 + $0xf8] sm:$0xf]
      %v1088 = vld [vmem:[%s1024 + $0xfc] sm:$0xf]
      %v1153 = vunpack.c.l.b16 %v1025
      %v1154 = vunpack.c.l.b16 %v1026
      %v1155 = vunpack.c.l.b16 %v1027
      %v1156 = vunpack.c.l.b16 %v1028
      %v1157 = vunpack.c.l.b16 %v1029
      %v1158 = vunpack.c.l.b16 %v1030
      %v1159 = vunpack.c.l.b16 %v1031
      %v1160 = vunpack.c.l.b16 %v1032
      %v1161 = vunpack.c.l.b16 %v1033
      %v1162 = vunpack.c.l.b16 %v1034
      %v1163 = vunpack.c.l.b16 %v1035
      %v1164 = vunpack.c.l.b16 %v1036
      %v1165 = vunpack.c.l.b16 %v1037
      %v1166 = vunpack.c.l.b16 %v1038
      %v1167 = vunpack.c.l.b16 %v1039
      %v1168 = vunpack.c.l.b16 %v1040
      %v1169 = vunpack.c.l.b16 %v1041
      %v1170 = vunpack.c.l.b16 %v1042
      %v1171 = vunpack.c.l.b16 %v1043
      %v1172 = vunpack.c.l.b16 %v1044
      %v1173 = vunpack.c.l.b16 %v1045
      %v1174 = vunpack.c.l.b16 %v1046
      %v1175 = vunpack.c.l.b16 %v1047
      %v1176 = vunpack.c.l.b16 %v1048
      %v1177 = vunpack.c.l.b16 %v1049
      %v1178 = vunpack.c.l.b16 %v1050
      %v1179 = vunpack.c.l.b16 %v1051
      %v1180 = vunpack.c.l.b16 %v1052
      %v1181 = vunpack.c.l.b16 %v1053
      %v1182 = vunpack.c.l.b16 %v1054
      %v1183 = vunpack.c.l.b16 %v1055
      %v1184 = vunpack.c.l.b16 %v1056
      %v1185 = vunpack.c.l.b16 %v1057
      %v1186 = vunpack.c.l.b16 %v1058
      %v1187 = vunpack.c.l.b16 %v1059
      %v1188 = vunpack.c.l.b16 %v1060
      %v1189 = vunpack.c.l.b16 %v1061
      %v1190 = vunpack.c.l.b16 %v1062
      %v1191 = vunpack.c.l.b16 %v1063
      %v1192 = vunpack.c.l.b16 %v1064
      %v1193 = vunpack.c.l.b16 %v1065
      %v1194 = vunpack.c.l.b16 %v1066
      %v1195 = vunpack.c.l.b16 %v1067
      %v1196 = vunpack.c.l.b16 %v1068
      %v1197 = vunpack.c.l.b16 %v1069
      %v1198 = vunpack.c.l.b16 %v1070
      %v1199 = vunpack.c.l.b16 %v1071
      %v1200 = vunpack.c.l.b16 %v1072
      %v1201 = vunpack.c.l.b16 %v1073
      %v1202 = vunpack.c.l.b16 %v1074
      %v1203 = vunpack.c.l.b16 %v1075
      %v1204 = vunpack.c.l.b16 %v1076
      %v1205 = vunpack.c.l.b16 %v1077
      %v1206 = vunpack.c.l.b16 %v1078
      %v1207 = vunpack.c.l.b16 %v1079
      %v1208 = vunpack.c.l.b16 %v1080
      %v1209 = vunpack.c.l.b16 %v1081
      %v1210 = vunpack.c.l.b16 %v1082
      %v1211 = vunpack.c.l.b16 %v1083
      %v1212 = vunpack.c.l.b16 %v1084
      %v1213 = vunpack.c.l.b16 %v1085
      %v1214 = vunpack.c.l.b16 %v1086
      %v1215 = vunpack.c.l.b16 %v1087
      %v1216 = vunpack.c.l.b16 %v1088
      %v1217 = vpack.c.b16 %v1154, %v1153
      %v1218 = vpack.c.b16 %v1156, %v1155
      %v1219 = vpack.c.b16 %v1158, %v1157
      %v1220 = vpack.c.b16 %v1160, %v1159
      %v1221 = vpack.c.b16 %v1162, %v1161
      %v1222 = vpack.c.b16 %v1164, %v1163
      %v1223 = vpack.c.b16 %v1166, %v1165
      %v1224 = vpack.c.b16 %v1168, %v1167
      %v1225 = vpack.c.b16 %v1170, %v1169
      %v1226 = vpack.c.b16 %v1172, %v1171
      %v1227 = vpack.c.b16 %v1174, %v1173
      %v1228 = vpack.c.b16 %v1176, %v1175
      %v1229 = vpack.c.b16 %v1178, %v1177
      %v1230 = vpack.c.b16 %v1180, %v1179
      %v1231 = vpack.c.b16 %v1182, %v1181
      %v1232 = vpack.c.b16 %v1184, %v1183
      %v1233 = vpack.c.b16 %v1186, %v1185
      %v1234 = vpack.c.b16 %v1188, %v1187
      %v1235 = vpack.c.b16 %v1190, %v1189
      %v1236 = vpack.c.b16 %v1192, %v1191
      %v1237 = vpack.c.b16 %v1194, %v1193
      %v1238 = vpack.c.b16 %v1196, %v1195
      %v1239 = vpack.c.b16 %v1198, %v1197
      %v1240 = vpack.c.b16 %v1200, %v1199
      %v1241 = vpack.c.b16 %v1202, %v1201
      %v1242 = vpack.c.b16 %v1204, %v1203
      %v1243 = vpack.c.b16 %v1206, %v1205
      %v1244 = vpack.c.b16 %v1208, %v1207
      %v1245 = vpack.c.b16 %v1210, %v1209
      %v1246 = vpack.c.b16 %v1212, %v1211
      %v1247 = vpack.c.b16 %v1214, %v1213
      %v1248 = vpack.c.b16 %v1216, %v1215
      %1281 = vmatprep.subr.bf16.mxu0 0
      %1282 = vmatpush1.bf16.msra.mxu0 %v1224
      %1283 = vmatprep.subr.bf16.mxu0 0
      %1284 = vmatpush1.bf16.msra.mxu0 %v1223
      %1285 = vmatprep.subr.bf16.mxu0 0
      %1286 = vmatpush1.bf16.msra.mxu0 %v1222
      %1287 = vmatprep.subr.bf16.mxu0 0
      %1288 = vmatpush1.bf16.msra.mxu0 %v1221
      %1289 = vmatprep.subr.bf16.mxu0 0
      %1290 = vmatpush1.bf16.msra.mxu0 %v1220
      %1291 = vmatprep.subr.bf16.mxu0 0
      %1292 = vmatpush1.bf16.msra.mxu0 %v1219
      %1293 = vmatprep.subr.bf16.mxu0 0
      %1294 = vmatpush1.bf16.msra.mxu0 %v1218
      %1295 = vmatprep.subr.bf16.mxu0 0
      %1296 = vmatpush1.bf16.msra.mxu0 %v1217
      %1297 = vmatprep.subr.bf16.mxu0 0
      %1298 = vmatpush2.bf16.msra.mxu0 %v1232
      %1299 = vmatprep.subr.bf16.mxu0 0
      %1300 = vmatpush2.bf16.msra.mxu0 %v1231
      %1301 = vmatprep.subr.bf16.mxu0 0
      %1302 = vmatpush2.bf16.msra.mxu0 %v1230
      %1303 = vmatprep.subr.bf16.mxu0 0
      %1304 = vmatpush2.bf16.msra.mxu0 %v1229
      %1305 = vmatprep.subr.bf16.mxu0 0
      %1306 = vmatpush2.bf16.msra.mxu0 %v1228
      %1307 = vmatprep.subr.bf16.mxu0 0
      %1308 = vmatpush2.bf16.msra.mxu0 %v1227
      %1309 = vmatprep.subr.bf16.mxu0 0
      %1310 = vmatpush2.bf16.msra.mxu0 %v1226
      %1311 = vmatprep.subr.bf16.mxu0 0
      %1312 = vmatpush2.bf16.msra.mxu0 %v1225
      %1313 = vmatprep.mubr.bf16.mxu0 %v1021
      %1314 = vmatmul.mubr.bf16.gmra.mxu0 %v1020
      %v1315 = vpop.f32.mrf.mxu0
      %v1316 = vadd.f32 0.0, %v1315
      %v1317 = vpop.f32.mrf.mxu0
      %v1318 = vpop.f32.mrf.mxu0
      %v1319 = vpop.f32.mrf.mxu0
      %1320 = vdwg.mxu0
      %1321 = vmatprep.subr.bf16.mxu0 0
      %1322 = vmatpush1.bf16.msra.mxu0 %v1240
      %1323 = vmatprep.subr.bf16.mxu0 0
      %1324 = vmatpush1.bf16.msra.mxu0 %v1239
      %1325 = vmatprep.subr.bf16.mxu0 0
      %1326 = vmatpush1.bf16.msra.mxu0 %v1238
      %1327 = vmatprep.subr.bf16.mxu0 0
      %1328 = vmatpush1.bf16.msra.mxu0 %v1237
      %1329 = vmatprep.subr.bf16.mxu0 0
      %1330 = vmatpush1.bf16.msra.mxu0 %v1236
      %1331 = vmatprep.subr.bf16.mxu0 0
      %1332 = vmatpush1.bf16.msra.mxu0 %v1235
      %1333 = vmatprep.subr.bf16.mxu0 0
      %1334 = vmatpush1.bf16.msra.mxu0 %v1234
      %1335 = vmatprep.subr.bf16.mxu0 0
      %1336 = vmatpush1.bf16.msra.mxu0 %v1233
      %1337 = vmatprep.subr.bf16.mxu0 0
      %1338 = vmatpush2.bf16.msra.mxu0 %v1248
      %1339 = vmatprep.subr.bf16.mxu0 0
      %1340 = vmatpush2.bf16.msra.mxu0 %v1247
      %1341 = vmatprep.subr.bf16.mxu0 0
      %1342 = vmatpush2.bf16.msra.mxu0 %v1246
      %1343 = vmatprep.subr.bf16.mxu0 0
      %1344 = vmatpush2.bf16.msra.mxu0 %v1245
      %1345 = vmatprep.subr.bf16.mxu0 0
      %1346 = vmatpush2.bf16.msra.mxu0 %v1244
      %1347 = vmatprep.subr.bf16.mxu0 0
      %1348 = vmatpush2.bf16.msra.mxu0 %v1243
      %1349 = vmatprep.subr.bf16.mxu0 0
      %1350 = vmatpush2.bf16.msra.mxu0 %v1242
      %1351 = vmatprep.subr.bf16.mxu0 0
      %1352 = vmatpush2.bf16.msra.mxu0 %v1241
      %1353 = vmatprep.mubr.bf16.mxu0 %v1023
      %1354 = vmatmul.mubr.bf16.gmra.mxu0 %v1022
      %v1355 = vpop.f32.mrf.mxu0
      %v1356 = vadd.f32 %v1316, %v1355
      %v1357 = vpop.f32.mrf.mxu0
      %v1358 = vpop.f32.mrf.mxu0
      %v1359 = vpop.f32.mrf.mxu0
      %1360 = vdwg.mxu0
      %v1361 = vadd.f32 %v976, %v1356
      %v1362 = vcombine.high %v989, %v996
      %v1363 = vrot.slane %v997, 7
      %v1364 = vrot.slane %v1363, 2
      %v1365 = vrot.slane %v1362, 7
      %v1366 = vsel %vm337, %v1364, %v1365
      %v1367 = vcombine.low %v345, %v1366
      %v1368 = vcombine.high %v345, %v1366
      %v1370 = vunpack.c.l.s4 1983009808
      %v1371 = vunpack.c.0.s8 %v1370
      %v1372 = vlaneseq
      %v1373 = vshrl.u32 %v1372, 7
      %v1374 = vsub.s32 %v1371, %v1373
      %v1375 = vrot.slane %v1367, %v1374
      %v1377 = vunpack.c.l.s4 1983009808
      %v1378 = vunpack.c.0.s8 %v1377
      %v1379 = vlaneseq
      %v1380 = vshrl.u32 %v1379, 7
      %v1381 = vsub.s32 %v1378, %v1380
      %v1382 = vrot.slane %v1368, %v1381
      %v1383 = vcombine.high %v1375, %v1375
      %v1384 = vcombine.high %v1382, %v1382
      %v1389 = vpack.c.bf16 %v1375, %v1375
      %v1390 = vpack.c.bf16 %v1383, %v1383
      %v1391 = vpack.c.bf16 %v1382, %v1382
      %v1392 = vpack.c.bf16 %v1384, %v1384
      %s1393 = scalar_lea.vmem %s1, 768
      %v1394 = vld [vmem:[%s1393] sm:$0xf]
      %v1395 = vld [vmem:[%s1393 + $0x4] sm:$0xf]
      %v1396 = vld [vmem:[%s1393 + $0x8] sm:$0xf]
      %v1397 = vld [vmem:[%s1393 + $0xc] sm:$0xf]
      %v1398 = vld [vmem:[%s1393 + $0x10] sm:$0xf]
      %v1399 = vld [vmem:[%s1393 + $0x14] sm:$0xf]
      %v1400 = vld [vmem:[%s1393 + $0x18] sm:$0xf]
      %v1401 = vld [vmem:[%s1393 + $0x1c] sm:$0xf]
      %v1402 = vld [vmem:[%s1393 + $0x20] sm:$0xf]
      %v1403 = vld [vmem:[%s1393 + $0x24] sm:$0xf]
      %v1404 = vld [vmem:[%s1393 + $0x28] sm:$0xf]
      %v1405 = vld [vmem:[%s1393 + $0x2c] sm:$0xf]
      %v1406 = vld [vmem:[%s1393 + $0x30] sm:$0xf]
      %v1407 = vld [vmem:[%s1393 + $0x34] sm:$0xf]
      %v1408 = vld [vmem:[%s1393 + $0x38] sm:$0xf]
      %v1409 = vld [vmem:[%s1393 + $0x3c] sm:$0xf]
      %v1410 = vld [vmem:[%s1393 + $0x40] sm:$0xf]
      %v1411 = vld [vmem:[%s1393 + $0x44] sm:$0xf]
      %v1412 = vld [vmem:[%s1393 + $0x48] sm:$0xf]
      %v1413 = vld [vmem:[%s1393 + $0x4c] sm:$0xf]
      %v1414 = vld [vmem:[%s1393 + $0x50] sm:$0xf]
      %v1415 = vld [vmem:[%s1393 + $0x54] sm:$0xf]
      %v1416 = vld [vmem:[%s1393 + $0x58] sm:$0xf]
      %v1417 = vld [vmem:[%s1393 + $0x5c] sm:$0xf]
      %v1418 = vld [vmem:[%s1393 + $0x60] sm:$0xf]
      %v1419 = vld [vmem:[%s1393 + $0x64] sm:$0xf]
      %v1420 = vld [vmem:[%s1393 + $0x68] sm:$0xf]
      %v1421 = vld [vmem:[%s1393 + $0x6c] sm:$0xf]
      %v1422 = vld [vmem:[%s1393 + $0x70] sm:$0xf]
      %v1423 = vld [vmem:[%s1393 + $0x74] sm:$0xf]
      %v1424 = vld [vmem:[%s1393 + $0x78] sm:$0xf]
      %v1425 = vld [vmem:[%s1393 + $0x7c] sm:$0xf]
      %v1426 = vld [vmem:[%s1393 + $0x80] sm:$0xf]
      %v1427 = vld [vmem:[%s1393 + $0x84] sm:$0xf]
      %v1428 = vld [vmem:[%s1393 + $0x88] sm:$0xf]
      %v1429 = vld [vmem:[%s1393 + $0x8c] sm:$0xf]
      %v1430 = vld [vmem:[%s1393 + $0x90] sm:$0xf]
      %v1431 = vld [vmem:[%s1393 + $0x94] sm:$0xf]
      %v1432 = vld [vmem:[%s1393 + $0x98] sm:$0xf]
      %v1433 = vld [vmem:[%s1393 + $0x9c] sm:$0xf]
      %v1434 = vld [vmem:[%s1393 + $0xa0] sm:$0xf]
      %v1435 = vld [vmem:[%s1393 + $0xa4] sm:$0xf]
      %v1436 = vld [vmem:[%s1393 + $0xa8] sm:$0xf]
      %v1437 = vld [vmem:[%s1393 + $0xac] sm:$0xf]
      %v1438 = vld [vmem:[%s1393 + $0xb0] sm:$0xf]
      %v1439 = vld [vmem:[%s1393 + $0xb4] sm:$0xf]
      %v1440 = vld [vmem:[%s1393 + $0xb8] sm:$0xf]
      %v1441 = vld [vmem:[%s1393 + $0xbc] sm:$0xf]
      %v1442 = vld [vmem:[%s1393 + $0xc0] sm:$0xf]
      %v1443 = vld [vmem:[%s1393 + $0xc4] sm:$0xf]
      %v1444 = vld [vmem:[%s1393 + $0xc8] sm:$0xf]
      %v1445 = vld [vmem:[%s1393 + $0xcc] sm:$0xf]
      %v1446 = vld [vmem:[%s1393 + $0xd0] sm:$0xf]
      %v1447 = vld [vmem:[%s1393 + $0xd4] sm:$0xf]
      %v1448 = vld [vmem:[%s1393 + $0xd8] sm:$0xf]
      %v1449 = vld [vmem:[%s1393 + $0xdc] sm:$0xf]
      %v1450 = vld [vmem:[%s1393 + $0xe0] sm:$0xf]
      %v1451 = vld [vmem:[%s1393 + $0xe4] sm:$0xf]
      %v1452 = vld [vmem:[%s1393 + $0xe8] sm:$0xf]
      %v1453 = vld [vmem:[%s1393 + $0xec] sm:$0xf]
      %v1454 = vld [vmem:[%s1393 + $0xf0] sm:$0xf]
      %v1455 = vld [vmem:[%s1393 + $0xf4] sm:$0xf]
      %v1456 = vld [vmem:[%s1393 + $0xf8] sm:$0xf]
      %v1457 = vld [vmem:[%s1393 + $0xfc] sm:$0xf]
      %v1522 = vunpack.c.l.b16 %v1394
      %v1523 = vunpack.c.l.b16 %v1395
      %v1524 = vunpack.c.l.b16 %v1396
      %v1525 = vunpack.c.l.b16 %v1397
      %v1526 = vunpack.c.l.b16 %v1398
      %v1527 = vunpack.c.l.b16 %v1399
      %v1528 = vunpack.c.l.b16 %v1400
      %v1529 = vunpack.c.l.b16 %v1401
      %v1530 = vunpack.c.l.b16 %v1402
      %v1531 = vunpack.c.l.b16 %v1403
      %v1532 = vunpack.c.l.b16 %v1404
      %v1533 = vunpack.c.l.b16 %v1405
      %v1534 = vunpack.c.l.b16 %v1406
      %v1535 = vunpack.c.l.b16 %v1407
      %v1536 = vunpack.c.l.b16 %v1408
      %v1537 = vunpack.c.l.b16 %v1409
      %v1538 = vunpack.c.l.b16 %v1410
      %v1539 = vunpack.c.l.b16 %v1411
      %v1540 = vunpack.c.l.b16 %v1412
      %v1541 = vunpack.c.l.b16 %v1413
      %v1542 = vunpack.c.l.b16 %v1414
      %v1543 = vunpack.c.l.b16 %v1415
      %v1544 = vunpack.c.l.b16 %v1416
      %v1545 = vunpack.c.l.b16 %v1417
      %v1546 = vunpack.c.l.b16 %v1418
      %v1547 = vunpack.c.l.b16 %v1419
      %v1548 = vunpack.c.l.b16 %v1420
      %v1549 = vunpack.c.l.b16 %v1421
      %v1550 = vunpack.c.l.b16 %v1422
      %v1551 = vunpack.c.l.b16 %v1423
      %v1552 = vunpack.c.l.b16 %v1424
      %v1553 = vunpack.c.l.b16 %v1425
      %v1554 = vunpack.c.l.b16 %v1426
      %v1555 = vunpack.c.l.b16 %v1427
      %v1556 = vunpack.c.l.b16 %v1428
      %v1557 = vunpack.c.l.b16 %v1429
      %v1558 = vunpack.c.l.b16 %v1430
      %v1559 = vunpack.c.l.b16 %v1431
      %v1560 = vunpack.c.l.b16 %v1432
      %v1561 = vunpack.c.l.b16 %v1433
      %v1562 = vunpack.c.l.b16 %v1434
      %v1563 = vunpack.c.l.b16 %v1435
      %v1564 = vunpack.c.l.b16 %v1436
      %v1565 = vunpack.c.l.b16 %v1437
      %v1566 = vunpack.c.l.b16 %v1438
      %v1567 = vunpack.c.l.b16 %v1439
      %v1568 = vunpack.c.l.b16 %v1440
      %v1569 = vunpack.c.l.b16 %v1441
      %v1570 = vunpack.c.l.b16 %v1442
      %v1571 = vunpack.c.l.b16 %v1443
      %v1572 = vunpack.c.l.b16 %v1444
      %v1573 = vunpack.c.l.b16 %v1445
      %v1574 = vunpack.c.l.b16 %v1446
      %v1575 = vunpack.c.l.b16 %v1447
      %v1576 = vunpack.c.l.b16 %v1448
      %v1577 = vunpack.c.l.b16 %v1449
      %v1578 = vunpack.c.l.b16 %v1450
      %v1579 = vunpack.c.l.b16 %v1451
      %v1580 = vunpack.c.l.b16 %v1452
      %v1581 = vunpack.c.l.b16 %v1453
      %v1582 = vunpack.c.l.b16 %v1454
      %v1583 = vunpack.c.l.b16 %v1455
      %v1584 = vunpack.c.l.b16 %v1456
      %v1585 = vunpack.c.l.b16 %v1457
      %v1586 = vpack.c.b16 %v1523, %v1522
      %v1587 = vpack.c.b16 %v1525, %v1524
      %v1588 = vpack.c.b16 %v1527, %v1526
      %v1589 = vpack.c.b16 %v1529, %v1528
      %v1590 = vpack.c.b16 %v1531, %v1530
      %v1591 = vpack.c.b16 %v1533, %v1532
      %v1592 = vpack.c.b16 %v1535, %v1534
      %v1593 = vpack.c.b16 %v1537, %v1536
      %v1594 = vpack.c.b16 %v1539, %v1538
      %v1595 = vpack.c.b16 %v1541, %v1540
      %v1596 = vpack.c.b16 %v1543, %v1542
      %v1597 = vpack.c.b16 %v1545, %v1544
      %v1598 = vpack.c.b16 %v1547, %v1546
      %v1599 = vpack.c.b16 %v1549, %v1548
      %v1600 = vpack.c.b16 %v1551, %v1550
      %v1601 = vpack.c.b16 %v1553, %v1552
      %v1602 = vpack.c.b16 %v1555, %v1554
      %v1603 = vpack.c.b16 %v1557, %v1556
      %v1604 = vpack.c.b16 %v1559, %v1558
      %v1605 = vpack.c.b16 %v1561, %v1560
      %v1606 = vpack.c.b16 %v1563, %v1562
      %v1607 = vpack.c.b16 %v1565, %v1564
      %v1608 = vpack.c.b16 %v1567, %v1566
      %v1609 = vpack.c.b16 %v1569, %v1568
      %v1610 = vpack.c.b16 %v1571, %v1570
      %v1611 = vpack.c.b16 %v1573, %v1572
      %v1612 = vpack.c.b16 %v1575, %v1574
      %v1613 = vpack.c.b16 %v1577, %v1576
      %v1614 = vpack.c.b16 %v1579, %v1578
      %v1615 = vpack.c.b16 %v1581, %v1580
      %v1616 = vpack.c.b16 %v1583, %v1582
      %v1617 = vpack.c.b16 %v1585, %v1584
      %1650 = vmatprep.subr.bf16.mxu0 0
      %1651 = vmatpush1.bf16.msra.mxu0 %v1593
      %1652 = vmatprep.subr.bf16.mxu0 0
      %1653 = vmatpush1.bf16.msra.mxu0 %v1592
      %1654 = vmatprep.subr.bf16.mxu0 0
      %1655 = vmatpush1.bf16.msra.mxu0 %v1591
      %1656 = vmatprep.subr.bf16.mxu0 0
      %1657 = vmatpush1.bf16.msra.mxu0 %v1590
      %1658 = vmatprep.subr.bf16.mxu0 0
      %1659 = vmatpush1.bf16.msra.mxu0 %v1589
      %1660 = vmatprep.subr.bf16.mxu0 0
      %1661 = vmatpush1.bf16.msra.mxu0 %v1588
      %1662 = vmatprep.subr.bf16.mxu0 0
      %1663 = vmatpush1.bf16.msra.mxu0 %v1587
      %1664 = vmatprep.subr.bf16.mxu0 0
      %1665 = vmatpush1.bf16.msra.mxu0 %v1586
      %1666 = vmatprep.subr.bf16.mxu0 0
      %1667 = vmatpush2.bf16.msra.mxu0 %v1601
      %1668 = vmatprep.subr.bf16.mxu0 0
      %1669 = vmatpush2.bf16.msra.mxu0 %v1600
      %1670 = vmatprep.subr.bf16.mxu0 0
      %1671 = vmatpush2.bf16.msra.mxu0 %v1599
      %1672 = vmatprep.subr.bf16.mxu0 0
      %1673 = vmatpush2.bf16.msra.mxu0 %v1598
      %1674 = vmatprep.subr.bf16.mxu0 0
      %1675 = vmatpush2.bf16.msra.mxu0 %v1597
      %1676 = vmatprep.subr.bf16.mxu0 0
      %1677 = vmatpush2.bf16.msra.mxu0 %v1596
      %1678 = vmatprep.subr.bf16.mxu0 0
      %1679 = vmatpush2.bf16.msra.mxu0 %v1595
      %1680 = vmatprep.subr.bf16.mxu0 0
      %1681 = vmatpush2.bf16.msra.mxu0 %v1594
      %1682 = vmatprep.mubr.bf16.mxu0 %v1390
      %1683 = vmatmul.mubr.bf16.gmra.mxu0 %v1389
      %v1684 = vpop.f32.mrf.mxu0
      %v1685 = vadd.f32 0.0, %v1684
      %v1686 = vpop.f32.mrf.mxu0
      %v1687 = vpop.f32.mrf.mxu0
      %v1688 = vpop.f32.mrf.mxu0
      %1689 = vdwg.mxu0
      %1690 = vmatprep.subr.bf16.mxu0 0
      %1691 = vmatpush1.bf16.msra.mxu0 %v1609
      %1692 = vmatprep.subr.bf16.mxu0 0
      %1693 = vmatpush1.bf16.msra.mxu0 %v1608
      %1694 = vmatprep.subr.bf16.mxu0 0
      %1695 = vmatpush1.bf16.msra.mxu0 %v1607
      %1696 = vmatprep.subr.bf16.mxu0 0
      %1697 = vmatpush1.bf16.msra.mxu0 %v1606
      %1698 = vmatprep.subr.bf16.mxu0 0
      %1699 = vmatpush1.bf16.msra.mxu0 %v1605
      %1700 = vmatprep.subr.bf16.mxu0 0
      %1701 = vmatpush1.bf16.msra.mxu0 %v1604
      %1702 = vmatprep.subr.bf16.mxu0 0
      %1703 = vmatpush1.bf16.msra.mxu0 %v1603
      %1704 = vmatprep.subr.bf16.mxu0 0
      %1705 = vmatpush1.bf16.msra.mxu0 %v1602
      %1706 = vmatprep.subr.bf16.mxu0 0
      %1707 = vmatpush2.bf16.msra.mxu0 %v1617
      %1708 = vmatprep.subr.bf16.mxu0 0
      %1709 = vmatpush2.bf16.msra.mxu0 %v1616
      %1710 = vmatprep.subr.bf16.mxu0 0
      %1711 = vmatpush2.bf16.msra.mxu0 %v1615
      %1712 = vmatprep.subr.bf16.mxu0 0
      %1713 = vmatpush2.bf16.msra.mxu0 %v1614
      %1714 = vmatprep.subr.bf16.mxu0 0
      %1715 = vmatpush2.bf16.msra.mxu0 %v1613
      %1716 = vmatprep.subr.bf16.mxu0 0
      %1717 = vmatpush2.bf16.msra.mxu0 %v1612
      %1718 = vmatprep.subr.bf16.mxu0 0
      %1719 = vmatpush2.bf16.msra.mxu0 %v1611
      %1720 = vmatprep.subr.bf16.mxu0 0
      %1721 = vmatpush2.bf16.msra.mxu0 %v1610
      %1722 = vmatprep.mubr.bf16.mxu0 %v1392
      %1723 = vmatmul.mubr.bf16.gmra.mxu0 %v1391
      %v1724 = vpop.f32.mrf.mxu0
      %v1725 = vadd.f32 %v1685, %v1724
      %v1726 = vpop.f32.mrf.mxu0
      %v1727 = vpop.f32.mrf.mxu0
      %v1728 = vpop.f32.mrf.mxu0
      %1729 = vdwg.mxu0
      %v1730 = vadd.f32 %v1361, %v1725
      %1731 = vst [vmem:[%s175] sm:$0xf] %v1730
      %vm1732 = vcmask 1043456
      %v1733 = vsel %vm1732, %v1730, 0.0
      %v1734 = vrot.slane %v1733, 4
      %v1735 = vadd.f32 %v1733, %v1734
      %v1736 = vrot.slane %v1735, 2
      %v1737 = vadd.f32 %v1735, %v1736
      %v1738 = vrot.slane %v1737, 1
      %v1739 = vadd.f32 %v1737, %v1738
      %v1740 = vmul.f32 %v1730, %v1730
      %v1741 = vsel %vm1732, %v1740, 0.0
      %v1742 = vrot.slane %v1741, 4
      %v1743 = vadd.f32 %v1741, %v1742
      %v1744 = vrot.slane %v1743, 2
      %v1745 = vadd.f32 %v1743, %v1744
      %v1746 = vrot.slane %v1745, 1
      %v1747 = vadd.f32 %v1745, %v1746
      %v1748 = vsel %vm331, %v1739, %v1747
      %1749 = vst [vmem:[%s179] sm:$0x3] %v1748
      %p1750 = scmp.lt.s32.totalorder %s15, 1
      %s1751 = scalar_select %p1750, %s15, 1
      %s1752 = smul.addr %s1751, 4
      %s1753 = scalar_lea.vmem %s2, %s1752
      %p1754 = scmp.lt.s32.totalorder %s15, 1
      %s1755 = scalar_select %p1754, %s15, 1
      %s1756 = smul.addr %s1755, 2
      %s1757 = scalar_lea.vmem %s3, %s1756
      // Predicated region
      $region29: #{_encoder_forward.8} parent=27 // pred_check
        %p1758 = pneg %p80
      $region30: #{_encoder_forward.8} parent=27 // pred_check_branch
        %1760 = sbr.rel (%p1758) target = $region32
      $region31: #{_encoder_forward.8} parent=27 // pred_region
        _
      $region32: #{_encoder_forward.8} parent=27 // pred_fallthru
        _
      // Predicated region
      $region33: #{_encoder_forward.8} parent=27 // pred_check
        %p1761 = pneg %p106
      $region34: #{_encoder_forward.8} parent=27 // pred_check_branch
        %1763 = sbr.rel (%p1761) target = $region36
      $region35: #{_encoder_forward.8} parent=27 // pred_region
        _
      $region36: #{_encoder_forward.8} parent=27 // pred_fallthru
        _
    $region28: #{_encoder_forward.8} parent=5 // pred_fallthru
      _
    %p1764 = scmp.le.s32.totalorder 2, %s10
    // Predicated region
    $region37: #{_encoder_forward.8} parent=5 // pred_check
      %p1765 = pneg %p1764
    $region38: #{_encoder_forward.8} parent=5 // pred_check_branch
      %1767 = sbr.rel (%p1765) target = $region40
    $region39: #{_encoder_forward.8} parent=5 // pred_region
      %s1768 = ssub.s32 %s10, 2
      // Predicated region
      $region41: #{_encoder_forward.8} parent=39 // pred_check
        %p1769 = pneg %p86
      $region42: #{_encoder_forward.8} parent=39 // pred_check_branch
        %1771 = sbr.rel (%p1769) target = $region44
      $region43: #{_encoder_forward.8} parent=39 // pred_region
        %p1772 = scmp.lt.s32.totalorder %s16, 1
        %s1773 = scalar_select %p1772, %s16, 1
        %s1774 = smul.addr %s1773, 4
        %s1775 = scalar_lea.vmem %s2, %s1774
      $region44: #{_encoder_forward.8} parent=39 // pred_fallthru
        _
      // Predicated region
      $region45: #{_encoder_forward.8} parent=39 // pred_check
        %p1776 = pneg %p112
      $region46: #{_encoder_forward.8} parent=39 // pred_check_branch
        %1778 = sbr.rel (%p1776) target = $region48
      $region47: #{_encoder_forward.8} parent=39 // pred_region
        %p1779 = scmp.lt.s32.totalorder %s16, 1
        %s1780 = scalar_select %p1779, %s16, 1
        %s1781 = smul.addr %s1780, 2
        %s1782 = scalar_lea.vmem %s3, %s1781
      $region48: #{_encoder_forward.8} parent=39 // pred_fallthru
        _
    $region40: #{_encoder_forward.8} parent=5 // pred_fallthru
      _
  $region6: #{_encoder_forward.8} parent=0 // loop_footer
    %s14 = sadd.s32 1, %s10
  $region7: #{_encoder_forward.8} parent=0 // loop_footer_branch
    %9 = sbr.rel target = $region3
  $region8: #{_encoder_forward.8} parent=0 // loop_exit
    _

</llo_original>
